<compile_context>
chip_gen: v6e
topology: v6e:2x2x1
jax: 0.10.0
libtpu: 0.0.40
codegen_flags: <defaults>
</compile_context>

<pallas_src>
import math
import functools

import jax
import jax.numpy as jnp
from jax import lax
from jax.experimental import pallas as pl
from jax.experimental.pallas import tpu as pltpu


# ----------------------------- Pallas kernels ------------------------------ #

def _decoder_block_kernel(vlens_ref,                       # scalar prefetch (SMEM)
                          x_ref, kv_ref, enc_ref,          # flattened activations
                          wq1_ref, wkv1_ref, wo1_ref,      # self attention
                          wq2_ref, wkv2_ref, wo2_ref,      # cross attention
                          w1_ref, b1_ref, w2_ref, b2_ref,  # FFN
                          lng_ref, lnb_ref,                # 3 stacked layernorms
                          o_ref,                           # output (B*T, H)
                          mha_scr,                         # (B*T, H) f32 VMEM scratch
                          *, batch, num_heads, kv_offset):
    """One full DecoderBlock for the WHOLE batch, fused in VMEM.

    Activations arrive flattened (B*T, H) so the Q/KV/O and FFN projections run
    with M = B*T rows on the MXU.  The attention softmax loop is per (b, head).
    """
    B = batch
    BT, H = x_ref.shape
    T = BT // B
    Tk = kv_ref.shape[0] // B
    Te = enc_ref.shape[0] // B
    d = H // num_heads
    scale = 1.0 / math.sqrt(d)
    bf = jnp.bfloat16

    x = x_ref[...]          # (B*T, H)  f32
    kv_in = kv_ref[...]     # (B*Tk, H) f32
    enc_in = enc_ref[...]   # (B*Te, H) f32

    lng = lng_ref[...]      # (3, H)
    lnb = lnb_ref[...]      # (3, H)

    def addnorm(a, c, i):
        z = a + c
        mean = jnp.mean(z, axis=-1, keepdims=True)
        var = jnp.mean((z - mean) ** 2, axis=-1, keepdims=True)
        zn = (z - mean) * lax.rsqrt(var + 1e-5)
        return zn * lng[i:i + 1, :] + lnb[i:i + 1, :]

    def mha(q_src, kv_src, Tq, Tkv, wq_r, wkv_r, wo_r, biases):
        # Projections on flattened rows: M = B*Tq / B*Tkv fills the MXU.
        q_all = jnp.dot(q_src.astype(bf), wq_r[...],
                        preferred_element_type=jnp.float32)         # (B*Tq, H)
        kvp = jnp.dot(kv_src.astype(bf), wkv_r[...],
                      preferred_element_type=jnp.float32)           # (B*Tkv, 2H)
        # cast to bf16 ONCE (no per-head cast churn), slice per head below
        qb = q_all.astype(bf)
        kb = kvp[:, :H].astype(bf)
        vb = kvp[:, H:].astype(bf)
        wo = wo_r[...]                                              # (H, H) bf16

        for b in range(B):                                          # static unroll
            qs = qb[b * Tq:(b + 1) * Tq, :]
            ks = kb[b * Tkv:(b + 1) * Tkv, :]
            vs = vb[b * Tkv:(b + 1) * Tkv, :]
            bias = biases[b]                                        # (Tq, Tkv) additive f32
            acc = jnp.zeros((Tq, H), jnp.float32)
            for h in range(num_heads):                              # static unroll
                lo = h * d
                # scores: contract head dims directly (no materialized transpose)
                s = lax.dot_general(qs[:, lo:lo + d], ks[:, lo:lo + d],
                                    (((1,), (1,)), ((), ())),
                                    preferred_element_type=jnp.float32) * scale + bias
                s = s - jnp.max(s, axis=-1, keepdims=True)
                p = jnp.exp(s)
                p = p * pl.reciprocal(jnp.sum(p, axis=-1, keepdims=True), approx=True)
                oh = jnp.dot(p.astype(bf), vs[:, lo:lo + d],
                             preferred_element_type=jnp.float32)    # (Tq, d)
                # per-head output projection accumulate: lane-dense N = H,
                # no per-head masked stores, no scratch round trip.
                acc = acc + jnp.dot(oh.astype(bf), wo[lo:lo + d, :],
                                    preferred_element_type=jnp.float32)
            # full-lane-width (lane-dense) store of this batch row's rows
            mha_scr[b * Tq:(b + 1) * Tq, :] = acc
        return mha_scr[...]
        # TODO(synk): for long sequences tile the KV axis with an online-softmax
        # inner loop (flash-style) instead of full (Tq, Tkv) score tiles.

    # Masks built in-kernel as additive biases (no HBM mask traffic, hoisted
    # out of the per-head loop so masking is a single vadd per head).
    row = lax.broadcasted_iota(jnp.int32, (T, Tk), 0)
    col = lax.broadcasted_iota(jnp.int32, (T, Tk), 1)
    self_bias = jnp.where(col <= row + kv_offset, 0.0, -1e6).astype(jnp.float32)
    self_biases = [self_bias] * B                                   # same for every b

    colx = lax.broadcasted_iota(jnp.int32, (T, Te), 1)
    cross_biases = [jnp.where(colx < vlens_ref[b], 0.0, -1e6).astype(jnp.float32)
                    for b in range(B)]                              # SMEM scalar reads

    # ---- block body, all intermediates resident in VMEM/vregs ----
    x2 = mha(x, kv_in, T, Tk, wq1_ref, wkv1_ref, wo1_ref, self_biases)
    y = addnorm(x, x2, 0)

    y2 = mha(y, enc_in, T, Te, wq2_ref, wkv2_ref, wo2_ref, cross_biases)
    z = addnorm(y, y2, 1)

    hid = jnp.dot(z.astype(bf), w1_ref[...],
                  preferred_element_type=jnp.float32) + b1_ref[...]
    hid = jnp.maximum(hid, 0.0)
    f = jnp.dot(hid.astype(bf), w2_ref[...],
                preferred_element_type=jnp.float32) + b2_ref[...]

    o_ref[...] = addnorm(z, f, 2)
    # TODO(synk): at realistic H/F, single-buffer the constant weight inputs
    # (pipeline_mode=pl.Buffered(1)) or stream them from pl.ANY to stay inside
    # v7x's 64 MiB VMEM; unnecessary at these toy sizes.


def _dense_kernel(x_ref, w_ref, b_ref, o_ref):
    """Final vocab projection tile: rows @ W_tile + b_tile (lane-dense output)."""
    o_ref[...] = jnp.dot(x_ref[...].astype(jnp.bfloat16), w_ref[...],
                         preferred_element_type=jnp.float32) + b_ref[...]


# ----------------------------- kernel wrappers ------------------------------ #

def pallas_decoder_block(x_flat, kv_flat, enc_flat, enc_valid_lens, kb,
                         num_heads, *, batch):
    """x_flat: (B*T, H), kv_flat: (B*Tk, H), enc_flat: (B*Te, H)."""
    BT, H = x_flat.shape
    BTk = kv_flat.shape[0]
    BTe = enc_flat.shape[0]
    F = kb["w1"].shape[1]
    T = BT // batch
    Tk = BTk // batch

    kernel = functools.partial(_decoder_block_kernel, batch=batch,
                               num_heads=num_heads, kv_offset=Tk - T)

    grid_spec = pltpu.PrefetchScalarGridSpec(
        num_scalar_prefetch=1,
        grid=(1,),                                                # whole batch, one step
        in_specs=[
            pl.BlockSpec((BT, H), lambda i, vl: (0, 0)),          # x  (flattened)
            pl.BlockSpec((BTk, H), lambda i, vl: (0, 0)),         # self-attn key/values
            pl.BlockSpec((BTe, H), lambda i, vl: (0, 0)),         # encoder outputs
            pl.BlockSpec((H, H), lambda i, vl: (0, 0)),           # wq1
            pl.BlockSpec((H, 2 * H), lambda i, vl: (0, 0)),       # wkv1 (fused K|V)
            pl.BlockSpec((H, H), lambda i, vl: (0, 0)),           # wo1
            pl.BlockSpec((H, H), lambda i, vl: (0, 0)),           # wq2
            pl.BlockSpec((H, 2 * H), lambda i, vl: (0, 0)),       # wkv2 (fused K|V)
            pl.BlockSpec((H, H), lambda i, vl: (0, 0)),           # wo2
            pl.BlockSpec((H, F), lambda i, vl: (0, 0)),           # ffn w1
            pl.BlockSpec((1, F), lambda i, vl: (0, 0)),           # ffn b1
            pl.BlockSpec((F, H), lambda i, vl: (0, 0)),           # ffn w2
            pl.BlockSpec((1, H), lambda i, vl: (0, 0)),           # ffn b2
            pl.BlockSpec((3, H), lambda i, vl: (0, 0)),           # layernorm gammas
            pl.BlockSpec((3, H), lambda i, vl: (0, 0)),           # layernorm betas
        ],
        out_specs=pl.BlockSpec((BT, H), lambda i, vl: (0, 0)),
        scratch_shapes=[pltpu.VMEM((BT, H), jnp.float32)],
    )
    return pl.pallas_call(
        kernel,
        out_shape=jax.ShapeDtypeStruct((BT, H), jnp.float32),
        grid_spec=grid_spec,
        compiler_params=pltpu.CompilerParams(
            dimension_semantics=("arbitrary",),
            vmem_limit_bytes=64 * 1024 * 1024),
    )(enc_valid_lens, x_flat, kv_flat, enc_flat,
      kb["wq1"], kb["wkv1"], kb["wo1"], kb["wq2"], kb["wkv2"], kb["wo2"],
      kb["w1"], kb["b1"], kb["w2"], kb["b2"], kb["lng"], kb["lnb"])


def pallas_dense(x_flat, w_pad, b_pad, vocab_size, tile_v):
    """Final projection on flattened (B*T, H) rows, vocab pre-padded to a
    multiple of tile_v (lane-dense 512-wide tiles), M tiled over rows."""
    BT, H = x_flat.shape
    V_pad = w_pad.shape[1]
    TILE_M = BT if BT <= 256 else 256
    BT_pad = ((BT + TILE_M - 1) // TILE_M) * TILE_M
    if BT_pad != BT:
        x_flat = jnp.zeros((BT_pad, H), x_flat.dtype).at[:BT].set(x_flat)

    out = pl.pallas_call(
        _dense_kernel,
        out_shape=jax.ShapeDtypeStruct((BT_pad, V_pad), jnp.float32),
        grid=(BT_pad // TILE_M, V_pad // tile_v),
        in_specs=[
            pl.BlockSpec((TILE_M, H), lambda mi, vi: (mi, 0)),
            pl.BlockSpec((H, tile_v), lambda mi, vi: (0, vi)),
            pl.BlockSpec((1, tile_v), lambda mi, vi: (0, vi)),
        ],
        out_specs=pl.BlockSpec((TILE_M, tile_v), lambda mi, vi: (mi, vi)),
        compiler_params=pltpu.CompilerParams(
            dimension_semantics=("parallel", "parallel"),
            vmem_limit_bytes=64 * 1024 * 1024),
    )(x_flat, w_pad, b_pad)
    return out[:BT, :vocab_size]


# ------------------------- parameters & glue code --------------------------- #

def init_params(key, vocab_size, num_hiddens, num_heads, ffn_num_hiddens, num_layers):
    def nrm(k, shape, scale=0.02):
        return (scale * jax.random.normal(k, shape)).astype(jnp.float32)

    keys = jax.random.split(key, 2 + num_layers)
    params = {
        "embedding": nrm(keys[0], (vocab_size, num_hiddens), 1.0),
        "dense_w": nrm(keys[1], (num_hiddens, vocab_size)),
        "dense_b": jnp.zeros((1, vocab_size), jnp.float32),
        "blocks": [],
    }
    for i in range(num_layers):
        bk = jax.random.split(keys[2 + i], 10)
        blk = {
            "a1_wq": nrm(bk[0], (num_hiddens, num_hiddens)),
            "a1_wk": nrm(bk[1], (num_hiddens, num_hiddens)),
            "a1_wv": nrm(bk[2], (num_hiddens, num_hiddens)),
            "a1_wo": nrm(bk[3], (num_hiddens, num_hiddens)),
            "a2_wq": nrm(bk[4], (num_hiddens, num_hiddens)),
            "a2_wk": nrm(bk[5], (num_hiddens, num_hiddens)),
            "a2_wv": nrm(bk[6], (num_hiddens, num_hiddens)),
            "a2_wo": nrm(bk[7], (num_hiddens, num_hiddens)),
            "ffn_w1": nrm(bk[8], (num_hiddens, ffn_num_hiddens)),
            "ffn_b1": jnp.zeros((1, ffn_num_hiddens), jnp.float32),
            "ffn_w2": nrm(bk[9], (ffn_num_hiddens, num_hiddens)),
            "ffn_b2": jnp.zeros((1, num_hiddens), jnp.float32),
            "ln1_g": jnp.ones((1, num_hiddens), jnp.float32),
            "ln1_b": jnp.zeros((1, num_hiddens), jnp.float32),
            "ln2_g": jnp.ones((1, num_hiddens), jnp.float32),
            "ln2_b": jnp.zeros((1, num_hiddens), jnp.float32),
            "ln3_g": jnp.ones((1, num_hiddens), jnp.float32),
            "ln3_b": jnp.zeros((1, num_hiddens), jnp.float32),
        }
        params["blocks"].append(blk)
    return params


def prepare_kernel_params(params, tile_v=512):
    """One-time preprocessing: fuse K|V weights, cast matmul weights to bf16,
    stack layernorm params, pad+cast the vocab projection.  Done ONCE, not per
    forward call (removes per-step concat/cast HBM traffic)."""
    bf = jnp.bfloat16
    kp = {"embedding": params["embedding"], "blocks": []}
    for blk in params["blocks"]:
        kp["blocks"].append({
            "wq1": blk["a1_wq"].astype(bf),
            "wkv1": jnp.concatenate([blk["a1_wk"], blk["a1_wv"]], axis=1).astype(bf),
            "wo1": blk["a1_wo"].astype(bf),
            "wq2": blk["a2_wq"].astype(bf),
            "wkv2": jnp.concatenate([blk["a2_wk"], blk["a2_wv"]], axis=1).astype(bf),
            "wo2": blk["a2_wo"].astype(bf),
            "w1": blk["ffn_w1"].astype(bf),
            "b1": blk["ffn_b1"],
            "w2": blk["ffn_w2"].astype(bf),
            "b2": blk["ffn_b2"],
            "lng": jnp.concatenate([blk["ln1_g"], blk["ln2_g"], blk["ln3_g"]], axis=0),
            "lnb": jnp.concatenate([blk["ln1_b"], blk["ln2_b"], blk["ln3_b"]], axis=0),
        })
    H, V = params["dense_w"].shape
    V_pad = ((V + tile_v - 1) // tile_v) * tile_v
    kp["dense_w"] = jnp.zeros((H, V_pad), jnp.float32).at[:, :V].set(
        params["dense_w"]).astype(bf)
    kp["dense_b"] = jnp.zeros((1, V_pad), jnp.float32).at[:, :V].set(params["dense_b"])
    kp["vocab_size"] = V
    kp["tile_v"] = tile_v
    return kp


def positional_encoding(T, num_hiddens):
    pos = jnp.arange(T, dtype=jnp.float32)[:, None]
    div = jnp.power(10000.0, jnp.arange(0, num_hiddens, 2, dtype=jnp.float32) / num_hiddens)
    ang = pos / div
    P = jnp.zeros((T, num_hiddens), jnp.float32)
    P = P.at[:, 0::2].set(jnp.sin(ang))
    P = P.at[:, 1::2].set(jnp.cos(ang))
    return P[None]


def decoder_forward(kparams, tokens, state, *, num_hiddens, num_heads):
    """tokens: (B, T) int32;  state = (enc_outputs, enc_valid_lens, caches)."""
    enc_outputs, enc_valid_lens, caches = state
    B, T = tokens.shape
    H = num_hiddens

    # Embedding + sqrt scale + positional encoding (dropout=0 -> identity).
    # TODO(synk): embedding gather + PE table stay in plain JAX (data-dependent
    # gather has no clean rectangular BlockSpec).
    X = kparams["embedding"][tokens] * math.sqrt(num_hiddens)
    X = (X + positional_encoding(T, num_hiddens)).astype(jnp.float32)    # (B,T,H)

    enc_flat = enc_outputs.reshape(B * enc_outputs.shape[1], H).astype(jnp.float32)

    new_caches = list(caches)
    x_flat = X.reshape(B * T, H)
    for i, kb in enumerate(kparams["blocks"]):
        # TODO(synk): for real incremental decoding, write the cache update
        # in-kernel via input_output_aliases instead of this HBM concatenate.
        X3 = x_flat.reshape(B, T, H)
        key_values = X3 if new_caches[i] is None else jnp.concatenate(
            [new_caches[i], X3], axis=1)
        new_caches[i] = key_values
        kv_flat = key_values.reshape(B * key_values.shape[1], H)
        x_flat = pallas_decoder_block(x_flat, kv_flat, enc_flat, enc_valid_lens,
                                      kb, num_heads, batch=B)

    logits_flat = pallas_dense(x_flat, kparams["dense_w"], kparams["dense_b"],
                               kparams["vocab_size"], kparams["tile_v"])
    logits = logits_flat.reshape(B, T, kparams["vocab_size"])
    return logits, (enc_outputs, enc_valid_lens, new_caches)


# --------------------------- pure-JAX reference ----------------------------- #

def _mm(a, w):
    # bf16 operands, f32 accumulation (mirrors the MXU path used in the kernels)
    return jnp.dot(a.astype(jnp.bfloat16), w.astype(jnp.bfloat16),
                   preferred_element_type=jnp.float32)


def _ref_mha(q_in, kv_in, mask, wq, wk, wv, wo, num_heads):
    B, Tq, H = q_in.shape
    d = H // num_heads
    q = _mm(q_in, wq).reshape(B, Tq, num_heads, d).transpose(0, 2, 1, 3)
    k = _mm(kv_in, wk).reshape(B, -1, num_heads, d).transpose(0, 2, 1, 3)
    v = _mm(kv_in, wv).reshape(B, -1, num_heads, d).transpose(0, 2, 1, 3)
    s = jnp.einsum("bhqd,bhkd->bhqk", q.astype(jnp.bfloat16), k.astype(jnp.bfloat16),
                   preferred_element_type=jnp.float32) / math.sqrt(d)
    s = jnp.where(mask[:, None], s, -1e6)
    p = jax.nn.softmax(s, axis=-1)
    o = jnp.einsum("bhqk,bhkd->bhqd", p.astype(jnp.bfloat16), v.astype(jnp.bfloat16),
                   preferred_element_type=jnp.float32)
    o = o.transpose(0, 2, 1, 3).reshape(B, Tq, H)
    return _mm(o, wo)


def _ref_addnorm(x, y, g, b):
    z = x + y
    mean = jnp.mean(z, axis=-1, keepdims=True)
    var = jnp.mean((z - mean) ** 2, axis=-1, keepdims=True)
    return (z - mean) * lax.rsqrt(var + 1e-5) * g + b


def ref_forward(params, tokens, state, *, num_hiddens, num_heads):
    enc_outputs, enc_valid_lens, _ = state
    B, T = tokens.shape
    Te = enc_outputs.shape[1]
    X = params["embedding"][tokens] * math.sqrt(num_hiddens)
    X = (X + positional_encoding(T, num_hiddens)).astype(jnp.float32)
    causal = jnp.broadcast_to(
        (jnp.arange(T)[None, :] <= jnp.arange(T)[:, None])[None], (B, T, T))
    enc_mask = jnp.broadcast_to(
        jnp.arange(Te)[None, None, :] < enc_valid_lens[:, None, None], (B, T, Te))
    for blk in params["blocks"]:
        x2 = _ref_mha(X, X, causal, blk["a1_wq"], blk["a1_wk"], blk["a1_wv"],
                      blk["a1_wo"], num_heads)
        Y = _ref_addnorm(X, x2, blk["ln1_g"], blk["ln1_b"])
        y2 = _ref_mha(Y, enc_outputs, enc_mask, blk["a2_wq"], blk["a2_wk"],
                      blk["a2_wv"], blk["a2_wo"], num_heads)
        Z = _ref_addnorm(Y, y2, blk["ln2_g"], blk["ln2_b"])
        h = jnp.maximum(_mm(Z, blk["ffn_w1"]) + blk["ffn_b1"], 0.0)
        f = _mm(h, blk["ffn_w2"]) + blk["ffn_b2"]
        X = _ref_addnorm(Z, f, blk["ln3_g"], blk["ln3_b"])
    return _mm(X, params["dense_w"]) + params["dense_b"]


# ----------------------------------- main ----------------------------------- #

if __name__ == "__main__":
    vocab_size = 16
    num_hiddens = 32
    num_heads = 4
    ffn_num_hiddens = 64
    num_layers = 2
    B, T, Te = 2, 8, 8

    key = jax.random.PRNGKey(0)
    k_param, k_tok, k_enc = jax.random.split(key, 3)

    params = init_params(k_param, vocab_size, num_hiddens, num_heads,
                         ffn_num_hiddens, num_layers)
    kparams = prepare_kernel_params(params)          # one-time fuse/cast/pad

    tokens = jax.random.randint(k_tok, (B, T), 0, vocab_size, dtype=jnp.int32)
    enc_outputs = jax.random.normal(k_enc, (B, Te, num_hiddens), dtype=jnp.float32)
    enc_valid_lens = jnp.array([Te, 5], dtype=jnp.int32)
    state = (enc_outputs, enc_valid_lens, [None] * num_layers)  # init_state

    logits, new_state = decoder_forward(kparams, tokens, state,
                                        num_hiddens=num_hiddens, num_heads=num_heads)
    logits = jax.block_until_ready(logits)

    ref = ref_forward(params, tokens, state,
                      num_hiddens=num_hiddens, num_heads=num_heads)
    assert logits.shape == (B, T, vocab_size)
    assert jnp.allclose(logits, ref, atol=2e-2, rtol=2e-2), "mismatch vs JAX reference"

    print("KERNEL_OK")
</pallas_src>

<mosaic_0001>
module attributes {stable_mosaic.version = 11 : i64} {
  func.func @_decoder_block_kernel(%arg0: i32, %arg1: memref<2xi32, #tpu.memory_space<smem>>, %arg2: memref<16x32xf32, #tpu.memory_space<vmem>>, %arg3: memref<16x32xf32, #tpu.memory_space<vmem>>, %arg4: memref<16x32xf32, #tpu.memory_space<vmem>>, %arg5: memref<32x32xbf16, #tpu.memory_space<vmem>>, %arg6: memref<32x64xbf16, #tpu.memory_space<vmem>>, %arg7: memref<32x32xbf16, #tpu.memory_space<vmem>>, %arg8: memref<32x32xbf16, #tpu.memory_space<vmem>>, %arg9: memref<32x64xbf16, #tpu.memory_space<vmem>>, %arg10: memref<32x32xbf16, #tpu.memory_space<vmem>>, %arg11: memref<32x64xbf16, #tpu.memory_space<vmem>>, %arg12: memref<1x64xf32, #tpu.memory_space<vmem>>, %arg13: memref<64x32xbf16, #tpu.memory_space<vmem>>, %arg14: memref<1x32xf32, #tpu.memory_space<vmem>>, %arg15: memref<3x32xf32, #tpu.memory_space<vmem>>, %arg16: memref<3x32xf32, #tpu.memory_space<vmem>>, %arg17: memref<16x32xf32, #tpu.memory_space<vmem>>, %arg18: memref<16x32xf32, #tpu.memory_space<vmem>>) attributes {dimension_semantics = [#tpu.dimension_semantics<arbitrary>], iteration_bounds = array<i64: 1>, scalar_prefetch = 1 : i64, scratch_operands = 1 : i64, tpu.core_type = #tpu.core_type<tc>, window_params = [{pipeline_mode = #tpu.pipeline_mode<synchronous>, transform_indices = @transform_0, window_bounds = array<i64: 16, 32>}, {pipeline_mode = #tpu.pipeline_mode<synchronous>, transform_indices = @transform_1, window_bounds = array<i64: 16, 32>}, {pipeline_mode = #tpu.pipeline_mode<synchronous>, transform_indices = @transform_2, window_bounds = array<i64: 16, 32>}, {pipeline_mode = #tpu.pipeline_mode<synchronous>, transform_indices = @transform_3, window_bounds = array<i64: 32, 32>}, {pipeline_mode = #tpu.pipeline_mode<synchronous>, transform_indices = @transform_4, window_bounds = array<i64: 32, 64>}, {pipeline_mode = #tpu.pipeline_mode<synchronous>, transform_indices = @transform_5, window_bounds = array<i64: 32, 32>}, {pipeline_mode = #tpu.pipeline_mode<synchronous>, transform_indices = @transform_6, window_bounds = array<i64: 32, 32>}, {pipeline_mode = #tpu.pipeline_mode<synchronous>, transform_indices = @transform_7, window_bounds = array<i64: 32, 64>}, {pipeline_mode = #tpu.pipeline_mode<synchronous>, transform_indices = @transform_8, window_bounds = array<i64: 32, 32>}, {pipeline_mode = #tpu.pipeline_mode<synchronous>, transform_indices = @transform_9, window_bounds = array<i64: 32, 64>}, {pipeline_mode = #tpu.pipeline_mode<synchronous>, transform_indices = @transform_10, window_bounds = array<i64: 1, 64>}, {pipeline_mode = #tpu.pipeline_mode<synchronous>, transform_indices = @transform_11, window_bounds = array<i64: 64, 32>}, {pipeline_mode = #tpu.pipeline_mode<synchronous>, transform_indices = @transform_12, window_bounds = array<i64: 1, 32>}, {pipeline_mode = #tpu.pipeline_mode<synchronous>, transform_indices = @transform_13, window_bounds = array<i64: 3, 32>}, {pipeline_mode = #tpu.pipeline_mode<synchronous>, transform_indices = @transform_14, window_bounds = array<i64: 3, 32>}, {pipeline_mode = #tpu.pipeline_mode<synchronous>, transform_indices = @transform_15, window_bounds = array<i64: 16, 32>}]} {
    %c0 = arith.constant 0 : index
    %c0_0 = arith.constant 0 : index
    %0 = vector.load %arg2[%c0, %c0_0] : memref<16x32xf32, #tpu.memory_space<vmem>>, vector<16x32xf32>
    %c0_1 = arith.constant 0 : index
    %c0_2 = arith.constant 0 : index
    %1 = vector.load %arg3[%c0_1, %c0_2] : memref<16x32xf32, #tpu.memory_space<vmem>>, vector<16x32xf32>
    %c0_3 = arith.constant 0 : index
    %c0_4 = arith.constant 0 : index
    %2 = vector.load %arg4[%c0_3, %c0_4] : memref<16x32xf32, #tpu.memory_space<vmem>>, vector<16x32xf32>
    %c0_5 = arith.constant 0 : index
    %c0_6 = arith.constant 0 : index
    %3 = vector.load %arg15[%c0_5, %c0_6] : memref<3x32xf32, #tpu.memory_space<vmem>>, vector<3x32xf32>
    %c0_7 = arith.constant 0 : index
    %c0_8 = arith.constant 0 : index
    %4 = vector.load %arg16[%c0_7, %c0_8] : memref<3x32xf32, #tpu.memory_space<vmem>>, vector<3x32xf32>
    %5 = tpu.iota {dimensions = array<i32: 0>} : vector<8x8xi32>
    %6 = tpu.iota {dimensions = array<i32: 1>} : vector<8x8xi32>
    %c0_i32 = arith.constant 0 : i32
    %7 = vector.broadcast %c0_i32 : i32 to vector<8x8xi32>
    %8 = arith.addi %5, %7 : vector<8x8xi32>
    %9 = arith.cmpi sle, %6, %8 : vector<8x8xi32>
    %cst = arith.constant 0.000000e+00 : f32
    %cst_9 = arith.constant -1.000000e+06 : f32
    %10 = vector.broadcast %cst : f32 to vector<8x8xf32>
    %11 = vector.broadcast %cst_9 : f32 to vector<8x8xf32>
    %12 = arith.select %9, %10, %11 : vector<8x8xi1>, vector<8x8xf32>
    %13 = tpu.iota {dimensions = array<i32: 1>} : vector<8x8xi32>
    %c0_10 = arith.constant 0 : index
    %14 = memref.load %arg1[%c0_10] : memref<2xi32, #tpu.memory_space<smem>>
    %15 = vector.broadcast %14 : i32 to vector<8x8xi32>
    %16 = arith.cmpi slt, %13, %15 : vector<8x8xi32>
    %cst_11 = arith.constant 0.000000e+00 : f32
    %cst_12 = arith.constant -1.000000e+06 : f32
    %17 = vector.broadcast %cst_11 : f32 to vector<8x8xf32>
    %18 = vector.broadcast %cst_12 : f32 to vector<8x8xf32>
    %19 = arith.select %16, %17, %18 : vector<8x8xi1>, vector<8x8xf32>
    %c1 = arith.constant 1 : index
    %20 = memref.load %arg1[%c1] : memref<2xi32, #tpu.memory_space<smem>>
    %21 = vector.broadcast %20 : i32 to vector<8x8xi32>
    %22 = arith.cmpi slt, %13, %21 : vector<8x8xi32>
    %cst_13 = arith.constant 0.000000e+00 : f32
    %cst_14 = arith.constant -1.000000e+06 : f32
    %23 = vector.broadcast %cst_13 : f32 to vector<8x8xf32>
    %24 = vector.broadcast %cst_14 : f32 to vector<8x8xf32>
    %25 = arith.select %22, %23, %24 : vector<8x8xi1>, vector<8x8xf32>
    %26 = arith.truncf %0 : vector<16x32xf32> to vector<16x32xbf16>
    %c0_15 = arith.constant 0 : index
    %c0_16 = arith.constant 0 : index
    %27 = vector.load %arg5[%c0_15, %c0_16] : memref<32x32xbf16, #tpu.memory_space<vmem>>, vector<32x32xbf16>
    %cst_17 = arith.constant dense<0.000000e+00> : vector<16x32xf32>
    %28 = tpu.matmul %26, %27, %cst_17 {dimension_numbers = #tpu.dot_dimension_numbers<[1], [0], [0], [1], [0, 0, 1, 1], [], []>} : vector<16x32xbf16>, vector<32x32xbf16>, vector<16x32xf32> -> vector<16x32xf32>
    %29 = arith.truncf %1 : vector<16x32xf32> to vector<16x32xbf16>
    %c0_18 = arith.constant 0 : index
    %c0_19 = arith.constant 0 : index
    %30 = vector.load %arg6[%c0_18, %c0_19] : memref<32x64xbf16, #tpu.memory_space<vmem>>, vector<32x64xbf16>
    %cst_20 = arith.constant dense<0.000000e+00> : vector<16x64xf32>
    %31 = tpu.matmul %29, %30, %cst_20 {dimension_numbers = #tpu.dot_dimension_numbers<[1], [0], [0], [1], [0, 0, 1, 1], [], []>} : vector<16x32xbf16>, vector<32x64xbf16>, vector<16x64xf32> -> vector<16x64xf32>
    %32 = arith.truncf %28 : vector<16x32xf32> to vector<16x32xbf16>
    %33 = vector.extract_strided_slice %31 {offsets = [0, 0], sizes = [16, 32], strides = [1, 1]} : vector<16x64xf32> to vector<16x32xf32>
    %34 = arith.truncf %33 : vector<16x32xf32> to vector<16x32xbf16>
    %35 = vector.extract_strided_slice %31 {offsets = [0, 32], sizes = [16, 32], strides = [1, 1]} : vector<16x64xf32> to vector<16x32xf32>
    %36 = arith.truncf %35 : vector<16x32xf32> to vector<16x32xbf16>
    %c0_21 = arith.constant 0 : index
    %c0_22 = arith.constant 0 : index
    %37 = vector.load %arg7[%c0_21, %c0_22] : memref<32x32xbf16, #tpu.memory_space<vmem>>, vector<32x32xbf16>
    %38 = vector.extract_strided_slice %32 {offsets = [0, 0], sizes = [8, 32], strides = [1, 1]} : vector<16x32xbf16> to vector<8x32xbf16>
    %39 = vector.extract_strided_slice %34 {offsets = [0, 0], sizes = [8, 32], strides = [1, 1]} : vector<16x32xbf16> to vector<8x32xbf16>
    %40 = vector.extract_strided_slice %36 {offsets = [0, 0], sizes = [8, 32], strides = [1, 1]} : vector<16x32xbf16> to vector<8x32xbf16>
    %cst_23 = arith.constant 0.000000e+00 : f32
    %41 = vector.broadcast %cst_23 : f32 to vector<8x32xf32>
    %42 = vector.extract_strided_slice %38 {offsets = [0, 0], sizes = [8, 8], strides = [1, 1]} : vector<8x32xbf16> to vector<8x8xbf16>
    %43 = vector.extract_strided_slice %39 {offsets = [0, 0], sizes = [8, 8], strides = [1, 1]} : vector<8x32xbf16> to vector<8x8xbf16>
    %cst_24 = arith.constant dense<0.000000e+00> : vector<8x8xf32>
    %44 = tpu.matmul %42, %43, %cst_24 {dimension_numbers = #tpu.dot_dimension_numbers<[1], [1], [0], [0], [0, 0, 1, 0], [], []>} : vector<8x8xbf16>, vector<8x8xbf16>, vector<8x8xf32> -> vector<8x8xf32>
    %cst_25 = arith.constant 0.353553385 : f32
    %45 = vector.broadcast %cst_25 : f32 to vector<8x8xf32>
    %46 = arith.mulf %44, %45 : vector<8x8xf32>
    %47 = arith.addf %46, %12 : vector<8x8xf32>
    %cst_26 = arith.constant dense<0xFF800000> : vector<8xf32>
    %48 = vector.multi_reduction <maximumf>, %47, %cst_26 [1] : vector<8x8xf32> to vector<8xf32>
    %49 = vector.shape_cast %48 : vector<8xf32> to vector<8x1xf32>
    %50 = vector.broadcast %49 : vector<8x1xf32> to vector<8x8xf32>
    %51 = arith.subf %47, %50 : vector<8x8xf32>
    %52 = math.exp %51 : vector<8x8xf32>
    %cst_27 = arith.constant dense<0.000000e+00> : vector<8xf32>
    %53 = vector.multi_reduction <add>, %52, %cst_27 [1] : vector<8x8xf32> to vector<8xf32>
    %54 = vector.shape_cast %53 : vector<8xf32> to vector<8x1xf32>
    %55 = tpu.reciprocal %54 {approx = true} : vector<8x1xf32> -> vector<8x1xf32>
    %56 = vector.broadcast %55 : vector<8x1xf32> to vector<8x8xf32>
    %57 = arith.mulf %52, %56 : vector<8x8xf32>
    %58 = arith.truncf %57 : vector<8x8xf32> to vector<8x8xbf16>
    %59 = vector.extract_strided_slice %40 {offsets = [0, 0], sizes = [8, 8], strides = [1, 1]} : vector<8x32xbf16> to vector<8x8xbf16>
    %cst_28 = arith.constant dense<0.000000e+00> : vector<8x8xf32>
    %60 = tpu.matmul %58, %59, %cst_28 {dimension_numbers = #tpu.dot_dimension_numbers<[1], [0], [0], [1], [0, 0, 1, 1], [], []>} : vector<8x8xbf16>, vector<8x8xbf16>, vector<8x8xf32> -> vector<8x8xf32>
    %61 = arith.truncf %60 : vector<8x8xf32> to vector<8x8xbf16>
    %62 = vector.extract_strided_slice %37 {offsets = [0, 0], sizes = [8, 32], strides = [1, 1]} : vector<32x32xbf16> to vector<8x32xbf16>
    %cst_29 = arith.constant dense<0.000000e+00> : vector<8x32xf32>
    %63 = tpu.matmul %61, %62, %cst_29 {dimension_numbers = #tpu.dot_dimension_numbers<[1], [0], [0], [1], [0, 0, 1, 1], [], []>} : vector<8x8xbf16>, vector<8x32xbf16>, vector<8x32xf32> -> vector<8x32xf32>
    %64 = arith.addf %41, %63 : vector<8x32xf32>
    %65 = vector.extract_strided_slice %38 {offsets = [0, 8], sizes = [8, 8], strides = [1, 1]} : vector<8x32xbf16> to vector<8x8xbf16>
    %66 = vector.extract_strided_slice %39 {offsets = [0, 8], sizes = [8, 8], strides = [1, 1]} : vector<8x32xbf16> to vector<8x8xbf16>
    %cst_30 = arith.constant dense<0.000000e+00> : vector<8x8xf32>
    %67 = tpu.matmul %65, %66, %cst_30 {dimension_numbers = #tpu.dot_dimension_numbers<[1], [1], [0], [0], [0, 0, 1, 0], [], []>} : vector<8x8xbf16>, vector<8x8xbf16>, vector<8x8xf32> -> vector<8x8xf32>
    %cst_31 = arith.constant 0.353553385 : f32
    %68 = vector.broadcast %cst_31 : f32 to vector<8x8xf32>
    %69 = arith.mulf %67, %68 : vector<8x8xf32>
    %70 = arith.addf %69, %12 : vector<8x8xf32>
    %cst_32 = arith.constant dense<0xFF800000> : vector<8xf32>
    %71 = vector.multi_reduction <maximumf>, %70, %cst_32 [1] : vector<8x8xf32> to vector<8xf32>
    %72 = vector.shape_cast %71 : vector<8xf32> to vector<8x1xf32>
    %73 = vector.broadcast %72 : vector<8x1xf32> to vector<8x8xf32>
    %74 = arith.subf %70, %73 : vector<8x8xf32>
    %75 = math.exp %74 : vector<8x8xf32>
    %cst_33 = arith.constant dense<0.000000e+00> : vector<8xf32>
    %76 = vector.multi_reduction <add>, %75, %cst_33 [1] : vector<8x8xf32> to vector<8xf32>
    %77 = vector.shape_cast %76 : vector<8xf32> to vector<8x1xf32>
    %78 = tpu.reciprocal %77 {approx = true} : vector<8x1xf32> -> vector<8x1xf32>
    %79 = vector.broadcast %78 : vector<8x1xf32> to vector<8x8xf32>
    %80 = arith.mulf %75, %79 : vector<8x8xf32>
    %81 = arith.truncf %80 : vector<8x8xf32> to vector<8x8xbf16>
    %82 = vector.extract_strided_slice %40 {offsets = [0, 8], sizes = [8, 8], strides = [1, 1]} : vector<8x32xbf16> to vector<8x8xbf16>
    %cst_34 = arith.constant dense<0.000000e+00> : vector<8x8xf32>
    %83 = tpu.matmul %81, %82, %cst_34 {dimension_numbers = #tpu.dot_dimension_numbers<[1], [0], [0], [1], [0, 0, 1, 1], [], []>} : vector<8x8xbf16>, vector<8x8xbf16>, vector<8x8xf32> -> vector<8x8xf32>
    %84 = arith.truncf %83 : vector<8x8xf32> to vector<8x8xbf16>
    %85 = vector.extract_strided_slice %37 {offsets = [8, 0], sizes = [8, 32], strides = [1, 1]} : vector<32x32xbf16> to vector<8x32xbf16>
    %cst_35 = arith.constant dense<0.000000e+00> : vector<8x32xf32>
    %86 = tpu.matmul %84, %85, %cst_35 {dimension_numbers = #tpu.dot_dimension_numbers<[1], [0], [0], [1], [0, 0, 1, 1], [], []>} : vector<8x8xbf16>, vector<8x32xbf16>, vector<8x32xf32> -> vector<8x32xf32>
    %87 = arith.addf %64, %86 : vector<8x32xf32>
    %88 = vector.extract_strided_slice %38 {offsets = [0, 16], sizes = [8, 8], strides = [1, 1]} : vector<8x32xbf16> to vector<8x8xbf16>
    %89 = vector.extract_strided_slice %39 {offsets = [0, 16], sizes = [8, 8], strides = [1, 1]} : vector<8x32xbf16> to vector<8x8xbf16>
    %cst_36 = arith.constant dense<0.000000e+00> : vector<8x8xf32>
    %90 = tpu.matmul %88, %89, %cst_36 {dimension_numbers = #tpu.dot_dimension_numbers<[1], [1], [0], [0], [0, 0, 1, 0], [], []>} : vector<8x8xbf16>, vector<8x8xbf16>, vector<8x8xf32> -> vector<8x8xf32>
    %cst_37 = arith.constant 0.353553385 : f32
    %91 = vector.broadcast %cst_37 : f32 to vector<8x8xf32>
    %92 = arith.mulf %90, %91 : vector<8x8xf32>
    %93 = arith.addf %92, %12 : vector<8x8xf32>
    %cst_38 = arith.constant dense<0xFF800000> : vector<8xf32>
    %94 = vector.multi_reduction <maximumf>, %93, %cst_38 [1] : vector<8x8xf32> to vector<8xf32>
    %95 = vector.shape_cast %94 : vector<8xf32> to vector<8x1xf32>
    %96 = vector.broadcast %95 : vector<8x1xf32> to vector<8x8xf32>
    %97 = arith.subf %93, %96 : vector<8x8xf32>
    %98 = math.exp %97 : vector<8x8xf32>
    %cst_39 = arith.constant dense<0.000000e+00> : vector<8xf32>
    %99 = vector.multi_reduction <add>, %98, %cst_39 [1] : vector<8x8xf32> to vector<8xf32>
    %100 = vector.shape_cast %99 : vector<8xf32> to vector<8x1xf32>
    %101 = tpu.reciprocal %100 {approx = true} : vector<8x1xf32> -> vector<8x1xf32>
    %102 = vector.broadcast %101 : vector<8x1xf32> to vector<8x8xf32>
    %103 = arith.mulf %98, %102 : vector<8x8xf32>
    %104 = arith.truncf %103 : vector<8x8xf32> to vector<8x8xbf16>
    %105 = vector.extract_strided_slice %40 {offsets = [0, 16], sizes = [8, 8], strides = [1, 1]} : vector<8x32xbf16> to vector<8x8xbf16>
    %cst_40 = arith.constant dense<0.000000e+00> : vector<8x8xf32>
    %106 = tpu.matmul %104, %105, %cst_40 {dimension_numbers = #tpu.dot_dimension_numbers<[1], [0], [0], [1], [0, 0, 1, 1], [], []>} : vector<8x8xbf16>, vector<8x8xbf16>, vector<8x8xf32> -> vector<8x8xf32>
    %107 = arith.truncf %106 : vector<8x8xf32> to vector<8x8xbf16>
    %108 = vector.extract_strided_slice %37 {offsets = [16, 0], sizes = [8, 32], strides = [1, 1]} : vector<32x32xbf16> to vector<8x32xbf16>
    %cst_41 = arith.constant dense<0.000000e+00> : vector<8x32xf32>
    %109 = tpu.matmul %107, %108, %cst_41 {dimension_numbers = #tpu.dot_dimension_numbers<[1], [0], [0], [1], [0, 0, 1, 1], [], []>} : vector<8x8xbf16>, vector<8x32xbf16>, vector<8x32xf32> -> vector<8x32xf32>
    %110 = arith.addf %87, %109 : vector<8x32xf32>
    %111 = vector.extract_strided_slice %38 {offsets = [0, 24], sizes = [8, 8], strides = [1, 1]} : vector<8x32xbf16> to vector<8x8xbf16>
    %112 = vector.extract_strided_slice %39 {offsets = [0, 24], sizes = [8, 8], strides = [1, 1]} : vector<8x32xbf16> to vector<8x8xbf16>
    %cst_42 = arith.constant dense<0.000000e+00> : vector<8x8xf32>
    %113 = tpu.matmul %111, %112, %cst_42 {dimension_numbers = #tpu.dot_dimension_numbers<[1], [1], [0], [0], [0, 0, 1, 0], [], []>} : vector<8x8xbf16>, vector<8x8xbf16>, vector<8x8xf32> -> vector<8x8xf32>
    %cst_43 = arith.constant 0.353553385 : f32
    %114 = vector.broadcast %cst_43 : f32 to vector<8x8xf32>
    %115 = arith.mulf %113, %114 : vector<8x8xf32>
    %116 = arith.addf %115, %12 : vector<8x8xf32>
    %cst_44 = arith.constant dense<0xFF800000> : vector<8xf32>
    %117 = vector.multi_reduction <maximumf>, %116, %cst_44 [1] : vector<8x8xf32> to vector<8xf32>
    %118 = vector.shape_cast %117 : vector<8xf32> to vector<8x1xf32>
    %119 = vector.broadcast %118 : vector<8x1xf32> to vector<8x8xf32>
    %120 = arith.subf %116, %119 : vector<8x8xf32>
    %121 = math.exp %120 : vector<8x8xf32>
    %cst_45 = arith.constant dense<0.000000e+00> : vector<8xf32>
    %122 = vector.multi_reduction <add>, %121, %cst_45 [1] : vector<8x8xf32> to vector<8xf32>
    %123 = vector.shape_cast %122 : vector<8xf32> to vector<8x1xf32>
    %124 = tpu.reciprocal %123 {approx = true} : vector<8x1xf32> -> vector<8x1xf32>
    %125 = vector.broadcast %124 : vector<8x1xf32> to vector<8x8xf32>
    %126 = arith.mulf %121, %125 : vector<8x8xf32>
    %127 = arith.truncf %126 : vector<8x8xf32> to vector<8x8xbf16>
    %128 = vector.extract_strided_slice %40 {offsets = [0, 24], sizes = [8, 8], strides = [1, 1]} : vector<8x32xbf16> to vector<8x8xbf16>
    %cst_46 = arith.constant dense<0.000000e+00> : vector<8x8xf32>
    %129 = tpu.matmul %127, %128, %cst_46 {dimension_numbers = #tpu.dot_dimension_numbers<[1], [0], [0], [1], [0, 0, 1, 1], [], []>} : vector<8x8xbf16>, vector<8x8xbf16>, vector<8x8xf32> -> vector<8x8xf32>
    %130 = arith.truncf %129 : vector<8x8xf32> to vector<8x8xbf16>
    %131 = vector.extract_strided_slice %37 {offsets = [24, 0], sizes = [8, 32], strides = [1, 1]} : vector<32x32xbf16> to vector<8x32xbf16>
    %cst_47 = arith.constant dense<0.000000e+00> : vector<8x32xf32>
    %132 = tpu.matmul %130, %131, %cst_47 {dimension_numbers = #tpu.dot_dimension_numbers<[1], [0], [0], [1], [0, 0, 1, 1], [], []>} : vector<8x8xbf16>, vector<8x32xbf16>, vector<8x32xf32> -> vector<8x32xf32>
    %133 = arith.addf %110, %132 : vector<8x32xf32>
    %c0_48 = arith.constant 0 : index
    %c0_49 = arith.constant 0 : index
    %134 = vector.load %arg18[%c0_48, %c0_49] : memref<16x32xf32, #tpu.memory_space<vmem>>, vector<8x32xf32>
    tpu.vector_store %arg18[%c0_48, %c0_49], %133 {strides = array<i32>} : memref<16x32xf32, #tpu.memory_space<vmem>>, vector<8x32xf32>,
    %135 = vector.extract_strided_slice %32 {offsets = [8, 0], sizes = [8, 32], strides = [1, 1]} : vector<16x32xbf16> to vector<8x32xbf16>
    %136 = vector.extract_strided_slice %34 {offsets = [8, 0], sizes = [8, 32], strides = [1, 1]} : vector<16x32xbf16> to vector<8x32xbf16>
    %137 = vector.extract_strided_slice %36 {offsets = [8, 0], sizes = [8, 32], strides = [1, 1]} : vector<16x32xbf16> to vector<8x32xbf16>
    %cst_50 = arith.constant 0.000000e+00 : f32
    %138 = vector.broadcast %cst_50 : f32 to vector<8x32xf32>
    %139 = vector.extract_strided_slice %135 {offsets = [0, 0], sizes = [8, 8], strides = [1, 1]} : vector<8x32xbf16> to vector<8x8xbf16>
    %140 = vector.extract_strided_slice %136 {offsets = [0, 0], sizes = [8, 8], strides = [1, 1]} : vector<8x32xbf16> to vector<8x8xbf16>
    %cst_51 = arith.constant dense<0.000000e+00> : vector<8x8xf32>
    %141 = tpu.matmul %139, %140, %cst_51 {dimension_numbers = #tpu.dot_dimension_numbers<[1], [1], [0], [0], [0, 0, 1, 0], [], []>} : vector<8x8xbf16>, vector<8x8xbf16>, vector<8x8xf32> -> vector<8x8xf32>
    %cst_52 = arith.constant 0.353553385 : f32
    %142 = vector.broadcast %cst_52 : f32 to vector<8x8xf32>
    %143 = arith.mulf %141, %142 : vector<8x8xf32>
    %144 = arith.addf %143, %12 : vector<8x8xf32>
    %cst_53 = arith.constant dense<0xFF800000> : vector<8xf32>
    %145 = vector.multi_reduction <maximumf>, %144, %cst_53 [1] : vector<8x8xf32> to vector<8xf32>
    %146 = vector.shape_cast %145 : vector<8xf32> to vector<8x1xf32>
    %147 = vector.broadcast %146 : vector<8x1xf32> to vector<8x8xf32>
    %148 = arith.subf %144, %147 : vector<8x8xf32>
    %149 = math.exp %148 : vector<8x8xf32>
    %cst_54 = arith.constant dense<0.000000e+00> : vector<8xf32>
    %150 = vector.multi_reduction <add>, %149, %cst_54 [1] : vector<8x8xf32> to vector<8xf32>
    %151 = vector.shape_cast %150 : vector<8xf32> to vector<8x1xf32>
    %152 = tpu.reciprocal %151 {approx = true} : vector<8x1xf32> -> vector<8x1xf32>
    %153 = vector.broadcast %152 : vector<8x1xf32> to vector<8x8xf32>
    %154 = arith.mulf %149, %153 : vector<8x8xf32>
    %155 = arith.truncf %154 : vector<8x8xf32> to vector<8x8xbf16>
    %156 = vector.extract_strided_slice %137 {offsets = [0, 0], sizes = [8, 8], strides = [1, 1]} : vector<8x32xbf16> to vector<8x8xbf16>
    %cst_55 = arith.constant dense<0.000000e+00> : vector<8x8xf32>
    %157 = tpu.matmul %155, %156, %cst_55 {dimension_numbers = #tpu.dot_dimension_numbers<[1], [0], [0], [1], [0, 0, 1, 1], [], []>} : vector<8x8xbf16>, vector<8x8xbf16>, vector<8x8xf32> -> vector<8x8xf32>
    %158 = arith.truncf %157 : vector<8x8xf32> to vector<8x8xbf16>
    %159 = vector.extract_strided_slice %37 {offsets = [0, 0], sizes = [8, 32], strides = [1, 1]} : vector<32x32xbf16> to vector<8x32xbf16>
    %cst_56 = arith.constant dense<0.000000e+00> : vector<8x32xf32>
    %160 = tpu.matmul %158, %159, %cst_56 {dimension_numbers = #tpu.dot_dimension_numbers<[1], [0], [0], [1], [0, 0, 1, 1], [], []>} : vector<8x8xbf16>, vector<8x32xbf16>, vector<8x32xf32> -> vector<8x32xf32>
    %161 = arith.addf %138, %160 : vector<8x32xf32>
    %162 = vector.extract_strided_slice %135 {offsets = [0, 8], sizes = [8, 8], strides = [1, 1]} : vector<8x32xbf16> to vector<8x8xbf16>
    %163 = vector.extract_strided_slice %136 {offsets = [0, 8], sizes = [8, 8], strides = [1, 1]} : vector<8x32xbf16> to vector<8x8xbf16>
    %cst_57 = arith.constant dense<0.000000e+00> : vector<8x8xf32>
    %164 = tpu.matmul %162, %163, %cst_57 {dimension_numbers = #tpu.dot_dimension_numbers<[1], [1], [0], [0], [0, 0, 1, 0], [], []>} : vector<8x8xbf16>, vector<8x8xbf16>, vector<8x8xf32> -> vector<8x8xf32>
    %cst_58 = arith.constant 0.353553385 : f32
    %165 = vector.broadcast %cst_58 : f32 to vector<8x8xf32>
    %166 = arith.mulf %164, %165 : vector<8x8xf32>
    %167 = arith.addf %166, %12 : vector<8x8xf32>
    %cst_59 = arith.constant dense<0xFF800000> : vector<8xf32>
    %168 = vector.multi_reduction <maximumf>, %167, %cst_59 [1] : vector<8x8xf32> to vector<8xf32>
    %169 = vector.shape_cast %168 : vector<8xf32> to vector<8x1xf32>
    %170 = vector.broadcast %169 : vector<8x1xf32> to vector<8x8xf32>
    %171 = arith.subf %167, %170 : vector<8x8xf32>
    %172 = math.exp %171 : vector<8x8xf32>
    %cst_60 = arith.constant dense<0.000000e+00> : vector<8xf32>
    %173 = vector.multi_reduction <add>, %172, %cst_60 [1] : vector<8x8xf32> to vector<8xf32>
    %174 = vector.shape_cast %173 : vector<8xf32> to vector<8x1xf32>
    %175 = tpu.reciprocal %174 {approx = true} : vector<8x1xf32> -> vector<8x1xf32>
    %176 = vector.broadcast %175 : vector<8x1xf32> to vector<8x8xf32>
    %177 = arith.mulf %172, %176 : vector<8x8xf32>
    %178 = arith.truncf %177 : vector<8x8xf32> to vector<8x8xbf16>
    %179 = vector.extract_strided_slice %137 {offsets = [0, 8], sizes = [8, 8], strides = [1, 1]} : vector<8x32xbf16> to vector<8x8xbf16>
    %cst_61 = arith.constant dense<0.000000e+00> : vector<8x8xf32>
    %180 = tpu.matmul %178, %179, %cst_61 {dimension_numbers = #tpu.dot_dimension_numbers<[1], [0], [0], [1], [0, 0, 1, 1], [], []>} : vector<8x8xbf16>, vector<8x8xbf16>, vector<8x8xf32> -> vector<8x8xf32>
    %181 = arith.truncf %180 : vector<8x8xf32> to vector<8x8xbf16>
    %182 = vector.extract_strided_slice %37 {offsets = [8, 0], sizes = [8, 32], strides = [1, 1]} : vector<32x32xbf16> to vector<8x32xbf16>
    %cst_62 = arith.constant dense<0.000000e+00> : vector<8x32xf32>
    %183 = tpu.matmul %181, %182, %cst_62 {dimension_numbers = #tpu.dot_dimension_numbers<[1], [0], [0], [1], [0, 0, 1, 1], [], []>} : vector<8x8xbf16>, vector<8x32xbf16>, vector<8x32xf32> -> vector<8x32xf32>
    %184 = arith.addf %161, %183 : vector<8x32xf32>
    %185 = vector.extract_strided_slice %135 {offsets = [0, 16], sizes = [8, 8], strides = [1, 1]} : vector<8x32xbf16> to vector<8x8xbf16>
    %186 = vector.extract_strided_slice %136 {offsets = [0, 16], sizes = [8, 8], strides = [1, 1]} : vector<8x32xbf16> to vector<8x8xbf16>
    %cst_63 = arith.constant dense<0.000000e+00> : vector<8x8xf32>
    %187 = tpu.matmul %185, %186, %cst_63 {dimension_numbers = #tpu.dot_dimension_numbers<[1], [1], [0], [0], [0, 0, 1, 0], [], []>} : vector<8x8xbf16>, vector<8x8xbf16>, vector<8x8xf32> -> vector<8x8xf32>
    %cst_64 = arith.constant 0.353553385 : f32
    %188 = vector.broadcast %cst_64 : f32 to vector<8x8xf32>
    %189 = arith.mulf %187, %188 : vector<8x8xf32>
    %190 = arith.addf %189, %12 : vector<8x8xf32>
    %cst_65 = arith.constant dense<0xFF800000> : vector<8xf32>
    %191 = vector.multi_reduction <maximumf>, %190, %cst_65 [1] : vector<8x8xf32> to vector<8xf32>
    %192 = vector.shape_cast %191 : vector<8xf32> to vector<8x1xf32>
    %193 = vector.broadcast %192 : vector<8x1xf32> to vector<8x8xf32>
    %194 = arith.subf %190, %193 : vector<8x8xf32>
    %195 = math.exp %194 : vector<8x8xf32>
    %cst_66 = arith.constant dense<0.000000e+00> : vector<8xf32>
    %196 = vector.multi_reduction <add>, %195, %cst_66 [1] : vector<8x8xf32> to vector<8xf32>
    %197 = vector.shape_cast %196 : vector<8xf32> to vector<8x1xf32>
    %198 = tpu.reciprocal %197 {approx = true} : vector<8x1xf32> -> vector<8x1xf32>
    %199 = vector.broadcast %198 : vector<8x1xf32> to vector<8x8xf32>
    %200 = arith.mulf %195, %199 : vector<8x8xf32>
    %201 = arith.truncf %200 : vector<8x8xf32> to vector<8x8xbf16>
    %202 = vector.extract_strided_slice %137 {offsets = [0, 16], sizes = [8, 8], strides = [1, 1]} : vector<8x32xbf16> to vector<8x8xbf16>
    %cst_67 = arith.constant dense<0.000000e+00> : vector<8x8xf32>
    %203 = tpu.matmul %201, %202, %cst_67 {dimension_numbers = #tpu.dot_dimension_numbers<[1], [0], [0], [1], [0, 0, 1, 1], [], []>} : vector<8x8xbf16>, vector<8x8xbf16>, vector<8x8xf32> -> vector<8x8xf32>
    %204 = arith.truncf %203 : vector<8x8xf32> to vector<8x8xbf16>
    %205 = vector.extract_strided_slice %37 {offsets = [16, 0], sizes = [8, 32], strides = [1, 1]} : vector<32x32xbf16> to vector<8x32xbf16>
    %cst_68 = arith.constant dense<0.000000e+00> : vector<8x32xf32>
    %206 = tpu.matmul %204, %205, %cst_68 {dimension_numbers = #tpu.dot_dimension_numbers<[1], [0], [0], [1], [0, 0, 1, 1], [], []>} : vector<8x8xbf16>, vector<8x32xbf16>, vector<8x32xf32> -> vector<8x32xf32>
    %207 = arith.addf %184, %206 : vector<8x32xf32>
    %208 = vector.extract_strided_slice %135 {offsets = [0, 24], sizes = [8, 8], strides = [1, 1]} : vector<8x32xbf16> to vector<8x8xbf16>
    %209 = vector.extract_strided_slice %136 {offsets = [0, 24], sizes = [8, 8], strides = [1, 1]} : vector<8x32xbf16> to vector<8x8xbf16>
    %cst_69 = arith.constant dense<0.000000e+00> : vector<8x8xf32>
    %210 = tpu.matmul %208, %209, %cst_69 {dimension_numbers = #tpu.dot_dimension_numbers<[1], [1], [0], [0], [0, 0, 1, 0], [], []>} : vector<8x8xbf16>, vector<8x8xbf16>, vector<8x8xf32> -> vector<8x8xf32>
    %cst_70 = arith.constant 0.353553385 : f32
    %211 = vector.broadcast %cst_70 : f32 to vector<8x8xf32>
    %212 = arith.mulf %210, %211 : vector<8x8xf32>
    %213 = arith.addf %212, %12 : vector<8x8xf32>
    %cst_71 = arith.constant dense<0xFF800000> : vector<8xf32>
    %214 = vector.multi_reduction <maximumf>, %213, %cst_71 [1] : vector<8x8xf32> to vector<8xf32>
    %215 = vector.shape_cast %214 : vector<8xf32> to vector<8x1xf32>
    %216 = vector.broadcast %215 : vector<8x1xf32> to vector<8x8xf32>
    %217 = arith.subf %213, %216 : vector<8x8xf32>
    %218 = math.exp %217 : vector<8x8xf32>
    %cst_72 = arith.constant dense<0.000000e+00> : vector<8xf32>
    %219 = vector.multi_reduction <add>, %218, %cst_72 [1] : vector<8x8xf32> to vector<8xf32>
    %220 = vector.shape_cast %219 : vector<8xf32> to vector<8x1xf32>
    %221 = tpu.reciprocal %220 {approx = true} : vector<8x1xf32> -> vector<8x1xf32>
    %222 = vector.broadcast %221 : vector<8x1xf32> to vector<8x8xf32>
    %223 = arith.mulf %218, %222 : vector<8x8xf32>
    %224 = arith.truncf %223 : vector<8x8xf32> to vector<8x8xbf16>
    %225 = vector.extract_strided_slice %137 {offsets = [0, 24], sizes = [8, 8], strides = [1, 1]} : vector<8x32xbf16> to vector<8x8xbf16>
    %cst_73 = arith.constant dense<0.000000e+00> : vector<8x8xf32>
    %226 = tpu.matmul %224, %225, %cst_73 {dimension_numbers = #tpu.dot_dimension_numbers<[1], [0], [0], [1], [0, 0, 1, 1], [], []>} : vector<8x8xbf16>, vector<8x8xbf16>, vector<8x8xf32> -> vector<8x8xf32>
    %227 = arith.truncf %226 : vector<8x8xf32> to vector<8x8xbf16>
    %228 = vector.extract_strided_slice %37 {offsets = [24, 0], sizes = [8, 32], strides = [1, 1]} : vector<32x32xbf16> to vector<8x32xbf16>
    %cst_74 = arith.constant dense<0.000000e+00> : vector<8x32xf32>
    %229 = tpu.matmul %227, %228, %cst_74 {dimension_numbers = #tpu.dot_dimension_numbers<[1], [0], [0], [1], [0, 0, 1, 1], [], []>} : vector<8x8xbf16>, vector<8x32xbf16>, vector<8x32xf32> -> vector<8x32xf32>
    %230 = arith.addf %207, %229 : vector<8x32xf32>
    %c8 = arith.constant 8 : index
    %c0_75 = arith.constant 0 : index
    %231 = vector.load %arg18[%c8, %c0_75] : memref<16x32xf32, #tpu.memory_space<vmem>>, vector<8x32xf32>
    tpu.vector_store %arg18[%c8, %c0_75], %230 {strides = array<i32>} : memref<16x32xf32, #tpu.memory_space<vmem>>, vector<8x32xf32>,
    %c0_76 = arith.constant 0 : index
    %c0_77 = arith.constant 0 : index
    %232 = vector.load %arg18[%c0_76, %c0_77] : memref<16x32xf32, #tpu.memory_space<vmem>>, vector<16x32xf32>
    %233 = arith.addf %0, %232 : vector<16x32xf32>
    %cst_78 = arith.constant dense<0.000000e+00> : vector<16xf32>
    %234 = vector.multi_reduction <add>, %233, %cst_78 [1] : vector<16x32xf32> to vector<16xf32>
    %235 = vector.shape_cast %234 : vector<16xf32> to vector<16x1xf32>
    %cst_79 = arith.constant 3.200000e+01 : f32
    %236 = vector.broadcast %cst_79 : f32 to vector<16x1xf32>
    %237 = arith.divf %235, %236 : vector<16x1xf32>
    %238 = vector.broadcast %237 : vector<16x1xf32> to vector<16x32xf32>
    %239 = arith.subf %233, %238 : vector<16x32xf32>
    %240 = arith.mulf %239, %239 : vector<16x32xf32>
    %cst_80 = arith.constant dense<0.000000e+00> : vector<16xf32>
    %241 = vector.multi_reduction <add>, %240, %cst_80 [1] : vector<16x32xf32> to vector<16xf32>
    %242 = vector.shape_cast %241 : vector<16xf32> to vector<16x1xf32>
    %cst_81 = arith.constant 3.200000e+01 : f32
    %243 = vector.broadcast %cst_81 : f32 to vector<16x1xf32>
    %244 = arith.divf %242, %243 : vector<16x1xf32>
    %245 = vector.broadcast %237 : vector<16x1xf32> to vector<16x32xf32>
    %246 = arith.subf %233, %245 : vector<16x32xf32>
    %cst_82 = arith.constant 9.99999974E-6 : f32
    %247 = vector.broadcast %cst_82 : f32 to vector<16x1xf32>
    %248 = arith.addf %244, %247 : vector<16x1xf32>
    %249 = math.rsqrt %248 : vector<16x1xf32>
    %250 = vector.broadcast %249 : vector<16x1xf32> to vector<16x32xf32>
    %251 = arith.mulf %246, %250 : vector<16x32xf32>
    %252 = vector.extract_strided_slice %3 {offsets = [0, 0], sizes = [1, 32], strides = [1, 1]} : vector<3x32xf32> to vector<1x32xf32>
    %253 = vector.broadcast %252 : vector<1x32xf32> to vector<16x32xf32>
    %254 = arith.mulf %251, %253 : vector<16x32xf32>
    %255 = vector.extract_strided_slice %4 {offsets = [0, 0], sizes = [1, 32], strides = [1, 1]} : vector<3x32xf32> to vector<1x32xf32>
    %256 = vector.broadcast %255 : vector<1x32xf32> to vector<16x32xf32>
    %257 = arith.addf %254, %256 : vector<16x32xf32>
    %258 = arith.truncf %257 : vector<16x32xf32> to vector<16x32xbf16>
    %c0_83 = arith.constant 0 : index
    %c0_84 = arith.constant 0 : index
    %259 = vector.load %arg8[%c0_83, %c0_84] : memref<32x32xbf16, #tpu.memory_space<vmem>>, vector<32x32xbf16>
    %cst_85 = arith.constant dense<0.000000e+00> : vector<16x32xf32>
    %260 = tpu.matmul %258, %259, %cst_85 {dimension_numbers = #tpu.dot_dimension_numbers<[1], [0], [0], [1], [0, 0, 1, 1], [], []>} : vector<16x32xbf16>, vector<32x32xbf16>, vector<16x32xf32> -> vector<16x32xf32>
    %261 = arith.truncf %2 : vector<16x32xf32> to vector<16x32xbf16>
    %c0_86 = arith.constant 0 : index
    %c0_87 = arith.constant 0 : index
    %262 = vector.load %arg9[%c0_86, %c0_87] : memref<32x64xbf16, #tpu.memory_space<vmem>>, vector<32x64xbf16>
    %cst_88 = arith.constant dense<0.000000e+00> : vector<16x64xf32>
    %263 = tpu.matmul %261, %262, %cst_88 {dimension_numbers = #tpu.dot_dimension_numbers<[1], [0], [0], [1], [0, 0, 1, 1], [], []>} : vector<16x32xbf16>, vector<32x64xbf16>, vector<16x64xf32> -> vector<16x64xf32>
    %264 = arith.truncf %260 : vector<16x32xf32> to vector<16x32xbf16>
    %265 = vector.extract_strided_slice %263 {offsets = [0, 0], sizes = [16, 32], strides = [1, 1]} : vector<16x64xf32> to vector<16x32xf32>
    %266 = arith.truncf %265 : vector<16x32xf32> to vector<16x32xbf16>
    %267 = vector.extract_strided_slice %263 {offsets = [0, 32], sizes = [16, 32], strides = [1, 1]} : vector<16x64xf32> to vector<16x32xf32>
    %268 = arith.truncf %267 : vector<16x32xf32> to vector<16x32xbf16>
    %c0_89 = arith.constant 0 : index
    %c0_90 = arith.constant 0 : index
    %269 = vector.load %arg10[%c0_89, %c0_90] : memref<32x32xbf16, #tpu.memory_space<vmem>>, vector<32x32xbf16>
    %270 = vector.extract_strided_slice %264 {offsets = [0, 0], sizes = [8, 32], strides = [1, 1]} : vector<16x32xbf16> to vector<8x32xbf16>
    %271 = vector.extract_strided_slice %266 {offsets = [0, 0], sizes = [8, 32], strides = [1, 1]} : vector<16x32xbf16> to vector<8x32xbf16>
    %272 = vector.extract_strided_slice %268 {offsets = [0, 0], sizes = [8, 32], strides = [1, 1]} : vector<16x32xbf16> to vector<8x32xbf16>
    %cst_91 = arith.constant 0.000000e+00 : f32
    %273 = vector.broadcast %cst_91 : f32 to vector<8x32xf32>
    %274 = vector.extract_strided_slice %270 {offsets = [0, 0], sizes = [8, 8], strides = [1, 1]} : vector<8x32xbf16> to vector<8x8xbf16>
    %275 = vector.extract_strided_slice %271 {offsets = [0, 0], sizes = [8, 8], strides = [1, 1]} : vector<8x32xbf16> to vector<8x8xbf16>
    %cst_92 = arith.constant dense<0.000000e+00> : vector<8x8xf32>
    %276 = tpu.matmul %274, %275, %cst_92 {dimension_numbers = #tpu.dot_dimension_numbers<[1], [1], [0], [0], [0, 0, 1, 0], [], []>} : vector<8x8xbf16>, vector<8x8xbf16>, vector<8x8xf32> -> vector<8x8xf32>
    %cst_93 = arith.constant 0.353553385 : f32
    %277 = vector.broadcast %cst_93 : f32 to vector<8x8xf32>
    %278 = arith.mulf %276, %277 : vector<8x8xf32>
    %279 = arith.addf %278, %19 : vector<8x8xf32>
    %cst_94 = arith.constant dense<0xFF800000> : vector<8xf32>
    %280 = vector.multi_reduction <maximumf>, %279, %cst_94 [1] : vector<8x8xf32> to vector<8xf32>
    %281 = vector.shape_cast %280 : vector<8xf32> to vector<8x1xf32>
    %282 = vector.broadcast %281 : vector<8x1xf32> to vector<8x8xf32>
    %283 = arith.subf %279, %282 : vector<8x8xf32>
    %284 = math.exp %283 : vector<8x8xf32>
    %cst_95 = arith.constant dense<0.000000e+00> : vector<8xf32>
    %285 = vector.multi_reduction <add>, %284, %cst_95 [1] : vector<8x8xf32> to vector<8xf32>
    %286 = vector.shape_cast %285 : vector<8xf32> to vector<8x1xf32>
    %287 = tpu.reciprocal %286 {approx = true} : vector<8x1xf32> -> vector<8x1xf32>
    %288 = vector.broadcast %287 : vector<8x1xf32> to vector<8x8xf32>
    %289 = arith.mulf %284, %288 : vector<8x8xf32>
    %290 = arith.truncf %289 : vector<8x8xf32> to vector<8x8xbf16>
    %291 = vector.extract_strided_slice %272 {offsets = [0, 0], sizes = [8, 8], strides = [1, 1]} : vector<8x32xbf16> to vector<8x8xbf16>
    %cst_96 = arith.constant dense<0.000000e+00> : vector<8x8xf32>
    %292 = tpu.matmul %290, %291, %cst_96 {dimension_numbers = #tpu.dot_dimension_numbers<[1], [0], [0], [1], [0, 0, 1, 1], [], []>} : vector<8x8xbf16>, vector<8x8xbf16>, vector<8x8xf32> -> vector<8x8xf32>
    %293 = arith.truncf %292 : vector<8x8xf32> to vector<8x8xbf16>
    %294 = vector.extract_strided_slice %269 {offsets = [0, 0], sizes = [8, 32], strides = [1, 1]} : vector<32x32xbf16> to vector<8x32xbf16>
    %cst_97 = arith.constant dense<0.000000e+00> : vector<8x32xf32>
    %295 = tpu.matmul %293, %294, %cst_97 {dimension_numbers = #tpu.dot_dimension_numbers<[1], [0], [0], [1], [0, 0, 1, 1], [], []>} : vector<8x8xbf16>, vector<8x32xbf16>, vector<8x32xf32> -> vector<8x32xf32>
    %296 = arith.addf %273, %295 : vector<8x32xf32>
    %297 = vector.extract_strided_slice %270 {offsets = [0, 8], sizes = [8, 8], strides = [1, 1]} : vector<8x32xbf16> to vector<8x8xbf16>
    %298 = vector.extract_strided_slice %271 {offsets = [0, 8], sizes = [8, 8], strides = [1, 1]} : vector<8x32xbf16> to vector<8x8xbf16>
    %cst_98 = arith.constant dense<0.000000e+00> : vector<8x8xf32>
    %299 = tpu.matmul %297, %298, %cst_98 {dimension_numbers = #tpu.dot_dimension_numbers<[1], [1], [0], [0], [0, 0, 1, 0], [], []>} : vector<8x8xbf16>, vector<8x8xbf16>, vector<8x8xf32> -> vector<8x8xf32>
    %cst_99 = arith.constant 0.353553385 : f32
    %300 = vector.broadcast %cst_99 : f32 to vector<8x8xf32>
    %301 = arith.mulf %299, %300 : vector<8x8xf32>
    %302 = arith.addf %301, %19 : vector<8x8xf32>
    %cst_100 = arith.constant dense<0xFF800000> : vector<8xf32>
    %303 = vector.multi_reduction <maximumf>, %302, %cst_100 [1] : vector<8x8xf32> to vector<8xf32>
    %304 = vector.shape_cast %303 : vector<8xf32> to vector<8x1xf32>
    %305 = vector.broadcast %304 : vector<8x1xf32> to vector<8x8xf32>
    %306 = arith.subf %302, %305 : vector<8x8xf32>
    %307 = math.exp %306 : vector<8x8xf32>
    %cst_101 = arith.constant dense<0.000000e+00> : vector<8xf32>
    %308 = vector.multi_reduction <add>, %307, %cst_101 [1] : vector<8x8xf32> to vector<8xf32>
    %309 = vector.shape_cast %308 : vector<8xf32> to vector<8x1xf32>
    %310 = tpu.reciprocal %309 {approx = true} : vector<8x1xf32> -> vector<8x1xf32>
    %311 = vector.broadcast %310 : vector<8x1xf32> to vector<8x8xf32>
    %312 = arith.mulf %307, %311 : vector<8x8xf32>
    %313 = arith.truncf %312 : vector<8x8xf32> to vector<8x8xbf16>
    %314 = vector.extract_strided_slice %272 {offsets = [0, 8], sizes = [8, 8], strides = [1, 1]} : vector<8x32xbf16> to vector<8x8xbf16>
    %cst_102 = arith.constant dense<0.000000e+00> : vector<8x8xf32>
    %315 = tpu.matmul %313, %314, %cst_102 {dimension_numbers = #tpu.dot_dimension_numbers<[1], [0], [0], [1], [0, 0, 1, 1], [], []>} : vector<8x8xbf16>, vector<8x8xbf16>, vector<8x8xf32> -> vector<8x8xf32>
    %316 = arith.truncf %315 : vector<8x8xf32> to vector<8x8xbf16>
    %317 = vector.extract_strided_slice %269 {offsets = [8, 0], sizes = [8, 32], strides = [1, 1]} : vector<32x32xbf16> to vector<8x32xbf16>
    %cst_103 = arith.constant dense<0.000000e+00> : vector<8x32xf32>
    %318 = tpu.matmul %316, %317, %cst_103 {dimension_numbers = #tpu.dot_dimension_numbers<[1], [0], [0], [1], [0, 0, 1, 1], [], []>} : vector<8x8xbf16>, vector<8x32xbf16>, vector<8x32xf32> -> vector<8x32xf32>
    %319 = arith.addf %296, %318 : vector<8x32xf32>
    %320 = vector.extract_strided_slice %270 {offsets = [0, 16], sizes = [8, 8], strides = [1, 1]} : vector<8x32xbf16> to vector<8x8xbf16>
    %321 = vector.extract_strided_slice %271 {offsets = [0, 16], sizes = [8, 8], strides = [1, 1]} : vector<8x32xbf16> to vector<8x8xbf16>
    %cst_104 = arith.constant dense<0.000000e+00> : vector<8x8xf32>
    %322 = tpu.matmul %320, %321, %cst_104 {dimension_numbers = #tpu.dot_dimension_numbers<[1], [1], [0], [0], [0, 0, 1, 0], [], []>} : vector<8x8xbf16>, vector<8x8xbf16>, vector<8x8xf32> -> vector<8x8xf32>
    %cst_105 = arith.constant 0.353553385 : f32
    %323 = vector.broadcast %cst_105 : f32 to vector<8x8xf32>
    %324 = arith.mulf %322, %323 : vector<8x8xf32>
    %325 = arith.addf %324, %19 : vector<8x8xf32>
    %cst_106 = arith.constant dense<0xFF800000> : vector<8xf32>
    %326 = vector.multi_reduction <maximumf>, %325, %cst_106 [1] : vector<8x8xf32> to vector<8xf32>
    %327 = vector.shape_cast %326 : vector<8xf32> to vector<8x1xf32>
    %328 = vector.broadcast %327 : vector<8x1xf32> to vector<8x8xf32>
    %329 = arith.subf %325, %328 : vector<8x8xf32>
    %330 = math.exp %329 : vector<8x8xf32>
    %cst_107 = arith.constant dense<0.000000e+00> : vector<8xf32>
    %331 = vector.multi_reduction <add>, %330, %cst_107 [1] : vector<8x8xf32> to vector<8xf32>
    %332 = vector.shape_cast %331 : vector<8xf32> to vector<8x1xf32>
    %333 = tpu.reciprocal %332 {approx = true} : vector<8x1xf32> -> vector<8x1xf32>
    %334 = vector.broadcast %333 : vector<8x1xf32> to vector<8x8xf32>
    %335 = arith.mulf %330, %334 : vector<8x8xf32>
    %336 = arith.truncf %335 : vector<8x8xf32> to vector<8x8xbf16>
    %337 = vector.extract_strided_slice %272 {offsets = [0, 16], sizes = [8, 8], strides = [1, 1]} : vector<8x32xbf16> to vector<8x8xbf16>
    %cst_108 = arith.constant dense<0.000000e+00> : vector<8x8xf32>
    %338 = tpu.matmul %336, %337, %cst_108 {dimension_numbers = #tpu.dot_dimension_numbers<[1], [0], [0], [1], [0, 0, 1, 1], [], []>} : vector<8x8xbf16>, vector<8x8xbf16>, vector<8x8xf32> -> vector<8x8xf32>
    %339 = arith.truncf %338 : vector<8x8xf32> to vector<8x8xbf16>
    %340 = vector.extract_strided_slice %269 {offsets = [16, 0], sizes = [8, 32], strides = [1, 1]} : vector<32x32xbf16> to vector<8x32xbf16>
    %cst_109 = arith.constant dense<0.000000e+00> : vector<8x32xf32>
    %341 = tpu.matmul %339, %340, %cst_109 {dimension_numbers = #tpu.dot_dimension_numbers<[1], [0], [0], [1], [0, 0, 1, 1], [], []>} : vector<8x8xbf16>, vector<8x32xbf16>, vector<8x32xf32> -> vector<8x32xf32>
    %342 = arith.addf %319, %341 : vector<8x32xf32>
    %343 = vector.extract_strided_slice %270 {offsets = [0, 24], sizes = [8, 8], strides = [1, 1]} : vector<8x32xbf16> to vector<8x8xbf16>
    %344 = vector.extract_strided_slice %271 {offsets = [0, 24], sizes = [8, 8], strides = [1, 1]} : vector<8x32xbf16> to vector<8x8xbf16>
    %cst_110 = arith.constant dense<0.000000e+00> : vector<8x8xf32>
    %345 = tpu.matmul %343, %344, %cst_110 {dimension_numbers = #tpu.dot_dimension_numbers<[1], [1], [0], [0], [0, 0, 1, 0], [], []>} : vector<8x8xbf16>, vector<8x8xbf16>, vector<8x8xf32> -> vector<8x8xf32>
    %cst_111 = arith.constant 0.353553385 : f32
    %346 = vector.broadcast %cst_111 : f32 to vector<8x8xf32>
    %347 = arith.mulf %345, %346 : vector<8x8xf32>
    %348 = arith.addf %347, %19 : vector<8x8xf32>
    %cst_112 = arith.constant dense<0xFF800000> : vector<8xf32>
    %349 = vector.multi_reduction <maximumf>, %348, %cst_112 [1] : vector<8x8xf32> to vector<8xf32>
    %350 = vector.shape_cast %349 : vector<8xf32> to vector<8x1xf32>
    %351 = vector.broadcast %350 : vector<8x1xf32> to vector<8x8xf32>
    %352 = arith.subf %348, %351 : vector<8x8xf32>
    %353 = math.exp %352 : vector<8x8xf32>
    %cst_113 = arith.constant dense<0.000000e+00> : vector<8xf32>
    %354 = vector.multi_reduction <add>, %353, %cst_113 [1] : vector<8x8xf32> to vector<8xf32>
    %355 = vector.shape_cast %354 : vector<8xf32> to vector<8x1xf32>
    %356 = tpu.reciprocal %355 {approx = true} : vector<8x1xf32> -> vector<8x1xf32>
    %357 = vector.broadcast %356 : vector<8x1xf32> to vector<8x8xf32>
    %358 = arith.mulf %353, %357 : vector<8x8xf32>
    %359 = arith.truncf %358 : vector<8x8xf32> to vector<8x8xbf16>
    %360 = vector.extract_strided_slice %272 {offsets = [0, 24], sizes = [8, 8], strides = [1, 1]} : vector<8x32xbf16> to vector<8x8xbf16>
    %cst_114 = arith.constant dense<0.000000e+00> : vector<8x8xf32>
    %361 = tpu.matmul %359, %360, %cst_114 {dimension_numbers = #tpu.dot_dimension_numbers<[1], [0], [0], [1], [0, 0, 1, 1], [], []>} : vector<8x8xbf16>, vector<8x8xbf16>, vector<8x8xf32> -> vector<8x8xf32>
    %362 = arith.truncf %361 : vector<8x8xf32> to vector<8x8xbf16>
    %363 = vector.extract_strided_slice %269 {offsets = [24, 0], sizes = [8, 32], strides = [1, 1]} : vector<32x32xbf16> to vector<8x32xbf16>
    %cst_115 = arith.constant dense<0.000000e+00> : vector<8x32xf32>
    %364 = tpu.matmul %362, %363, %cst_115 {dimension_numbers = #tpu.dot_dimension_numbers<[1], [0], [0], [1], [0, 0, 1, 1], [], []>} : vector<8x8xbf16>, vector<8x32xbf16>, vector<8x32xf32> -> vector<8x32xf32>
    %365 = arith.addf %342, %364 : vector<8x32xf32>
    %c0_116 = arith.constant 0 : index
    %c0_117 = arith.constant 0 : index
    %366 = vector.load %arg18[%c0_116, %c0_117] : memref<16x32xf32, #tpu.memory_space<vmem>>, vector<8x32xf32>
    tpu.vector_store %arg18[%c0_116, %c0_117], %365 {strides = array<i32>} : memref<16x32xf32, #tpu.memory_space<vmem>>, vector<8x32xf32>,
    %367 = vector.extract_strided_slice %264 {offsets = [8, 0], sizes = [8, 32], strides = [1, 1]} : vector<16x32xbf16> to vector<8x32xbf16>
    %368 = vector.extract_strided_slice %266 {offsets = [8, 0], sizes = [8, 32], strides = [1, 1]} : vector<16x32xbf16> to vector<8x32xbf16>
    %369 = vector.extract_strided_slice %268 {offsets = [8, 0], sizes = [8, 32], strides = [1, 1]} : vector<16x32xbf16> to vector<8x32xbf16>
    %cst_118 = arith.constant 0.000000e+00 : f32
    %370 = vector.broadcast %cst_118 : f32 to vector<8x32xf32>
    %371 = vector.extract_strided_slice %367 {offsets = [0, 0], sizes = [8, 8], strides = [1, 1]} : vector<8x32xbf16> to vector<8x8xbf16>
    %372 = vector.extract_strided_slice %368 {offsets = [0, 0], sizes = [8, 8], strides = [1, 1]} : vector<8x32xbf16> to vector<8x8xbf16>
    %cst_119 = arith.constant dense<0.000000e+00> : vector<8x8xf32>
    %373 = tpu.matmul %371, %372, %cst_119 {dimension_numbers = #tpu.dot_dimension_numbers<[1], [1], [0], [0], [0, 0, 1, 0], [], []>} : vector<8x8xbf16>, vector<8x8xbf16>, vector<8x8xf32> -> vector<8x8xf32>
    %cst_120 = arith.constant 0.353553385 : f32
    %374 = vector.broadcast %cst_120 : f32 to vector<8x8xf32>
    %375 = arith.mulf %373, %374 : vector<8x8xf32>
    %376 = arith.addf %375, %25 : vector<8x8xf32>
    %cst_121 = arith.constant dense<0xFF800000> : vector<8xf32>
    %377 = vector.multi_reduction <maximumf>, %376, %cst_121 [1] : vector<8x8xf32> to vector<8xf32>
    %378 = vector.shape_cast %377 : vector<8xf32> to vector<8x1xf32>
    %379 = vector.broadcast %378 : vector<8x1xf32> to vector<8x8xf32>
    %380 = arith.subf %376, %379 : vector<8x8xf32>
    %381 = math.exp %380 : vector<8x8xf32>
    %cst_122 = arith.constant dense<0.000000e+00> : vector<8xf32>
    %382 = vector.multi_reduction <add>, %381, %cst_122 [1] : vector<8x8xf32> to vector<8xf32>
    %383 = vector.shape_cast %382 : vector<8xf32> to vector<8x1xf32>
    %384 = tpu.reciprocal %383 {approx = true} : vector<8x1xf32> -> vector<8x1xf32>
    %385 = vector.broadcast %384 : vector<8x1xf32> to vector<8x8xf32>
    %386 = arith.mulf %381, %385 : vector<8x8xf32>
    %387 = arith.truncf %386 : vector<8x8xf32> to vector<8x8xbf16>
    %388 = vector.extract_strided_slice %369 {offsets = [0, 0], sizes = [8, 8], strides = [1, 1]} : vector<8x32xbf16> to vector<8x8xbf16>
    %cst_123 = arith.constant dense<0.000000e+00> : vector<8x8xf32>
    %389 = tpu.matmul %387, %388, %cst_123 {dimension_numbers = #tpu.dot_dimension_numbers<[1], [0], [0], [1], [0, 0, 1, 1], [], []>} : vector<8x8xbf16>, vector<8x8xbf16>, vector<8x8xf32> -> vector<8x8xf32>
    %390 = arith.truncf %389 : vector<8x8xf32> to vector<8x8xbf16>
    %391 = vector.extract_strided_slice %269 {offsets = [0, 0], sizes = [8, 32], strides = [1, 1]} : vector<32x32xbf16> to vector<8x32xbf16>
    %cst_124 = arith.constant dense<0.000000e+00> : vector<8x32xf32>
    %392 = tpu.matmul %390, %391, %cst_124 {dimension_numbers = #tpu.dot_dimension_numbers<[1], [0], [0], [1], [0, 0, 1, 1], [], []>} : vector<8x8xbf16>, vector<8x32xbf16>, vector<8x32xf32> -> vector<8x32xf32>
    %393 = arith.addf %370, %392 : vector<8x32xf32>
    %394 = vector.extract_strided_slice %367 {offsets = [0, 8], sizes = [8, 8], strides = [1, 1]} : vector<8x32xbf16> to vector<8x8xbf16>
    %395 = vector.extract_strided_slice %368 {offsets = [0, 8], sizes = [8, 8], strides = [1, 1]} : vector<8x32xbf16> to vector<8x8xbf16>
    %cst_125 = arith.constant dense<0.000000e+00> : vector<8x8xf32>
    %396 = tpu.matmul %394, %395, %cst_125 {dimension_numbers = #tpu.dot_dimension_numbers<[1], [1], [0], [0], [0, 0, 1, 0], [], []>} : vector<8x8xbf16>, vector<8x8xbf16>, vector<8x8xf32> -> vector<8x8xf32>
    %cst_126 = arith.constant 0.353553385 : f32
    %397 = vector.broadcast %cst_126 : f32 to vector<8x8xf32>
    %398 = arith.mulf %396, %397 : vector<8x8xf32>
    %399 = arith.addf %398, %25 : vector<8x8xf32>
    %cst_127 = arith.constant dense<0xFF800000> : vector<8xf32>
    %400 = vector.multi_reduction <maximumf>, %399, %cst_127 [1] : vector<8x8xf32> to vector<8xf32>
    %401 = vector.shape_cast %400 : vector<8xf32> to vector<8x1xf32>
    %402 = vector.broadcast %401 : vector<8x1xf32> to vector<8x8xf32>
    %403 = arith.subf %399, %402 : vector<8x8xf32>
    %404 = math.exp %403 : vector<8x8xf32>
    %cst_128 = arith.constant dense<0.000000e+00> : vector<8xf32>
    %405 = vector.multi_reduction <add>, %404, %cst_128 [1] : vector<8x8xf32> to vector<8xf32>
    %406 = vector.shape_cast %405 : vector<8xf32> to vector<8x1xf32>
    %407 = tpu.reciprocal %406 {approx = true} : vector<8x1xf32> -> vector<8x1xf32>
    %408 = vector.broadcast %407 : vector<8x1xf32> to vector<8x8xf32>
    %409 = arith.mulf %404, %408 : vector<8x8xf32>
    %410 = arith.truncf %409 : vector<8x8xf32> to vector<8x8xbf16>
    %411 = vector.extract_strided_slice %369 {offsets = [0, 8], sizes = [8, 8], strides = [1, 1]} : vector<8x32xbf16> to vector<8x8xbf16>
    %cst_129 = arith.constant dense<0.000000e+00> : vector<8x8xf32>
    %412 = tpu.matmul %410, %411, %cst_129 {dimension_numbers = #tpu.dot_dimension_numbers<[1], [0], [0], [1], [0, 0, 1, 1], [], []>} : vector<8x8xbf16>, vector<8x8xbf16>, vector<8x8xf32> -> vector<8x8xf32>
    %413 = arith.truncf %412 : vector<8x8xf32> to vector<8x8xbf16>
    %414 = vector.extract_strided_slice %269 {offsets = [8, 0], sizes = [8, 32], strides = [1, 1]} : vector<32x32xbf16> to vector<8x32xbf16>
    %cst_130 = arith.constant dense<0.000000e+00> : vector<8x32xf32>
    %415 = tpu.matmul %413, %414, %cst_130 {dimension_numbers = #tpu.dot_dimension_numbers<[1], [0], [0], [1], [0, 0, 1, 1], [], []>} : vector<8x8xbf16>, vector<8x32xbf16>, vector<8x32xf32> -> vector<8x32xf32>
    %416 = arith.addf %393, %415 : vector<8x32xf32>
    %417 = vector.extract_strided_slice %367 {offsets = [0, 16], sizes = [8, 8], strides = [1, 1]} : vector<8x32xbf16> to vector<8x8xbf16>
    %418 = vector.extract_strided_slice %368 {offsets = [0, 16], sizes = [8, 8], strides = [1, 1]} : vector<8x32xbf16> to vector<8x8xbf16>
    %cst_131 = arith.constant dense<0.000000e+00> : vector<8x8xf32>
    %419 = tpu.matmul %417, %418, %cst_131 {dimension_numbers = #tpu.dot_dimension_numbers<[1], [1], [0], [0], [0, 0, 1, 0], [], []>} : vector<8x8xbf16>, vector<8x8xbf16>, vector<8x8xf32> -> vector<8x8xf32>
    %cst_132 = arith.constant 0.353553385 : f32
    %420 = vector.broadcast %cst_132 : f32 to vector<8x8xf32>
    %421 = arith.mulf %419, %420 : vector<8x8xf32>
    %422 = arith.addf %421, %25 : vector<8x8xf32>
    %cst_133 = arith.constant dense<0xFF800000> : vector<8xf32>
    %423 = vector.multi_reduction <maximumf>, %422, %cst_133 [1] : vector<8x8xf32> to vector<8xf32>
    %424 = vector.shape_cast %423 : vector<8xf32> to vector<8x1xf32>
    %425 = vector.broadcast %424 : vector<8x1xf32> to vector<8x8xf32>
    %426 = arith.subf %422, %425 : vector<8x8xf32>
    %427 = math.exp %426 : vector<8x8xf32>
    %cst_134 = arith.constant dense<0.000000e+00> : vector<8xf32>
    %428 = vector.multi_reduction <add>, %427, %cst_134 [1] : vector<8x8xf32> to vector<8xf32>
    %429 = vector.shape_cast %428 : vector<8xf32> to vector<8x1xf32>
    %430 = tpu.reciprocal %429 {approx = true} : vector<8x1xf32> -> vector<8x1xf32>
    %431 = vector.broadcast %430 : vector<8x1xf32> to vector<8x8xf32>
    %432 = arith.mulf %427, %431 : vector<8x8xf32>
    %433 = arith.truncf %432 : vector<8x8xf32> to vector<8x8xbf16>
    %434 = vector.extract_strided_slice %369 {offsets = [0, 16], sizes = [8, 8], strides = [1, 1]} : vector<8x32xbf16> to vector<8x8xbf16>
    %cst_135 = arith.constant dense<0.000000e+00> : vector<8x8xf32>
    %435 = tpu.matmul %433, %434, %cst_135 {dimension_numbers = #tpu.dot_dimension_numbers<[1], [0], [0], [1], [0, 0, 1, 1], [], []>} : vector<8x8xbf16>, vector<8x8xbf16>, vector<8x8xf32> -> vector<8x8xf32>
    %436 = arith.truncf %435 : vector<8x8xf32> to vector<8x8xbf16>
    %437 = vector.extract_strided_slice %269 {offsets = [16, 0], sizes = [8, 32], strides = [1, 1]} : vector<32x32xbf16> to vector<8x32xbf16>
    %cst_136 = arith.constant dense<0.000000e+00> : vector<8x32xf32>
    %438 = tpu.matmul %436, %437, %cst_136 {dimension_numbers = #tpu.dot_dimension_numbers<[1], [0], [0], [1], [0, 0, 1, 1], [], []>} : vector<8x8xbf16>, vector<8x32xbf16>, vector<8x32xf32> -> vector<8x32xf32>
    %439 = arith.addf %416, %438 : vector<8x32xf32>
    %440 = vector.extract_strided_slice %367 {offsets = [0, 24], sizes = [8, 8], strides = [1, 1]} : vector<8x32xbf16> to vector<8x8xbf16>
    %441 = vector.extract_strided_slice %368 {offsets = [0, 24], sizes = [8, 8], strides = [1, 1]} : vector<8x32xbf16> to vector<8x8xbf16>
    %cst_137 = arith.constant dense<0.000000e+00> : vector<8x8xf32>
    %442 = tpu.matmul %440, %441, %cst_137 {dimension_numbers = #tpu.dot_dimension_numbers<[1], [1], [0], [0], [0, 0, 1, 0], [], []>} : vector<8x8xbf16>, vector<8x8xbf16>, vector<8x8xf32> -> vector<8x8xf32>
    %cst_138 = arith.constant 0.353553385 : f32
    %443 = vector.broadcast %cst_138 : f32 to vector<8x8xf32>
    %444 = arith.mulf %442, %443 : vector<8x8xf32>
    %445 = arith.addf %444, %25 : vector<8x8xf32>
    %cst_139 = arith.constant dense<0xFF800000> : vector<8xf32>
    %446 = vector.multi_reduction <maximumf>, %445, %cst_139 [1] : vector<8x8xf32> to vector<8xf32>
    %447 = vector.shape_cast %446 : vector<8xf32> to vector<8x1xf32>
    %448 = vector.broadcast %447 : vector<8x1xf32> to vector<8x8xf32>
    %449 = arith.subf %445, %448 : vector<8x8xf32>
    %450 = math.exp %449 : vector<8x8xf32>
    %cst_140 = arith.constant dense<0.000000e+00> : vector<8xf32>
    %451 = vector.multi_reduction <add>, %450, %cst_140 [1] : vector<8x8xf32> to vector<8xf32>
    %452 = vector.shape_cast %451 : vector<8xf32> to vector<8x1xf32>
    %453 = tpu.reciprocal %452 {approx = true} : vector<8x1xf32> -> vector<8x1xf32>
    %454 = vector.broadcast %453 : vector<8x1xf32> to vector<8x8xf32>
    %455 = arith.mulf %450, %454 : vector<8x8xf32>
    %456 = arith.truncf %455 : vector<8x8xf32> to vector<8x8xbf16>
    %457 = vector.extract_strided_slice %369 {offsets = [0, 24], sizes = [8, 8], strides = [1, 1]} : vector<8x32xbf16> to vector<8x8xbf16>
    %cst_141 = arith.constant dense<0.000000e+00> : vector<8x8xf32>
    %458 = tpu.matmul %456, %457, %cst_141 {dimension_numbers = #tpu.dot_dimension_numbers<[1], [0], [0], [1], [0, 0, 1, 1], [], []>} : vector<8x8xbf16>, vector<8x8xbf16>, vector<8x8xf32> -> vector<8x8xf32>
    %459 = arith.truncf %458 : vector<8x8xf32> to vector<8x8xbf16>
    %460 = vector.extract_strided_slice %269 {offsets = [24, 0], sizes = [8, 32], strides = [1, 1]} : vector<32x32xbf16> to vector<8x32xbf16>
    %cst_142 = arith.constant dense<0.000000e+00> : vector<8x32xf32>
    %461 = tpu.matmul %459, %460, %cst_142 {dimension_numbers = #tpu.dot_dimension_numbers<[1], [0], [0], [1], [0, 0, 1, 1], [], []>} : vector<8x8xbf16>, vector<8x32xbf16>, vector<8x32xf32> -> vector<8x32xf32>
    %462 = arith.addf %439, %461 : vector<8x32xf32>
    %c8_143 = arith.constant 8 : index
    %c0_144 = arith.constant 0 : index
    %463 = vector.load %arg18[%c8_143, %c0_144] : memref<16x32xf32, #tpu.memory_space<vmem>>, vector<8x32xf32>
    tpu.vector_store %arg18[%c8_143, %c0_144], %462 {strides = array<i32>} : memref<16x32xf32, #tpu.memory_space<vmem>>, vector<8x32xf32>,
    %c0_145 = arith.constant 0 : index
    %c0_146 = arith.constant 0 : index
    %464 = vector.load %arg18[%c0_145, %c0_146] : memref<16x32xf32, #tpu.memory_space<vmem>>, vector<16x32xf32>
    %465 = arith.addf %257, %464 : vector<16x32xf32>
    %cst_147 = arith.constant dense<0.000000e+00> : vector<16xf32>
    %466 = vector.multi_reduction <add>, %465, %cst_147 [1] : vector<16x32xf32> to vector<16xf32>
    %467 = vector.shape_cast %466 : vector<16xf32> to vector<16x1xf32>
    %cst_148 = arith.constant 3.200000e+01 : f32
    %468 = vector.broadcast %cst_148 : f32 to vector<16x1xf32>
    %469 = arith.divf %467, %468 : vector<16x1xf32>
    %470 = vector.broadcast %469 : vector<16x1xf32> to vector<16x32xf32>
    %471 = arith.subf %465, %470 : vector<16x32xf32>
    %472 = arith.mulf %471, %471 : vector<16x32xf32>
    %cst_149 = arith.constant dense<0.000000e+00> : vector<16xf32>
    %473 = vector.multi_reduction <add>, %472, %cst_149 [1] : vector<16x32xf32> to vector<16xf32>
    %474 = vector.shape_cast %473 : vector<16xf32> to vector<16x1xf32>
    %cst_150 = arith.constant 3.200000e+01 : f32
    %475 = vector.broadcast %cst_150 : f32 to vector<16x1xf32>
    %476 = arith.divf %474, %475 : vector<16x1xf32>
    %477 = vector.broadcast %469 : vector<16x1xf32> to vector<16x32xf32>
    %478 = arith.subf %465, %477 : vector<16x32xf32>
    %cst_151 = arith.constant 9.99999974E-6 : f32
    %479 = vector.broadcast %cst_151 : f32 to vector<16x1xf32>
    %480 = arith.addf %476, %479 : vector<16x1xf32>
    %481 = math.rsqrt %480 : vector<16x1xf32>
    %482 = vector.broadcast %481 : vector<16x1xf32> to vector<16x32xf32>
    %483 = arith.mulf %478, %482 : vector<16x32xf32>
    %484 = vector.extract_strided_slice %3 {offsets = [1, 0], sizes = [1, 32], strides = [1, 1]} : vector<3x32xf32> to vector<1x32xf32>
    %485 = vector.broadcast %484 : vector<1x32xf32> to vector<16x32xf32>
    %486 = arith.mulf %483, %485 : vector<16x32xf32>
    %487 = vector.extract_strided_slice %4 {offsets = [1, 0], sizes = [1, 32], strides = [1, 1]} : vector<3x32xf32> to vector<1x32xf32>
    %488 = vector.broadcast %487 : vector<1x32xf32> to vector<16x32xf32>
    %489 = arith.addf %486, %488 : vector<16x32xf32>
    %490 = arith.truncf %489 : vector<16x32xf32> to vector<16x32xbf16>
    %c0_152 = arith.constant 0 : index
    %c0_153 = arith.constant 0 : index
    %491 = vector.load %arg11[%c0_152, %c0_153] : memref<32x64xbf16, #tpu.memory_space<vmem>>, vector<32x64xbf16>
    %cst_154 = arith.constant dense<0.000000e+00> : vector<16x64xf32>
    %492 = tpu.matmul %490, %491, %cst_154 {dimension_numbers = #tpu.dot_dimension_numbers<[1], [0], [0], [1], [0, 0, 1, 1], [], []>} : vector<16x32xbf16>, vector<32x64xbf16>, vector<16x64xf32> -> vector<16x64xf32>
    %c0_155 = arith.constant 0 : index
    %c0_156 = arith.constant 0 : index
    %493 = vector.load %arg12[%c0_155, %c0_156] : memref<1x64xf32, #tpu.memory_space<vmem>>, vector<1x64xf32>
    %494 = vector.broadcast %493 : vector<1x64xf32> to vector<16x64xf32>
    %495 = arith.addf %492, %494 : vector<16x64xf32>
    %cst_157 = arith.constant 0.000000e+00 : f32
    %496 = vector.broadcast %cst_157 : f32 to vector<16x64xf32>
    %497 = arith.maximumf %495, %496 : vector<16x64xf32>
    %498 = arith.truncf %497 : vector<16x64xf32> to vector<16x64xbf16>
    %c0_158 = arith.constant 0 : index
    %c0_159 = arith.constant 0 : index
    %499 = vector.load %arg13[%c0_158, %c0_159] : memref<64x32xbf16, #tpu.memory_space<vmem>>, vector<64x32xbf16>
    %cst_160 = arith.constant dense<0.000000e+00> : vector<16x32xf32>
    %500 = tpu.matmul %498, %499, %cst_160 {dimension_numbers = #tpu.dot_dimension_numbers<[1], [0], [0], [1], [0, 0, 1, 1], [], []>} : vector<16x64xbf16>, vector<64x32xbf16>, vector<16x32xf32> -> vector<16x32xf32>
    %c0_161 = arith.constant 0 : index
    %c0_162 = arith.constant 0 : index
    %501 = vector.load %arg14[%c0_161, %c0_162] : memref<1x32xf32, #tpu.memory_space<vmem>>, vector<1x32xf32>
    %502 = vector.broadcast %501 : vector<1x32xf32> to vector<16x32xf32>
    %503 = arith.addf %500, %502 : vector<16x32xf32>
    %504 = arith.addf %489, %503 : vector<16x32xf32>
    %cst_163 = arith.constant dense<0.000000e+00> : vector<16xf32>
    %505 = vector.multi_reduction <add>, %504, %cst_163 [1] : vector<16x32xf32> to vector<16xf32>
    %506 = vector.shape_cast %505 : vector<16xf32> to vector<16x1xf32>
    %cst_164 = arith.constant 3.200000e+01 : f32
    %507 = vector.broadcast %cst_164 : f32 to vector<16x1xf32>
    %508 = arith.divf %506, %507 : vector<16x1xf32>
    %509 = vector.broadcast %508 : vector<16x1xf32> to vector<16x32xf32>
    %510 = arith.subf %504, %509 : vector<16x32xf32>
    %511 = arith.mulf %510, %510 : vector<16x32xf32>
    %cst_165 = arith.constant dense<0.000000e+00> : vector<16xf32>
    %512 = vector.multi_reduction <add>, %511, %cst_165 [1] : vector<16x32xf32> to vector<16xf32>
    %513 = vector.shape_cast %512 : vector<16xf32> to vector<16x1xf32>
    %cst_166 = arith.constant 3.200000e+01 : f32
    %514 = vector.broadcast %cst_166 : f32 to vector<16x1xf32>
    %515 = arith.divf %513, %514 : vector<16x1xf32>
    %516 = vector.broadcast %508 : vector<16x1xf32> to vector<16x32xf32>
    %517 = arith.subf %504, %516 : vector<16x32xf32>
    %cst_167 = arith.constant 9.99999974E-6 : f32
    %518 = vector.broadcast %cst_167 : f32 to vector<16x1xf32>
    %519 = arith.addf %515, %518 : vector<16x1xf32>
    %520 = math.rsqrt %519 : vector<16x1xf32>
    %521 = vector.broadcast %520 : vector<16x1xf32> to vector<16x32xf32>
    %522 = arith.mulf %517, %521 : vector<16x32xf32>
    %523 = vector.extract_strided_slice %3 {offsets = [2, 0], sizes = [1, 32], strides = [1, 1]} : vector<3x32xf32> to vector<1x32xf32>
    %524 = vector.broadcast %523 : vector<1x32xf32> to vector<16x32xf32>
    %525 = arith.mulf %522, %524 : vector<16x32xf32>
    %526 = vector.extract_strided_slice %4 {offsets = [2, 0], sizes = [1, 32], strides = [1, 1]} : vector<3x32xf32> to vector<1x32xf32>
    %527 = vector.broadcast %526 : vector<1x32xf32> to vector<16x32xf32>
    %528 = arith.addf %525, %527 : vector<16x32xf32>
    %c0_168 = arith.constant 0 : index
    %c0_169 = arith.constant 0 : index
    %529 = vector.load %arg17[%c0_168, %c0_169] : memref<16x32xf32, #tpu.memory_space<vmem>>, vector<16x32xf32>
    tpu.vector_store %arg17[%c0_168, %c0_169], %528 {strides = array<i32>} : memref<16x32xf32, #tpu.memory_space<vmem>>, vector<16x32xf32>,
    return
  }
  func.func @transform_0(%arg0: i32, %arg1: memref<2xi32, #tpu.memory_space<smem>>) -> (i32, i32) {
    %c0_i32 = arith.constant 0 : i32
    %c0_i32_0 = arith.constant 0 : i32
    %c0_i32_1 = arith.constant 0 : i32
    return %c0_i32, %c0_i32_0 : i32, i32
  }
  func.func @transform_1(%arg0: i32, %arg1: memref<2xi32, #tpu.memory_space<smem>>) -> (i32, i32) {
    %c0_i32 = arith.constant 0 : i32
    %c0_i32_0 = arith.constant 0 : i32
    %c0_i32_1 = arith.constant 0 : i32
    return %c0_i32, %c0_i32_0 : i32, i32
  }
  func.func @transform_2(%arg0: i32, %arg1: memref<2xi32, #tpu.memory_space<smem>>) -> (i32, i32) {
    %c0_i32 = arith.constant 0 : i32
    %c0_i32_0 = arith.constant 0 : i32
    %c0_i32_1 = arith.constant 0 : i32
    return %c0_i32, %c0_i32_0 : i32, i32
  }
  func.func @transform_3(%arg0: i32, %arg1: memref<2xi32, #tpu.memory_space<smem>>) -> (i32, i32) {
    %c0_i32 = arith.constant 0 : i32
    %c0_i32_0 = arith.constant 0 : i32
    %c0_i32_1 = arith.constant 0 : i32
    return %c0_i32, %c0_i32_0 : i32, i32
  }
  func.func @transform_4(%arg0: i32, %arg1: memref<2xi32, #tpu.memory_space<smem>>) -> (i32, i32) {
    %c0_i32 = arith.constant 0 : i32
    %c0_i32_0 = arith.constant 0 : i32
    %c0_i32_1 = arith.constant 0 : i32
    return %c0_i32, %c0_i32_0 : i32, i32
  }
  func.func @transform_5(%arg0: i32, %arg1: memref<2xi32, #tpu.memory_space<smem>>) -> (i32, i32) {
    %c0_i32 = arith.constant 0 : i32
    %c0_i32_0 = arith.constant 0 : i32
    %c0_i32_1 = arith.constant 0 : i32
    return %c0_i32, %c0_i32_0 : i32, i32
  }
  func.func @transform_6(%arg0: i32, %arg1: memref<2xi32, #tpu.memory_space<smem>>) -> (i32, i32) {
    %c0_i32 = arith.constant 0 : i32
    %c0_i32_0 = arith.constant 0 : i32
    %c0_i32_1 = arith.constant 0 : i32
    return %c0_i32, %c0_i32_0 : i32, i32
  }
  func.func @transform_7(%arg0: i32, %arg1: memref<2xi32, #tpu.memory_space<smem>>) -> (i32, i32) {
    %c0_i32 = arith.constant 0 : i32
    %c0_i32_0 = arith.constant 0 : i32
    %c0_i32_1 = arith.constant 0 : i32
    return %c0_i32, %c0_i32_0 : i32, i32
  }
  func.func @transform_8(%arg0: i32, %arg1: memref<2xi32, #tpu.memory_space<smem>>) -> (i32, i32) {
    %c0_i32 = arith.constant 0 : i32
    %c0_i32_0 = arith.constant 0 : i32
    %c0_i32_1 = arith.constant 0 : i32
    return %c0_i32, %c0_i32_0 : i32, i32
  }
  func.func @transform_9(%arg0: i32, %arg1: memref<2xi32, #tpu.memory_space<smem>>) -> (i32, i32) {
    %c0_i32 = arith.constant 0 : i32
    %c0_i32_0 = arith.constant 0 : i32
    %c0_i32_1 = arith.constant 0 : i32
    return %c0_i32, %c0_i32_0 : i32, i32
  }
  func.func @transform_10(%arg0: i32, %arg1: memref<2xi32, #tpu.memory_space<smem>>) -> (i32, i32) {
    %c0_i32 = arith.constant 0 : i32
    %c0_i32_0 = arith.constant 0 : i32
    %c0_i32_1 = arith.constant 0 : i32
    return %c0_i32, %c0_i32_0 : i32, i32
  }
  func.func @transform_11(%arg0: i32, %arg1: memref<2xi32, #tpu.memory_space<smem>>) -> (i32, i32) {
    %c0_i32 = arith.constant 0 : i32
    %c0_i32_0 = arith.constant 0 : i32
    %c0_i32_1 = arith.constant 0 : i32
    return %c0_i32, %c0_i32_0 : i32, i32
  }
  func.func @transform_12(%arg0: i32, %arg1: memref<2xi32, #tpu.memory_space<smem>>) -> (i32, i32) {
    %c0_i32 = arith.constant 0 : i32
    %c0_i32_0 = arith.constant 0 : i32
    %c0_i32_1 = arith.constant 0 : i32
    return %c0_i32, %c0_i32_0 : i32, i32
  }
  func.func @transform_13(%arg0: i32, %arg1: memref<2xi32, #tpu.memory_space<smem>>) -> (i32, i32) {
    %c0_i32 = arith.constant 0 : i32
    %c0_i32_0 = arith.constant 0 : i32
    %c0_i32_1 = arith.constant 0 : i32
    return %c0_i32, %c0_i32_0 : i32, i32
  }
  func.func @transform_14(%arg0: i32, %arg1: memref<2xi32, #tpu.memory_space<smem>>) -> (i32, i32) {
    %c0_i32 = arith.constant 0 : i32
    %c0_i32_0 = arith.constant 0 : i32
    %c0_i32_1 = arith.constant 0 : i32
    return %c0_i32, %c0_i32_0 : i32, i32
  }
  func.func @transform_15(%arg0: i32, %arg1: memref<2xi32, #tpu.memory_space<smem>>) -> (i32, i32) {
    %c0_i32 = arith.constant 0 : i32
    %c0_i32_0 = arith.constant 0 : i32
    %c0_i32_1 = arith.constant 0 : i32
    return %c0_i32, %c0_i32_0 : i32, i32
  }
}

</mosaic_0001>

<llo_original>
// kernel: tpu_custom_call.1
$region0: #{tpu_custom_call.1}
  #allocation0 [shape = 'u32[]', space=smem, size = 0x4, offset = 0x4, fixed_abs, tag = 'smem constant byte address 0x4 - core index']
  #allocation1 [shape = 'u32[144,128]{1,0:T(1,128)}', space=vmem, size = 0x12000, scoped, tag = 'internal scratch']
  #allocation2 [shape = 'f32[16,32]{1,0:T(8,128)}', space=vmem, size = 0x2000, scoped, tag = 'scratch operand']
  #allocation3 [shape = 's32[1]{0}', space=sflag, size = 0x4, scoped, tag = 'scoped memory for tpu_custom_call.1']
  #allocation4 [shape = 'u8[512]{0}', space=smem, size = 0x200, scoped, tag = 'prefetched SMEM operand 0']
  %s0 = inlined_call_operand.hbm [shape: s32[2], index: 0, kind: input, shape index: {}]
  %s1 = inlined_call_operand.vmem [shape: f32[16,32], index: 1, kind: input, shape index: {}]
  %s2 = inlined_call_operand.vmem [shape: f32[16,32], index: 2, kind: input, shape index: {}]
  %s3 = inlined_call_operand.vmem [shape: f32[16,32], index: 3, kind: input, shape index: {}]
  %s4 = inlined_call_operand.hbm [shape: bf16[32,32], index: 4, kind: input, shape index: {}]
  %s5 = inlined_call_operand.hbm [shape: bf16[32,64], index: 5, kind: input, shape index: {}]
  %s6 = inlined_call_operand.hbm [shape: bf16[32,32], index: 6, kind: input, shape index: {}]
  %s7 = inlined_call_operand.hbm [shape: bf16[32,32], index: 7, kind: input, shape index: {}]
  %s8 = inlined_call_operand.hbm [shape: bf16[32,64], index: 8, kind: input, shape index: {}]
  %s9 = inlined_call_operand.hbm [shape: bf16[32,32], index: 9, kind: input, shape index: {}]
  %s10 = inlined_call_operand.hbm [shape: bf16[32,64], index: 10, kind: input, shape index: {}]
  %s11 = inlined_call_operand.vmem [shape: f32[1,64], index: 11, kind: input, shape index: {}]
  %s12 = inlined_call_operand.vmem [shape: bf16[64,32], index: 12, kind: input, shape index: {}]
  %s13 = inlined_call_operand.hbm [shape: f32[1,32], index: 13, kind: input, shape index: {}]
  %s14 = inlined_call_operand.vmem [shape: f32[3,32], index: 14, kind: input, shape index: {}]
  %s15 = inlined_call_operand.vmem [shape: f32[3,32], index: 15, kind: input, shape index: {}]
  %s16 = inlined_call_operand.hbm [shape: f32[16,32], index: 16, kind: output, shape index: {}]
  %s17 = sld [smem:[#allocation0]]
  $region102: #{tpu_custom_call.1} parent=0
    _
  %s19 = ssub.s32 1, %s17
  %s20 = scalar_select 0, %s19, %s17
  %22 = dma.hbm_to_smem %s0, 16, [#allocation4], [#allocation3]
  %23 = dma.done [#allocation3], 16
  %24 = sfence
  $region1: #{tpu_custom_call.1} parent=0
    #allocation5 [shape = 'u8[8192]{0}', space=vmem, size = 0x2000, scoped, tag = 'input window, operand 4, single buffered']
    #allocation6 [shape = 's32[1]{0}', space=sflag, size = 0x4, scoped, tag = 'scoped memory for tpu_custom_call.1']
    #allocation7 [shape = 's32[1]{0}', space=sflag, size = 0x4, scoped, tag = 'scoped memory for tpu_custom_call.1']
    #allocation8 [shape = 'u8[8192]{0}', space=vmem, size = 0x2000, scoped, tag = 'input window, operand 5, single buffered']
    #allocation9 [shape = 's32[1]{0}', space=sflag, size = 0x4, scoped, tag = 'scoped memory for tpu_custom_call.1']
    #allocation10 [shape = 'u8[8192]{0}', space=vmem, size = 0x2000, scoped, tag = 'input window, operand 6, single buffered']
    #allocation11 [shape = 'u8[8192]{0}', space=vmem, size = 0x2000, scoped, tag = 'input window, operand 7, single buffered']
    #allocation12 [shape = 's32[1]{0}', space=sflag, size = 0x4, scoped, tag = 'scoped memory for tpu_custom_call.1']
    #allocation13 [shape = 'u8[8192]{0}', space=vmem, size = 0x2000, scoped, tag = 'input window, operand 8, single buffered']
    #allocation14 [shape = 'u8[8192]{0}', space=vmem, size = 0x2000, scoped, tag = 'input window, operand 9, single buffered']
    #allocation15 [shape = 's32[1]{0}', space=sflag, size = 0x4, scoped, tag = 'scoped memory for tpu_custom_call.1']
    #allocation16 [shape = 'u8[8192]{0}', space=vmem, size = 0x2000, scoped, tag = 'input window, operand 10, single buffered']
    #allocation17 [shape = 'u8[512]{0}', space=vmem, size = 0x400, scoped, tag = 'input window, operand 13, single buffered']
    #allocation18 [shape = 's32[1]{0}', space=sflag, size = 0x4, scoped, tag = 'scoped memory for tpu_custom_call.1']
    #allocation19 [shape = 'u8[8192]{0}', space=vmem, size = 0x2000, scoped, tag = 'output window, operand 0, single buffered']
    %25 = vsyncpa [#allocation6], 0
    %26 = vsyncpa [#allocation9], 0
    %27 = vsyncpa [#allocation12], 0
    %28 = vsyncpa [#allocation15], 0
    %29 = vsyncpa [#allocation18], 0
    %30 = vsyncpa [#allocation7], 0
    // Predicated region
    $region2: #{tpu_custom_call.1} parent=1 // pred_check
      _
    $region3: #{tpu_custom_call.1} parent=1 // pred_check_branch
      %32 = sbr.rel (0) target = $region5
    $region4: #{tpu_custom_call.1} parent=1 // pred_region
      _
    $region5: #{tpu_custom_call.1} parent=1 // pred_fallthru
      _
    // Predicated region
    $region6: #{tpu_custom_call.1} parent=1 // pred_check
      _
    $region7: #{tpu_custom_call.1} parent=1 // pred_check_branch
      %34 = sbr.rel (0) target = $region9
    $region8: #{tpu_custom_call.1} parent=1 // pred_region
      _
    $region9: #{tpu_custom_call.1} parent=1 // pred_fallthru
      _
    // Predicated region
    $region10: #{tpu_custom_call.1} parent=1 // pred_check
      _
    $region11: #{tpu_custom_call.1} parent=1 // pred_check_branch
      %36 = sbr.rel (0) target = $region13
    $region12: #{tpu_custom_call.1} parent=1 // pred_region
      _
    $region13: #{tpu_custom_call.1} parent=1 // pred_fallthru
      _
    // Predicated region
    $region14: #{tpu_custom_call.1} parent=1 // pred_check
      _
    $region15: #{tpu_custom_call.1} parent=1 // pred_check_branch
      %38 = sbr.rel (0) target = $region17
    $region16: #{tpu_custom_call.1} parent=1 // pred_region
      %s40 = ssub.s32 256, 256
      %41 = vsyncadd [#allocation6], %s40
      %s42 = sshll.u32 [#allocation5], 4
      %s43 = int_to_ptr.vmem [resolvable:$true] %s42
      %48 = dma.hbm_to_vmem [thread:$0]  %s4, 256, %s43, [#allocation6], 64, 64, 4
    $region17: #{tpu_custom_call.1} parent=1 // pred_fallthru
      _
    // Predicated region
    $region18: #{tpu_custom_call.1} parent=1 // pred_check
      _
    $region19: #{tpu_custom_call.1} parent=1 // pred_check_branch
      %50 = sbr.rel (0) target = $region21
    $region20: #{tpu_custom_call.1} parent=1 // pred_region
      %s52 = ssub.s32 256, 256
      %53 = vsyncadd [#allocation9], %s52
      %s54 = sshll.u32 [#allocation8], 4
      %s55 = int_to_ptr.vmem [resolvable:$true] %s54
      %60 = dma.hbm_to_vmem [thread:$0]  %s5, 256, %s55, [#allocation9], 64, 64, 4
    $region21: #{tpu_custom_call.1} parent=1 // pred_fallthru
      _
    // Predicated region
    $region22: #{tpu_custom_call.1} parent=1 // pred_check
      _
    $region23: #{tpu_custom_call.1} parent=1 // pred_check_branch
      %62 = sbr.rel (0) target = $region25
    $region24: #{tpu_custom_call.1} parent=1 // pred_region
      %s64 = ssub.s32 256, 256
      %65 = vsyncadd [#allocation9], %s64
      %s66 = sshll.u32 [#allocation10], 4
      %s67 = int_to_ptr.vmem [resolvable:$true] %s66
      %72 = dma.hbm_to_vmem [thread:$0]  %s6, 256, %s67, [#allocation9], 64, 64, 4
    $region25: #{tpu_custom_call.1} parent=1 // pred_fallthru
      _
    // Predicated region
    $region26: #{tpu_custom_call.1} parent=1 // pred_check
      _
    $region27: #{tpu_custom_call.1} parent=1 // pred_check_branch
      %74 = sbr.rel (0) target = $region29
    $region28: #{tpu_custom_call.1} parent=1 // pred_region
      %s76 = ssub.s32 256, 256
      %77 = vsyncadd [#allocation12], %s76
      %s78 = sshll.u32 [#allocation11], 4
      %s79 = int_to_ptr.vmem [resolvable:$true] %s78
      %84 = dma.hbm_to_vmem [thread:$0]  %s7, 256, %s79, [#allocation12], 64, 64, 4
    $region29: #{tpu_custom_call.1} parent=1 // pred_fallthru
      _
    // Predicated region
    $region30: #{tpu_custom_call.1} parent=1 // pred_check
      _
    $region31: #{tpu_custom_call.1} parent=1 // pred_check_branch
      %86 = sbr.rel (0) target = $region33
    $region32: #{tpu_custom_call.1} parent=1 // pred_region
      %s88 = ssub.s32 256, 256
      %89 = vsyncadd [#allocation12], %s88
      %s90 = sshll.u32 [#allocation13], 4
      %s91 = int_to_ptr.vmem [resolvable:$true] %s90
      %96 = dma.hbm_to_vmem [thread:$0]  %s8, 256, %s91, [#allocation12], 64, 64, 4
    $region33: #{tpu_custom_call.1} parent=1 // pred_fallthru
      _
    // Predicated region
    $region34: #{tpu_custom_call.1} parent=1 // pred_check
      _
    $region35: #{tpu_custom_call.1} parent=1 // pred_check_branch
      %98 = sbr.rel (0) target = $region37
    $region36: #{tpu_custom_call.1} parent=1 // pred_region
      %s100 = ssub.s32 256, 256
      %101 = vsyncadd [#allocation15], %s100
      %s102 = sshll.u32 [#allocation14], 4
      %s103 = int_to_ptr.vmem [resolvable:$true] %s102
      %108 = dma.hbm_to_vmem [thread:$0]  %s9, 256, %s103, [#allocation15], 64, 64, 4
    $region37: #{tpu_custom_call.1} parent=1 // pred_fallthru
      _
    // Predicated region
    $region38: #{tpu_custom_call.1} parent=1 // pred_check
      _
    $region39: #{tpu_custom_call.1} parent=1 // pred_check_branch
      %110 = sbr.rel (0) target = $region41
    $region40: #{tpu_custom_call.1} parent=1 // pred_region
      %s112 = ssub.s32 256, 256
      %113 = vsyncadd [#allocation15], %s112
      %s114 = sshll.u32 [#allocation16], 4
      %s115 = int_to_ptr.vmem [resolvable:$true] %s114
      %120 = dma.hbm_to_vmem [thread:$0]  %s10, 256, %s115, [#allocation15], 64, 64, 4
    $region41: #{tpu_custom_call.1} parent=1 // pred_fallthru
      _
    // Predicated region
    $region42: #{tpu_custom_call.1} parent=1 // pred_check
      _
    $region43: #{tpu_custom_call.1} parent=1 // pred_check_branch
      %122 = sbr.rel (0) target = $region45
    $region44: #{tpu_custom_call.1} parent=1 // pred_region
      _
    $region45: #{tpu_custom_call.1} parent=1 // pred_fallthru
      _
    // Predicated region
    $region46: #{tpu_custom_call.1} parent=1 // pred_check
      _
    $region47: #{tpu_custom_call.1} parent=1 // pred_check_branch
      %124 = sbr.rel (0) target = $region49
    $region48: #{tpu_custom_call.1} parent=1 // pred_region
      _
    $region49: #{tpu_custom_call.1} parent=1 // pred_fallthru
      _
    // Predicated region
    $region50: #{tpu_custom_call.1} parent=1 // pred_check
      _
    $region51: #{tpu_custom_call.1} parent=1 // pred_check_branch
      %126 = sbr.rel (0) target = $region53
    $region52: #{tpu_custom_call.1} parent=1 // pred_region
      %s128 = ssub.s32 16, 16
      %129 = vsyncadd [#allocation18], %s128
      %s131 = sshll.u32 [#allocation17], 4
      %s132 = int_to_ptr.vmem [resolvable:$true] %s131
      %134 = dma.hbm_to_vmem [thread:$0]  %s13, 16, %s132, [#allocation18]
    $region53: #{tpu_custom_call.1} parent=1 // pred_fallthru
      _
    // Predicated region
    $region54: #{tpu_custom_call.1} parent=1 // pred_check
      _
    $region55: #{tpu_custom_call.1} parent=1 // pred_check_branch
      %136 = sbr.rel (0) target = $region57
    $region56: #{tpu_custom_call.1} parent=1 // pred_region
      _
    $region57: #{tpu_custom_call.1} parent=1 // pred_fallthru
      _
    // Predicated region
    $region58: #{tpu_custom_call.1} parent=1 // pred_check
      _
    $region59: #{tpu_custom_call.1} parent=1 // pred_check_branch
      %138 = sbr.rel (0) target = $region61
    $region60: #{tpu_custom_call.1} parent=1 // pred_region
      _
    $region61: #{tpu_custom_call.1} parent=1 // pred_fallthru
      _
    // Predicated region
    $region62: #{tpu_custom_call.1} parent=1 // pred_check
      _
    $region63: #{tpu_custom_call.1} parent=1 // pred_check_branch
      %140 = sbr.rel (0) target = $region65
    $region64: #{tpu_custom_call.1} parent=1 // pred_region
      %141 = dma.done [#allocation6], 256
    $region65: #{tpu_custom_call.1} parent=1 // pred_fallthru
      _
    // Predicated region
    $region66: #{tpu_custom_call.1} parent=1 // pred_check
      _
    $region67: #{tpu_custom_call.1} parent=1 // pred_check_branch
      %143 = sbr.rel (0) target = $region69
    $region68: #{tpu_custom_call.1} parent=1 // pred_region
      %144 = dma.done [#allocation9], 256
    $region69: #{tpu_custom_call.1} parent=1 // pred_fallthru
      _
    // Predicated region
    $region70: #{tpu_custom_call.1} parent=1 // pred_check
      _
    $region71: #{tpu_custom_call.1} parent=1 // pred_check_branch
      %146 = sbr.rel (0) target = $region73
    $region72: #{tpu_custom_call.1} parent=1 // pred_region
      %147 = dma.done [#allocation9], 256
    $region73: #{tpu_custom_call.1} parent=1 // pred_fallthru
      _
    // Predicated region
    $region74: #{tpu_custom_call.1} parent=1 // pred_check
      _
    $region75: #{tpu_custom_call.1} parent=1 // pred_check_branch
      %149 = sbr.rel (0) target = $region77
    $region76: #{tpu_custom_call.1} parent=1 // pred_region
      %150 = dma.done [#allocation12], 256
    $region77: #{tpu_custom_call.1} parent=1 // pred_fallthru
      _
    // Predicated region
    $region78: #{tpu_custom_call.1} parent=1 // pred_check
      _
    $region79: #{tpu_custom_call.1} parent=1 // pred_check_branch
      %152 = sbr.rel (0) target = $region81
    $region80: #{tpu_custom_call.1} parent=1 // pred_region
      %153 = dma.done [#allocation12], 256
    $region81: #{tpu_custom_call.1} parent=1 // pred_fallthru
      _
    // Predicated region
    $region82: #{tpu_custom_call.1} parent=1 // pred_check
      _
    $region83: #{tpu_custom_call.1} parent=1 // pred_check_branch
      %155 = sbr.rel (0) target = $region85
    $region84: #{tpu_custom_call.1} parent=1 // pred_region
      %156 = dma.done [#allocation15], 256
    $region85: #{tpu_custom_call.1} parent=1 // pred_fallthru
      _
    // Predicated region
    $region86: #{tpu_custom_call.1} parent=1 // pred_check
      _
    $region87: #{tpu_custom_call.1} parent=1 // pred_check_branch
      %158 = sbr.rel (0) target = $region89
    $region88: #{tpu_custom_call.1} parent=1 // pred_region
      %159 = dma.done [#allocation15], 256
    $region89: #{tpu_custom_call.1} parent=1 // pred_fallthru
      _
    // Predicated region
    $region90: #{tpu_custom_call.1} parent=1 // pred_check
      _
    $region91: #{tpu_custom_call.1} parent=1 // pred_check_branch
      %161 = sbr.rel (0) target = $region93
    $region92: #{tpu_custom_call.1} parent=1 // pred_region
      %162 = dma.done [#allocation18], 16
    $region93: #{tpu_custom_call.1} parent=1 // pred_fallthru
      _
    %v164 = vld [vmem:[%s1] sm:$0xff]
    %v165 = vld [vmem:[%s1 + $0x8] sm:$0xff]
    %v166 = vld [vmem:[%s2] sm:$0xff]
    %v167 = vld [vmem:[%s2 + $0x8] sm:$0xff]
    %v168 = vld [vmem:[%s3] sm:$0xff]
    %v169 = vld [vmem:[%s3 + $0x8] sm:$0xff]
    %v170 = vld [vmem:[%s14] sm:$0x7]
    %v171 = vld [vmem:[%s15] sm:$0x7]
    %v172 = vlaneseq
    %v173 = vshrl.u32 %v172, 7
    %v174 = vlaneseq
    %v175 = vand.u32 %v174, 127
    %vm176 = vcmp.le.s32.totalorder %v175, %v173
    %v177 = vsel %vm176, 0.0, -1000000.0
    %s178 = sld [smem:[#allocation4]]
    %v179 = vstv %s178
    %vm180 = vcmp.lt.s32.totalorder %v175, %v179
    %v181 = vsel %vm180, 0.0, -1000000.0
    %s182 = sld [smem:[#allocation4 + $0x1]]
    %v183 = vstv %s182
    %vm184 = vcmp.lt.s32.totalorder %v175, %v183
    %v185 = vsel %vm184, 0.0, -1000000.0
    %v186 = vpack.c.bf16 %v165, %v164
    %v187 = vld [vmem:[#allocation5] sm:$0xf]
    %v188 = vld [vmem:[#allocation5 + $0x4] sm:$0xf]
    %v189 = vld [vmem:[#allocation5 + $0x8] sm:$0xf]
    %v190 = vld [vmem:[#allocation5 + $0xc] sm:$0xf]
    %v195 = vunpack.c.l.b16 %v187
    %v196 = vunpack.c.l.b16 %v188
    %v197 = vunpack.c.l.b16 %v189
    %v198 = vunpack.c.l.b16 %v190
    %v199 = vpack.c.b16 %v196, %v195
    %v200 = vpack.c.b16 %v198, %v197
    %vm203 = vcmask 261120
    %v205 = vsel %vm203, %v186, 0
    %207 = vmatprep.subr.bf16.mxu0 0
    %208 = vmatpush1.bf16.msra.mxu0 0
    %209 = vmatprep.subr.bf16.mxu0 0
    %210 = vmatpush1.bf16.msra.mxu0 0
    %211 = vmatprep.subr.bf16.mxu0 0
    %212 = vmatpush1.bf16.msra.mxu0 0
    %213 = vmatprep.subr.bf16.mxu0 0
    %214 = vmatpush1.bf16.msra.mxu0 0
    %215 = vmatprep.subr.bf16.mxu0 0
    %216 = vmatpush1.bf16.msra.mxu0 0
    %217 = vmatprep.subr.bf16.mxu0 0
    %218 = vmatpush1.bf16.msra.mxu0 0
    %219 = vmatprep.subr.bf16.mxu0 0
    %220 = vmatpush1.bf16.msra.mxu0 %v200
    %221 = vmatprep.subr.bf16.mxu0 0
    %222 = vmatpush1.bf16.msra.mxu0 %v199
    %223 = vmatprep.subr.bf16.mxu0 0
    %224 = vmatpush2.bf16.msra.mxu0 0
    %225 = vmatprep.subr.bf16.mxu0 0
    %226 = vmatpush2.bf16.msra.mxu0 0
    %227 = vmatprep.subr.bf16.mxu0 0
    %228 = vmatpush2.bf16.msra.mxu0 0
    %229 = vmatprep.subr.bf16.mxu0 0
    %230 = vmatpush2.bf16.msra.mxu0 0
    %231 = vmatprep.subr.bf16.mxu0 0
    %232 = vmatpush2.bf16.msra.mxu0 0
    %233 = vmatprep.subr.bf16.mxu0 0
    %234 = vmatpush2.bf16.msra.mxu0 0
    %235 = vmatprep.subr.bf16.mxu0 0
    %236 = vmatpush2.bf16.msra.mxu0 0
    %237 = vmatprep.subr.bf16.mxu0 0
    %238 = vmatpush2.bf16.msra.mxu0 0
    %239 = vmatprep.mubr.bf16.mxu0 0
    %240 = vmatmul.mubr.bf16.gmra.mxu0 %v205
    %v241 = vpop.f32.mrf.mxu0
    %v242 = vadd.f32 0.0, %v241
    %v243 = vpop.f32.mrf.mxu0
    %v244 = vpop.f32.mrf.mxu0
    %v245 = vadd.f32 0.0, %v244
    %v246 = vpop.f32.mrf.mxu0
    %247 = vdwg.mxu0
    %v248 = vpack.c.bf16 %v167, %v166
    %v249 = vld [vmem:[#allocation8] sm:$0xf]
    %v250 = vld [vmem:[#allocation8 + $0x4] sm:$0xf]
    %v251 = vld [vmem:[#allocation8 + $0x8] sm:$0xf]
    %v252 = vld [vmem:[#allocation8 + $0xc] sm:$0xf]
    %v257 = vunpack.c.l.b16 %v249
    %v258 = vunpack.c.l.b16 %v250
    %v259 = vunpack.c.l.b16 %v251
    %v260 = vunpack.c.l.b16 %v252
    %v261 = vpack.c.b16 %v258, %v257
    %v262 = vpack.c.b16 %v260, %v259
    %v266 = vsel %vm203, %v248, 0
    %268 = vmatprep.subr.bf16.mxu0 0
    %269 = vmatpush1.bf16.msra.mxu0 0
    %270 = vmatprep.subr.bf16.mxu0 0
    %271 = vmatpush1.bf16.msra.mxu0 0
    %272 = vmatprep.subr.bf16.mxu0 0
    %273 = vmatpush1.bf16.msra.mxu0 0
    %274 = vmatprep.subr.bf16.mxu0 0
    %275 = vmatpush1.bf16.msra.mxu0 0
    %276 = vmatprep.subr.bf16.mxu0 0
    %277 = vmatpush1.bf16.msra.mxu0 0
    %278 = vmatprep.subr.bf16.mxu0 0
    %279 = vmatpush1.bf16.msra.mxu0 0
    %280 = vmatprep.subr.bf16.mxu0 0
    %281 = vmatpush1.bf16.msra.mxu0 %v262
    %282 = vmatprep.subr.bf16.mxu0 0
    %283 = vmatpush1.bf16.msra.mxu0 %v261
    %284 = vmatprep.subr.bf16.mxu0 0
    %285 = vmatpush2.bf16.msra.mxu0 0
    %286 = vmatprep.subr.bf16.mxu0 0
    %287 = vmatpush2.bf16.msra.mxu0 0
    %288 = vmatprep.subr.bf16.mxu0 0
    %289 = vmatpush2.bf16.msra.mxu0 0
    %290 = vmatprep.subr.bf16.mxu0 0
    %291 = vmatpush2.bf16.msra.mxu0 0
    %292 = vmatprep.subr.bf16.mxu0 0
    %293 = vmatpush2.bf16.msra.mxu0 0
    %294 = vmatprep.subr.bf16.mxu0 0
    %295 = vmatpush2.bf16.msra.mxu0 0
    %296 = vmatprep.subr.bf16.mxu0 0
    %297 = vmatpush2.bf16.msra.mxu0 0
    %298 = vmatprep.subr.bf16.mxu0 0
    %299 = vmatpush2.bf16.msra.mxu0 0
    %300 = vmatprep.mubr.bf16.mxu0 0
    %301 = vmatmul.mubr.bf16.gmra.mxu0 %v266
    %v302 = vpop.f32.mrf.mxu0
    %v303 = vadd.f32 0.0, %v302
    %v304 = vpop.f32.mrf.mxu0
    %v305 = vpop.f32.mrf.mxu0
    %v306 = vadd.f32 0.0, %v305
    %v307 = vpop.f32.mrf.mxu0
    %308 = vdwg.mxu0
    %v309 = vpack.c.bf16 %v245, %v242
    %v310 = vpack.c.bf16 %v306, %v303
    %v311 = vld [vmem:[#allocation10] sm:$0xf]
    %v312 = vld [vmem:[#allocation10 + $0x4] sm:$0xf]
    %v313 = vld [vmem:[#allocation10 + $0x8] sm:$0xf]
    %v314 = vld [vmem:[#allocation10 + $0xc] sm:$0xf]
    %vm315 = vcmask 64512
    %v317 = vsel %vm315, %v309, 0
    %v320 = vsel %vm315, %v310, 0
    %322 = vmatprep.subr.bf16.mxu0 0
    %323 = vmatpush1.bf16.xpose.msra.mxu0 0
    %324 = vmatprep.subr.bf16.mxu0 0
    %325 = vmatpush1.bf16.xpose.msra.mxu0 0
    %326 = vmatprep.subr.bf16.mxu0 0
    %327 = vmatpush1.bf16.xpose.msra.mxu0 0
    %328 = vmatprep.subr.bf16.mxu0 0
    %329 = vmatpush1.bf16.xpose.msra.mxu0 0
    %330 = vmatprep.subr.bf16.mxu0 0
    %331 = vmatpush1.bf16.xpose.msra.mxu0 0
    %332 = vmatprep.subr.bf16.mxu0 0
    %333 = vmatpush1.bf16.xpose.msra.mxu0 0
    %334 = vmatprep.subr.bf16.mxu0 0
    %335 = vmatpush1.bf16.xpose.msra.mxu0 0
    %336 = vmatprep.subr.bf16.mxu0 0
    %337 = vmatpush1.bf16.xpose.msra.mxu0 %v320
    %338 = vmatprep.subr.bf16.mxu0 0
    %339 = vmatpush2.bf16.xpose.msra.mxu0 0
    %340 = vmatprep.subr.bf16.mxu0 0
    %341 = vmatpush2.bf16.xpose.msra.mxu0 0
    %342 = vmatprep.subr.bf16.mxu0 0
    %343 = vmatpush2.bf16.xpose.msra.mxu0 0
    %344 = vmatprep.subr.bf16.mxu0 0
    %345 = vmatpush2.bf16.xpose.msra.mxu0 0
    %346 = vmatprep.subr.bf16.mxu0 0
    %347 = vmatpush2.bf16.xpose.msra.mxu0 0
    %348 = vmatprep.subr.bf16.mxu0 0
    %349 = vmatpush2.bf16.xpose.msra.mxu0 0
    %350 = vmatprep.subr.bf16.mxu0 0
    %351 = vmatpush2.bf16.xpose.msra.mxu0 0
    %352 = vmatprep.subr.bf16.mxu0 0
    %353 = vmatpush2.bf16.xpose.msra.mxu0 0
    %354 = vmatprep.mubr.bf16.mxu0 0
    %355 = vmatmul.mubr.bf16.gmra.mxu0 %v317
    %v356 = vpop.f32.mrf.mxu0
    %v357 = vadd.f32 0.0, %v356
    %v358 = vpop.f32.mrf.mxu0
    %v359 = vpop.f32.mrf.mxu0
    %v360 = vpop.f32.mrf.mxu0
    %361 = vdwg.mxu0
    %v362 = vmul.f32 %v357, 0.35355338
    %v363 = vadd.f32 %v362, %v177
    %v364 = vsel %vm315, %v363, -inf
    %365 = vmax.xlane.f32.xlu0 %v364
    %v366 = vpop.xlane.xlu0 %365
    %v367 = vsub.f32 %v363, %v366
    %v368 = vmul.f32 %v367, 1.442695
    %v369 = vpow.pop %v368
    %v370 = vsel %vm315, %v369, 0.0
    %371 = vadd.xlane.f32.xlu0 %v370
    %v372 = vpop.xlane.xlu0 %371
    %v373 = vrcp.pop %v372
    %v374 = vmul.f32 %v369, %v373
    %v375 = vpack.c.bf16 %v374, %v374
    %377 = vrot.lane.b32.xlu0 %v310, 96
    %v378 = vpop.permute.xlu0 %377
    %v380 = vsel %vm315, %v375, 0
    %vm382 = vcmask 1043456
    %v384 = vsel %vm382, %v378, 0
    %386 = vmatprep.subr.bf16.mxu0 0
    %387 = vmatpush1.bf16.msra.mxu0 0
    %388 = vmatprep.subr.bf16.mxu0 0
    %389 = vmatpush1.bf16.msra.mxu0 0
    %390 = vmatprep.subr.bf16.mxu0 0
    %391 = vmatpush1.bf16.msra.mxu0 0
    %392 = vmatprep.subr.bf16.mxu0 0
    %393 = vmatpush1.bf16.msra.mxu0 0
    %394 = vmatprep.subr.bf16.mxu0 0
    %395 = vmatpush1.bf16.msra.mxu0 0
    %396 = vmatprep.subr.bf16.mxu0 0
    %397 = vmatpush1.bf16.msra.mxu0 0
    %398 = vmatprep.subr.bf16.mxu0 0
    %399 = vmatpush1.bf16.msra.mxu0 0
    %400 = vmatprep.subr.bf16.mxu0 0
    %401 = vmatpush1.bf16.msra.mxu0 %v384
    %402 = vmatprep.subr.bf16.mxu0 0
    %403 = vmatpush2.bf16.msra.mxu0 0
    %404 = vmatprep.subr.bf16.mxu0 0
    %405 = vmatpush2.bf16.msra.mxu0 0
    %406 = vmatprep.subr.bf16.mxu0 0
    %407 = vmatpush2.bf16.msra.mxu0 0
    %408 = vmatprep.subr.bf16.mxu0 0
    %409 = vmatpush2.bf16.msra.mxu0 0
    %410 = vmatprep.subr.bf16.mxu0 0
    %411 = vmatpush2.bf16.msra.mxu0 0
    %412 = vmatprep.subr.bf16.mxu0 0
    %413 = vmatpush2.bf16.msra.mxu0 0
    %414 = vmatprep.subr.bf16.mxu0 0
    %415 = vmatpush2.bf16.msra.mxu0 0
    %416 = vmatprep.subr.bf16.mxu0 0
    %417 = vmatpush2.bf16.msra.mxu0 0
    %418 = vmatprep.mubr.bf16.mxu0 0
    %419 = vmatmul.mubr.bf16.gmra.mxu0 %v380
    %v420 = vpop.f32.mrf.mxu0
    %v421 = vadd.f32 0.0, %v420
    %v422 = vpop.f32.mrf.mxu0
    %v423 = vpop.f32.mrf.mxu0
    %v424 = vpop.f32.mrf.mxu0
    %425 = vdwg.mxu0
    %v426 = vpack.c.bf16 %v421, %v421
    %428 = vrot.lane.b32.xlu0 %v309, 120
    %v429 = vpop.permute.xlu0 %428
    %430 = vrot.lane.b32.xlu0 %v310, 120
    %v431 = vpop.permute.xlu0 %430
    %v433 = vsel %vm315, %v429, 0
    %v436 = vsel %vm315, %v431, 0
    %438 = vmatprep.subr.bf16.mxu0 0
    %439 = vmatpush1.bf16.xpose.msra.mxu0 0
    %440 = vmatprep.subr.bf16.mxu0 0
    %441 = vmatpush1.bf16.xpose.msra.mxu0 0
    %442 = vmatprep.subr.bf16.mxu0 0
    %443 = vmatpush1.bf16.xpose.msra.mxu0 0
    %444 = vmatprep.subr.bf16.mxu0 0
    %445 = vmatpush1.bf16.xpose.msra.mxu0 0
    %446 = vmatprep.subr.bf16.mxu0 0
    %447 = vmatpush1.bf16.xpose.msra.mxu0 0
    %448 = vmatprep.subr.bf16.mxu0 0
    %449 = vmatpush1.bf16.xpose.msra.mxu0 0
    %450 = vmatprep.subr.bf16.mxu0 0
    %451 = vmatpush1.bf16.xpose.msra.mxu0 0
    %452 = vmatprep.subr.bf16.mxu0 0
    %453 = vmatpush1.bf16.xpose.msra.mxu0 %v436
    %454 = vmatprep.subr.bf16.mxu0 0
    %455 = vmatpush2.bf16.xpose.msra.mxu0 0
    %456 = vmatprep.subr.bf16.mxu0 0
    %457 = vmatpush2.bf16.xpose.msra.mxu0 0
    %458 = vmatprep.subr.bf16.mxu0 0
    %459 = vmatpush2.bf16.xpose.msra.mxu0 0
    %460 = vmatprep.subr.bf16.mxu0 0
    %461 = vmatpush2.bf16.xpose.msra.mxu0 0
    %462 = vmatprep.subr.bf16.mxu0 0
    %463 = vmatpush2.bf16.xpose.msra.mxu0 0
    %464 = vmatprep.subr.bf16.mxu0 0
    %465 = vmatpush2.bf16.xpose.msra.mxu0 0
    %466 = vmatprep.subr.bf16.mxu0 0
    %467 = vmatpush2.bf16.xpose.msra.mxu0 0
    %468 = vmatprep.subr.bf16.mxu0 0
    %469 = vmatpush2.bf16.xpose.msra.mxu0 0
    %470 = vmatprep.mubr.bf16.mxu0 0
    %471 = vmatmul.mubr.bf16.gmra.mxu0 %v433
    %v472 = vpop.f32.mrf.mxu0
    %v473 = vadd.f32 0.0, %v472
    %v474 = vpop.f32.mrf.mxu0
    %v475 = vpop.f32.mrf.mxu0
    %v476 = vpop.f32.mrf.mxu0
    %477 = vdwg.mxu0
    %v478 = vmul.f32 %v473, 0.35355338
    %v479 = vadd.f32 %v478, %v177
    %v480 = vsel %vm315, %v479, -inf
    %481 = vmax.xlane.f32.xlu0 %v480
    %v482 = vpop.xlane.xlu0 %481
    %v483 = vsub.f32 %v479, %v482
    %v484 = vmul.f32 %v483, 1.442695
    %v485 = vpow.pop %v484
    %v486 = vsel %vm315, %v485, 0.0
    %487 = vadd.xlane.f32.xlu0 %v486
    %v488 = vpop.xlane.xlu0 %487
    %v489 = vrcp.pop %v488
    %v490 = vmul.f32 %v485, %v489
    %v491 = vpack.c.bf16 %v490, %v490
    %492 = vrot.lane.b32.xlu0 %v310, 88
    %v493 = vpop.permute.xlu0 %492
    %v495 = vsel %vm315, %v491, 0
    %v498 = vsel %vm382, %v493, 0
    %500 = vmatprep.subr.bf16.mxu0 0
    %501 = vmatpush1.bf16.msra.mxu0 0
    %502 = vmatprep.subr.bf16.mxu0 0
    %503 = vmatpush1.bf16.msra.mxu0 0
    %504 = vmatprep.subr.bf16.mxu0 0
    %505 = vmatpush1.bf16.msra.mxu0 0
    %506 = vmatprep.subr.bf16.mxu0 0
    %507 = vmatpush1.bf16.msra.mxu0 0
    %508 = vmatprep.subr.bf16.mxu0 0
    %509 = vmatpush1.bf16.msra.mxu0 0
    %510 = vmatprep.subr.bf16.mxu0 0
    %511 = vmatpush1.bf16.msra.mxu0 0
    %512 = vmatprep.subr.bf16.mxu0 0
    %513 = vmatpush1.bf16.msra.mxu0 0
    %514 = vmatprep.subr.bf16.mxu0 0
    %515 = vmatpush1.bf16.msra.mxu0 %v498
    %516 = vmatprep.subr.bf16.mxu0 0
    %517 = vmatpush2.bf16.msra.mxu0 0
    %518 = vmatprep.subr.bf16.mxu0 0
    %519 = vmatpush2.bf16.msra.mxu0 0
    %520 = vmatprep.subr.bf16.mxu0 0
    %521 = vmatpush2.bf16.msra.mxu0 0
    %522 = vmatprep.subr.bf16.mxu0 0
    %523 = vmatpush2.bf16.msra.mxu0 0
    %524 = vmatprep.subr.bf16.mxu0 0
    %525 = vmatpush2.bf16.msra.mxu0 0
    %526 = vmatprep.subr.bf16.mxu0 0
    %527 = vmatpush2.bf16.msra.mxu0 0
    %528 = vmatprep.subr.bf16.mxu0 0
    %529 = vmatpush2.bf16.msra.mxu0 0
    %530 = vmatprep.subr.bf16.mxu0 0
    %531 = vmatpush2.bf16.msra.mxu0 0
    %532 = vmatprep.mubr.bf16.mxu0 0
    %533 = vmatmul.mubr.bf16.gmra.mxu0 %v495
    %v534 = vpop.f32.mrf.mxu0
    %v535 = vadd.f32 0.0, %v534
    %v536 = vpop.f32.mrf.mxu0
    %v537 = vpop.f32.mrf.mxu0
    %v538 = vpop.f32.mrf.mxu0
    %539 = vdwg.mxu0
    %v540 = vpack.c.bf16 %v535, %v535
    %v542 = vsel %vm315, %v540, 0
    %v545 = vsel %vm382, %v312, 0
    %547 = vmatprep.subr.bf16.mxu0 0
    %548 = vmatpush1.bf16.msra.mxu0 0
    %549 = vmatprep.subr.bf16.mxu0 0
    %550 = vmatpush1.bf16.msra.mxu0 0
    %551 = vmatprep.subr.bf16.mxu0 0
    %552 = vmatpush1.bf16.msra.mxu0 0
    %553 = vmatprep.subr.bf16.mxu0 0
    %554 = vmatpush1.bf16.msra.mxu0 0
    %555 = vmatprep.subr.bf16.mxu0 0
    %556 = vmatpush1.bf16.msra.mxu0 0
    %557 = vmatprep.subr.bf16.mxu0 0
    %558 = vmatpush1.bf16.msra.mxu0 0
    %559 = vmatprep.subr.bf16.mxu0 0
    %560 = vmatpush1.bf16.msra.mxu0 0
    %561 = vmatprep.subr.bf16.mxu0 0
    %562 = vmatpush1.bf16.msra.mxu0 %v545
    %563 = vmatprep.subr.bf16.mxu0 0
    %564 = vmatpush2.bf16.msra.mxu0 0
    %565 = vmatprep.subr.bf16.mxu0 0
    %566 = vmatpush2.bf16.msra.mxu0 0
    %567 = vmatprep.subr.bf16.mxu0 0
    %568 = vmatpush2.bf16.msra.mxu0 0
    %569 = vmatprep.subr.bf16.mxu0 0
    %570 = vmatpush2.bf16.msra.mxu0 0
    %571 = vmatprep.subr.bf16.mxu0 0
    %572 = vmatpush2.bf16.msra.mxu0 0
    %573 = vmatprep.subr.bf16.mxu0 0
    %574 = vmatpush2.bf16.msra.mxu0 0
    %575 = vmatprep.subr.bf16.mxu0 0
    %576 = vmatpush2.bf16.msra.mxu0 0
    %577 = vmatprep.subr.bf16.mxu0 0
    %578 = vmatpush2.bf16.msra.mxu0 0
    %579 = vmatprep.mubr.bf16.mxu0 0
    %580 = vmatmul.mubr.bf16.gmra.mxu0 %v542
    %v581 = vpop.f32.mrf.mxu0
    %v582 = vadd.f32 0.0, %v581
    %v583 = vpop.f32.mrf.mxu0
    %v584 = vpop.f32.mrf.mxu0
    %v585 = vpop.f32.mrf.mxu0
    %586 = vdwg.mxu0
    %v588 = vsel %vm315, %v426, 0
    %v591 = vsel %vm382, %v311, 0
    %593 = vmatprep.subr.bf16.mxu0 0
    %594 = vmatpush1.bf16.msra.mxu0 0
    %595 = vmatprep.subr.bf16.mxu0 0
    %596 = vmatpush1.bf16.msra.mxu0 0
    %597 = vmatprep.subr.bf16.mxu0 0
    %598 = vmatpush1.bf16.msra.mxu0 0
    %599 = vmatprep.subr.bf16.mxu0 0
    %600 = vmatpush1.bf16.msra.mxu0 0
    %601 = vmatprep.subr.bf16.mxu0 0
    %602 = vmatpush1.bf16.msra.mxu0 0
    %603 = vmatprep.subr.bf16.mxu0 0
    %604 = vmatpush1.bf16.msra.mxu0 0
    %605 = vmatprep.subr.bf16.mxu0 0
    %606 = vmatpush1.bf16.msra.mxu0 0
    %607 = vmatprep.subr.bf16.mxu0 0
    %608 = vmatpush1.bf16.msra.mxu0 %v591
    %609 = vmatprep.subr.bf16.mxu0 0
    %610 = vmatpush2.bf16.msra.mxu0 0
    %611 = vmatprep.subr.bf16.mxu0 0
    %612 = vmatpush2.bf16.msra.mxu0 0
    %613 = vmatprep.subr.bf16.mxu0 0
    %614 = vmatpush2.bf16.msra.mxu0 0
    %615 = vmatprep.subr.bf16.mxu0 0
    %616 = vmatpush2.bf16.msra.mxu0 0
    %617 = vmatprep.subr.bf16.mxu0 0
    %618 = vmatpush2.bf16.msra.mxu0 0
    %619 = vmatprep.subr.bf16.mxu0 0
    %620 = vmatpush2.bf16.msra.mxu0 0
    %621 = vmatprep.subr.bf16.mxu0 0
    %622 = vmatpush2.bf16.msra.mxu0 0
    %623 = vmatprep.subr.bf16.mxu0 0
    %624 = vmatpush2.bf16.msra.mxu0 0
    %625 = vmatprep.mubr.bf16.mxu0 0
    %626 = vmatmul.mubr.bf16.gmra.mxu0 %v588
    %v627 = vpop.f32.mrf.mxu0
    %v628 = vadd.f32 %v582, %v627
    %v629 = vpop.f32.mrf.mxu0
    %v630 = vpop.f32.mrf.mxu0
    %v631 = vpop.f32.mrf.mxu0
    %632 = vdwg.mxu0
    %633 = vrot.lane.b32.xlu0 %v309, 112
    %v634 = vpop.permute.xlu0 %633
    %635 = vrot.lane.b32.xlu0 %v310, 112
    %v636 = vpop.permute.xlu0 %635
    %v638 = vsel %vm315, %v634, 0
    %v641 = vsel %vm315, %v636, 0
    %643 = vmatprep.subr.bf16.mxu0 0
    %644 = vmatpush1.bf16.xpose.msra.mxu0 0
    %645 = vmatprep.subr.bf16.mxu0 0
    %646 = vmatpush1.bf16.xpose.msra.mxu0 0
    %647 = vmatprep.subr.bf16.mxu0 0
    %648 = vmatpush1.bf16.xpose.msra.mxu0 0
    %649 = vmatprep.subr.bf16.mxu0 0
    %650 = vmatpush1.bf16.xpose.msra.mxu0 0
    %651 = vmatprep.subr.bf16.mxu0 0
    %652 = vmatpush1.bf16.xpose.msra.mxu0 0
    %653 = vmatprep.subr.bf16.mxu0 0
    %654 = vmatpush1.bf16.xpose.msra.mxu0 0
    %655 = vmatprep.subr.bf16.mxu0 0
    %656 = vmatpush1.bf16.xpose.msra.mxu0 0
    %657 = vmatprep.subr.bf16.mxu0 0
    %658 = vmatpush1.bf16.xpose.msra.mxu0 %v641
    %659 = vmatprep.subr.bf16.mxu0 0
    %660 = vmatpush2.bf16.xpose.msra.mxu0 0
    %661 = vmatprep.subr.bf16.mxu0 0
    %662 = vmatpush2.bf16.xpose.msra.mxu0 0
    %663 = vmatprep.subr.bf16.mxu0 0
    %664 = vmatpush2.bf16.xpose.msra.mxu0 0
    %665 = vmatprep.subr.bf16.mxu0 0
    %666 = vmatpush2.bf16.xpose.msra.mxu0 0
    %667 = vmatprep.subr.bf16.mxu0 0
    %668 = vmatpush2.bf16.xpose.msra.mxu0 0
    %669 = vmatprep.subr.bf16.mxu0 0
    %670 = vmatpush2.bf16.xpose.msra.mxu0 0
    %671 = vmatprep.subr.bf16.mxu0 0
    %672 = vmatpush2.bf16.xpose.msra.mxu0 0
    %673 = vmatprep.subr.bf16.mxu0 0
    %674 = vmatpush2.bf16.xpose.msra.mxu0 0
    %675 = vmatprep.mubr.bf16.mxu0 0
    %676 = vmatmul.mubr.bf16.gmra.mxu0 %v638
    %v677 = vpop.f32.mrf.mxu0
    %v678 = vadd.f32 0.0, %v677
    %v679 = vpop.f32.mrf.mxu0
    %v680 = vpop.f32.mrf.mxu0
    %v681 = vpop.f32.mrf.mxu0
    %682 = vdwg.mxu0
    %v683 = vmul.f32 %v678, 0.35355338
    %v684 = vadd.f32 %v683, %v177
    %v685 = vsel %vm315, %v684, -inf
    %686 = vmax.xlane.f32.xlu0 %v685
    %v687 = vpop.xlane.xlu0 %686
    %v688 = vsub.f32 %v684, %v687
    %v689 = vmul.f32 %v688, 1.442695
    %v690 = vpow.pop %v689
    %v691 = vsel %vm315, %v690, 0.0
    %692 = vadd.xlane.f32.xlu0 %v691
    %v693 = vpop.xlane.xlu0 %692
    %v694 = vrcp.pop %v693
    %v695 = vmul.f32 %v690, %v694
    %v696 = vpack.c.bf16 %v695, %v695
    %697 = vrot.lane.b32.xlu0 %v310, 80
    %v698 = vpop.permute.xlu0 %697
    %v700 = vsel %vm315, %v696, 0
    %v703 = vsel %vm382, %v698, 0
    %705 = vmatprep.subr.bf16.mxu0 0
    %706 = vmatpush1.bf16.msra.mxu0 0
    %707 = vmatprep.subr.bf16.mxu0 0
    %708 = vmatpush1.bf16.msra.mxu0 0
    %709 = vmatprep.subr.bf16.mxu0 0
    %710 = vmatpush1.bf16.msra.mxu0 0
    %711 = vmatprep.subr.bf16.mxu0 0
    %712 = vmatpush1.bf16.msra.mxu0 0
    %713 = vmatprep.subr.bf16.mxu0 0
    %714 = vmatpush1.bf16.msra.mxu0 0
    %715 = vmatprep.subr.bf16.mxu0 0
    %716 = vmatpush1.bf16.msra.mxu0 0
    %717 = vmatprep.subr.bf16.mxu0 0
    %718 = vmatpush1.bf16.msra.mxu0 0
    %719 = vmatprep.subr.bf16.mxu0 0
    %720 = vmatpush1.bf16.msra.mxu0 %v703
    %721 = vmatprep.subr.bf16.mxu0 0
    %722 = vmatpush2.bf16.msra.mxu0 0
    %723 = vmatprep.subr.bf16.mxu0 0
    %724 = vmatpush2.bf16.msra.mxu0 0
    %725 = vmatprep.subr.bf16.mxu0 0
    %726 = vmatpush2.bf16.msra.mxu0 0
    %727 = vmatprep.subr.bf16.mxu0 0
    %728 = vmatpush2.bf16.msra.mxu0 0
    %729 = vmatprep.subr.bf16.mxu0 0
    %730 = vmatpush2.bf16.msra.mxu0 0
    %731 = vmatprep.subr.bf16.mxu0 0
    %732 = vmatpush2.bf16.msra.mxu0 0
    %733 = vmatprep.subr.bf16.mxu0 0
    %734 = vmatpush2.bf16.msra.mxu0 0
    %735 = vmatprep.subr.bf16.mxu0 0
    %736 = vmatpush2.bf16.msra.mxu0 0
    %737 = vmatprep.mubr.bf16.mxu0 0
    %738 = vmatmul.mubr.bf16.gmra.mxu0 %v700
    %v739 = vpop.f32.mrf.mxu0
    %v740 = vadd.f32 0.0, %v739
    %v741 = vpop.f32.mrf.mxu0
    %v742 = vpop.f32.mrf.mxu0
    %v743 = vpop.f32.mrf.mxu0
    %744 = vdwg.mxu0
    %v745 = vpack.c.bf16 %v740, %v740
    %v747 = vsel %vm315, %v745, 0
    %v750 = vsel %vm382, %v313, 0
    %752 = vmatprep.subr.bf16.mxu0 0
    %753 = vmatpush1.bf16.msra.mxu0 0
    %754 = vmatprep.subr.bf16.mxu0 0
    %755 = vmatpush1.bf16.msra.mxu0 0
    %756 = vmatprep.subr.bf16.mxu0 0
    %757 = vmatpush1.bf16.msra.mxu0 0
    %758 = vmatprep.subr.bf16.mxu0 0
    %759 = vmatpush1.bf16.msra.mxu0 0
    %760 = vmatprep.subr.bf16.mxu0 0
    %761 = vmatpush1.bf16.msra.mxu0 0
    %762 = vmatprep.subr.bf16.mxu0 0
    %763 = vmatpush1.bf16.msra.mxu0 0
    %764 = vmatprep.subr.bf16.mxu0 0
    %765 = vmatpush1.bf16.msra.mxu0 0
    %766 = vmatprep.subr.bf16.mxu0 0
    %767 = vmatpush1.bf16.msra.mxu0 %v750
    %768 = vmatprep.subr.bf16.mxu0 0
    %769 = vmatpush2.bf16.msra.mxu0 0
    %770 = vmatprep.subr.bf16.mxu0 0
    %771 = vmatpush2.bf16.msra.mxu0 0
    %772 = vmatprep.subr.bf16.mxu0 0
    %773 = vmatpush2.bf16.msra.mxu0 0
    %774 = vmatprep.subr.bf16.mxu0 0
    %775 = vmatpush2.bf16.msra.mxu0 0
    %776 = vmatprep.subr.bf16.mxu0 0
    %777 = vmatpush2.bf16.msra.mxu0 0
    %778 = vmatprep.subr.bf16.mxu0 0
    %779 = vmatpush2.bf16.msra.mxu0 0
    %780 = vmatprep.subr.bf16.mxu0 0
    %781 = vmatpush2.bf16.msra.mxu0 0
    %782 = vmatprep.subr.bf16.mxu0 0
    %783 = vmatpush2.bf16.msra.mxu0 0
    %784 = vmatprep.mubr.bf16.mxu0 0
    %785 = vmatmul.mubr.bf16.gmra.mxu0 %v747
    %v786 = vpop.f32.mrf.mxu0
    %v787 = vadd.f32 0.0, %v786
    %v788 = vpop.f32.mrf.mxu0
    %v789 = vpop.f32.mrf.mxu0
    %v790 = vpop.f32.mrf.mxu0
    %791 = vdwg.mxu0
    %v792 = vadd.f32 %v628, %v787
    %793 = vrot.lane.b32.xlu0 %v309, 104
    %v794 = vpop.permute.xlu0 %793
    %795 = vrot.lane.b32.xlu0 %v310, 104
    %v796 = vpop.permute.xlu0 %795
    %v798 = vsel %vm315, %v794, 0
    %v801 = vsel %vm315, %v796, 0
    %803 = vmatprep.subr.bf16.mxu0 0
    %804 = vmatpush1.bf16.xpose.msra.mxu0 0
    %805 = vmatprep.subr.bf16.mxu0 0
    %806 = vmatpush1.bf16.xpose.msra.mxu0 0
    %807 = vmatprep.subr.bf16.mxu0 0
    %808 = vmatpush1.bf16.xpose.msra.mxu0 0
    %809 = vmatprep.subr.bf16.mxu0 0
    %810 = vmatpush1.bf16.xpose.msra.mxu0 0
    %811 = vmatprep.subr.bf16.mxu0 0
    %812 = vmatpush1.bf16.xpose.msra.mxu0 0
    %813 = vmatprep.subr.bf16.mxu0 0
    %814 = vmatpush1.bf16.xpose.msra.mxu0 0
    %815 = vmatprep.subr.bf16.mxu0 0
    %816 = vmatpush1.bf16.xpose.msra.mxu0 0
    %817 = vmatprep.subr.bf16.mxu0 0
    %818 = vmatpush1.bf16.xpose.msra.mxu0 %v801
    %819 = vmatprep.subr.bf16.mxu0 0
    %820 = vmatpush2.bf16.xpose.msra.mxu0 0
    %821 = vmatprep.subr.bf16.mxu0 0
    %822 = vmatpush2.bf16.xpose.msra.mxu0 0
    %823 = vmatprep.subr.bf16.mxu0 0
    %824 = vmatpush2.bf16.xpose.msra.mxu0 0
    %825 = vmatprep.subr.bf16.mxu0 0
    %826 = vmatpush2.bf16.xpose.msra.mxu0 0
    %827 = vmatprep.subr.bf16.mxu0 0
    %828 = vmatpush2.bf16.xpose.msra.mxu0 0
    %829 = vmatprep.subr.bf16.mxu0 0
    %830 = vmatpush2.bf16.xpose.msra.mxu0 0
    %831 = vmatprep.subr.bf16.mxu0 0
    %832 = vmatpush2.bf16.xpose.msra.mxu0 0
    %833 = vmatprep.subr.bf16.mxu0 0
    %834 = vmatpush2.bf16.xpose.msra.mxu0 0
    %835 = vmatprep.mubr.bf16.mxu0 0
    %836 = vmatmul.mubr.bf16.gmra.mxu0 %v798
    %v837 = vpop.f32.mrf.mxu0
    %v838 = vadd.f32 0.0, %v837
    %v839 = vpop.f32.mrf.mxu0
    %v840 = vpop.f32.mrf.mxu0
    %v841 = vpop.f32.mrf.mxu0
    %842 = vdwg.mxu0
    %v843 = vmul.f32 %v838, 0.35355338
    %v844 = vadd.f32 %v843, %v177
    %v845 = vsel %vm315, %v844, -inf
    %846 = vmax.xlane.f32.xlu0 %v845
    %v847 = vpop.xlane.xlu0 %846
    %v848 = vsub.f32 %v844, %v847
    %v849 = vmul.f32 %v848, 1.442695
    %v850 = vpow.pop %v849
    %v851 = vsel %vm315, %v850, 0.0
    %852 = vadd.xlane.f32.xlu0 %v851
    %v853 = vpop.xlane.xlu0 %852
    %v854 = vrcp.pop %v853
    %v855 = vmul.f32 %v850, %v854
    %v856 = vpack.c.bf16 %v855, %v855
    %857 = vrot.lane.b32.xlu0 %v310, 72
    %v858 = vpop.permute.xlu0 %857
    %v860 = vsel %vm315, %v856, 0
    %v863 = vsel %vm382, %v858, 0
    %865 = vmatprep.subr.bf16.mxu0 0
    %866 = vmatpush1.bf16.msra.mxu0 0
    %867 = vmatprep.subr.bf16.mxu0 0
    %868 = vmatpush1.bf16.msra.mxu0 0
    %869 = vmatprep.subr.bf16.mxu0 0
    %870 = vmatpush1.bf16.msra.mxu0 0
    %871 = vmatprep.subr.bf16.mxu0 0
    %872 = vmatpush1.bf16.msra.mxu0 0
    %873 = vmatprep.subr.bf16.mxu0 0
    %874 = vmatpush1.bf16.msra.mxu0 0
    %875 = vmatprep.subr.bf16.mxu0 0
    %876 = vmatpush1.bf16.msra.mxu0 0
    %877 = vmatprep.subr.bf16.mxu0 0
    %878 = vmatpush1.bf16.msra.mxu0 0
    %879 = vmatprep.subr.bf16.mxu0 0
    %880 = vmatpush1.bf16.msra.mxu0 %v863
    %881 = vmatprep.subr.bf16.mxu0 0
    %882 = vmatpush2.bf16.msra.mxu0 0
    %883 = vmatprep.subr.bf16.mxu0 0
    %884 = vmatpush2.bf16.msra.mxu0 0
    %885 = vmatprep.subr.bf16.mxu0 0
    %886 = vmatpush2.bf16.msra.mxu0 0
    %887 = vmatprep.subr.bf16.mxu0 0
    %888 = vmatpush2.bf16.msra.mxu0 0
    %889 = vmatprep.subr.bf16.mxu0 0
    %890 = vmatpush2.bf16.msra.mxu0 0
    %891 = vmatprep.subr.bf16.mxu0 0
    %892 = vmatpush2.bf16.msra.mxu0 0
    %893 = vmatprep.subr.bf16.mxu0 0
    %894 = vmatpush2.bf16.msra.mxu0 0
    %895 = vmatprep.subr.bf16.mxu0 0
    %896 = vmatpush2.bf16.msra.mxu0 0
    %897 = vmatprep.mubr.bf16.mxu0 0
    %898 = vmatmul.mubr.bf16.gmra.mxu0 %v860
    %v899 = vpop.f32.mrf.mxu0
    %v900 = vadd.f32 0.0, %v899
    %v901 = vpop.f32.mrf.mxu0
    %v902 = vpop.f32.mrf.mxu0
    %v903 = vpop.f32.mrf.mxu0
    %904 = vdwg.mxu0
    %v905 = vpack.c.bf16 %v900, %v900
    %v907 = vsel %vm315, %v905, 0
    %v910 = vsel %vm382, %v314, 0
    %912 = vmatprep.subr.bf16.mxu0 0
    %913 = vmatpush1.bf16.msra.mxu0 0
    %914 = vmatprep.subr.bf16.mxu0 0
    %915 = vmatpush1.bf16.msra.mxu0 0
    %916 = vmatprep.subr.bf16.mxu0 0
    %917 = vmatpush1.bf16.msra.mxu0 0
    %918 = vmatprep.subr.bf16.mxu0 0
    %919 = vmatpush1.bf16.msra.mxu0 0
    %920 = vmatprep.subr.bf16.mxu0 0
    %921 = vmatpush1.bf16.msra.mxu0 0
    %922 = vmatprep.subr.bf16.mxu0 0
    %923 = vmatpush1.bf16.msra.mxu0 0
    %924 = vmatprep.subr.bf16.mxu0 0
    %925 = vmatpush1.bf16.msra.mxu0 0
    %926 = vmatprep.subr.bf16.mxu0 0
    %927 = vmatpush1.bf16.msra.mxu0 %v910
    %928 = vmatprep.subr.bf16.mxu0 0
    %929 = vmatpush2.bf16.msra.mxu0 0
    %930 = vmatprep.subr.bf16.mxu0 0
    %931 = vmatpush2.bf16.msra.mxu0 0
    %932 = vmatprep.subr.bf16.mxu0 0
    %933 = vmatpush2.bf16.msra.mxu0 0
    %934 = vmatprep.subr.bf16.mxu0 0
    %935 = vmatpush2.bf16.msra.mxu0 0
    %936 = vmatprep.subr.bf16.mxu0 0
    %937 = vmatpush2.bf16.msra.mxu0 0
    %938 = vmatprep.subr.bf16.mxu0 0
    %939 = vmatpush2.bf16.msra.mxu0 0
    %940 = vmatprep.subr.bf16.mxu0 0
    %941 = vmatpush2.bf16.msra.mxu0 0
    %942 = vmatprep.subr.bf16.mxu0 0
    %943 = vmatpush2.bf16.msra.mxu0 0
    %944 = vmatprep.mubr.bf16.mxu0 0
    %945 = vmatmul.mubr.bf16.gmra.mxu0 %v907
    %v946 = vpop.f32.mrf.mxu0
    %v947 = vadd.f32 0.0, %v946
    %v948 = vpop.f32.mrf.mxu0
    %v949 = vpop.f32.mrf.mxu0
    %v950 = vpop.f32.mrf.mxu0
    %951 = vdwg.mxu0
    %v952 = vadd.f32 %v792, %v947
    %953 = vst.msk [vmem:[#allocation2] sm:$0xff] %vm203, %v952
    %v954 = vrot.slane %v309, 4
    %v955 = vrot.slane %v310, 4
    %v957 = vsel %vm315, %v954, 0
    %v960 = vsel %vm315, %v955, 0
    %962 = vmatprep.subr.bf16.mxu0 0
    %963 = vmatpush1.bf16.xpose.msra.mxu0 0
    %964 = vmatprep.subr.bf16.mxu0 0
    %965 = vmatpush1.bf16.xpose.msra.mxu0 0
    %966 = vmatprep.subr.bf16.mxu0 0
    %967 = vmatpush1.bf16.xpose.msra.mxu0 0
    %968 = vmatprep.subr.bf16.mxu0 0
    %969 = vmatpush1.bf16.xpose.msra.mxu0 0
    %970 = vmatprep.subr.bf16.mxu0 0
    %971 = vmatpush1.bf16.xpose.msra.mxu0 0
    %972 = vmatprep.subr.bf16.mxu0 0
    %973 = vmatpush1.bf16.xpose.msra.mxu0 0
    %974 = vmatprep.subr.bf16.mxu0 0
    %975 = vmatpush1.bf16.xpose.msra.mxu0 0
    %976 = vmatprep.subr.bf16.mxu0 0
    %977 = vmatpush1.bf16.xpose.msra.mxu0 %v960
    %978 = vmatprep.subr.bf16.mxu0 0
    %979 = vmatpush2.bf16.xpose.msra.mxu0 0
    %980 = vmatprep.subr.bf16.mxu0 0
    %981 = vmatpush2.bf16.xpose.msra.mxu0 0
    %982 = vmatprep.subr.bf16.mxu0 0
    %983 = vmatpush2.bf16.xpose.msra.mxu0 0
    %984 = vmatprep.subr.bf16.mxu0 0
    %985 = vmatpush2.bf16.xpose.msra.mxu0 0
    %986 = vmatprep.subr.bf16.mxu0 0
    %987 = vmatpush2.bf16.xpose.msra.mxu0 0
    %988 = vmatprep.subr.bf16.mxu0 0
    %989 = vmatpush2.bf16.xpose.msra.mxu0 0
    %990 = vmatprep.subr.bf16.mxu0 0
    %991 = vmatpush2.bf16.xpose.msra.mxu0 0
    %992 = vmatprep.subr.bf16.mxu0 0
    %993 = vmatpush2.bf16.xpose.msra.mxu0 0
    %994 = vmatprep.mubr.bf16.mxu0 0
    %995 = vmatmul.mubr.bf16.gmra.mxu0 %v957
    %v996 = vpop.f32.mrf.mxu0
    %v997 = vadd.f32 0.0, %v996
    %v998 = vpop.f32.mrf.mxu0
    %v999 = vpop.f32.mrf.mxu0
    %v1000 = vpop.f32.mrf.mxu0
    %1001 = vdwg.mxu0
    %v1002 = vmul.f32 %v997, 0.35355338
    %v1003 = vadd.f32 %v1002, %v177
    %v1004 = vsel %vm315, %v1003, -inf
    %1005 = vmax.xlane.f32.xlu0 %v1004
    %v1006 = vpop.xlane.xlu0 %1005
    %v1007 = vsub.f32 %v1003, %v1006
    %v1008 = vmul.f32 %v1007, 1.442695
    %v1009 = vpow.pop %v1008
    %v1010 = vsel %vm315, %v1009, 0.0
    %1011 = vadd.xlane.f32.xlu0 %v1010
    %v1012 = vpop.xlane.xlu0 %1011
    %v1013 = vrcp.pop %v1012
    %v1014 = vmul.f32 %v1009, %v1013
    %v1015 = vpack.c.bf16 %v1014, %v1014
    %1016 = vrot.lane.b32.xlu0 %v955, 96
    %v1017 = vpop.permute.xlu0 %1016
    %v1019 = vsel %vm315, %v1015, 0
    %v1022 = vsel %vm382, %v1017, 0
    %1024 = vmatprep.subr.bf16.mxu0 0
    %1025 = vmatpush1.bf16.msra.mxu0 0
    %1026 = vmatprep.subr.bf16.mxu0 0
    %1027 = vmatpush1.bf16.msra.mxu0 0
    %1028 = vmatprep.subr.bf16.mxu0 0
    %1029 = vmatpush1.bf16.msra.mxu0 0
    %1030 = vmatprep.subr.bf16.mxu0 0
    %1031 = vmatpush1.bf16.msra.mxu0 0
    %1032 = vmatprep.subr.bf16.mxu0 0
    %1033 = vmatpush1.bf16.msra.mxu0 0
    %1034 = vmatprep.subr.bf16.mxu0 0
    %1035 = vmatpush1.bf16.msra.mxu0 0
    %1036 = vmatprep.subr.bf16.mxu0 0
    %1037 = vmatpush1.bf16.msra.mxu0 0
    %1038 = vmatprep.subr.bf16.mxu0 0
    %1039 = vmatpush1.bf16.msra.mxu0 %v1022
    %1040 = vmatprep.subr.bf16.mxu0 0
    %1041 = vmatpush2.bf16.msra.mxu0 0
    %1042 = vmatprep.subr.bf16.mxu0 0
    %1043 = vmatpush2.bf16.msra.mxu0 0
    %1044 = vmatprep.subr.bf16.mxu0 0
    %1045 = vmatpush2.bf16.msra.mxu0 0
    %1046 = vmatprep.subr.bf16.mxu0 0
    %1047 = vmatpush2.bf16.msra.mxu0 0
    %1048 = vmatprep.subr.bf16.mxu0 0
    %1049 = vmatpush2.bf16.msra.mxu0 0
    %1050 = vmatprep.subr.bf16.mxu0 0
    %1051 = vmatpush2.bf16.msra.mxu0 0
    %1052 = vmatprep.subr.bf16.mxu0 0
    %1053 = vmatpush2.bf16.msra.mxu0 0
    %1054 = vmatprep.subr.bf16.mxu0 0
    %1055 = vmatpush2.bf16.msra.mxu0 0
    %1056 = vmatprep.mubr.bf16.mxu0 0
    %1057 = vmatmul.mubr.bf16.gmra.mxu0 %v1019
    %v1058 = vpop.f32.mrf.mxu0
    %v1059 = vadd.f32 0.0, %v1058
    %v1060 = vpop.f32.mrf.mxu0
    %v1061 = vpop.f32.mrf.mxu0
    %v1062 = vpop.f32.mrf.mxu0
    %1063 = vdwg.mxu0
    %v1064 = vpack.c.bf16 %v1059, %v1059
    %1065 = vrot.lane.b32.xlu0 %v954, 120
    %v1066 = vpop.permute.xlu0 %1065
    %1067 = vrot.lane.b32.xlu0 %v955, 120
    %v1068 = vpop.permute.xlu0 %1067
    %v1070 = vsel %vm315, %v1066, 0
    %v1073 = vsel %vm315, %v1068, 0
    %1075 = vmatprep.subr.bf16.mxu0 0
    %1076 = vmatpush1.bf16.xpose.msra.mxu0 0
    %1077 = vmatprep.subr.bf16.mxu0 0
    %1078 = vmatpush1.bf16.xpose.msra.mxu0 0
    %1079 = vmatprep.subr.bf16.mxu0 0
    %1080 = vmatpush1.bf16.xpose.msra.mxu0 0
    %1081 = vmatprep.subr.bf16.mxu0 0
    %1082 = vmatpush1.bf16.xpose.msra.mxu0 0
    %1083 = vmatprep.subr.bf16.mxu0 0
    %1084 = vmatpush1.bf16.xpose.msra.mxu0 0
    %1085 = vmatprep.subr.bf16.mxu0 0
    %1086 = vmatpush1.bf16.xpose.msra.mxu0 0
    %1087 = vmatprep.subr.bf16.mxu0 0
    %1088 = vmatpush1.bf16.xpose.msra.mxu0 0
    %1089 = vmatprep.subr.bf16.mxu0 0
    %1090 = vmatpush1.bf16.xpose.msra.mxu0 %v1073
    %1091 = vmatprep.subr.bf16.mxu0 0
    %1092 = vmatpush2.bf16.xpose.msra.mxu0 0
    %1093 = vmatprep.subr.bf16.mxu0 0
    %1094 = vmatpush2.bf16.xpose.msra.mxu0 0
    %1095 = vmatprep.subr.bf16.mxu0 0
    %1096 = vmatpush2.bf16.xpose.msra.mxu0 0
    %1097 = vmatprep.subr.bf16.mxu0 0
    %1098 = vmatpush2.bf16.xpose.msra.mxu0 0
    %1099 = vmatprep.subr.bf16.mxu0 0
    %1100 = vmatpush2.bf16.xpose.msra.mxu0 0
    %1101 = vmatprep.subr.bf16.mxu0 0
    %1102 = vmatpush2.bf16.xpose.msra.mxu0 0
    %1103 = vmatprep.subr.bf16.mxu0 0
    %1104 = vmatpush2.bf16.xpose.msra.mxu0 0
    %1105 = vmatprep.subr.bf16.mxu0 0
    %1106 = vmatpush2.bf16.xpose.msra.mxu0 0
    %1107 = vmatprep.mubr.bf16.mxu0 0
    %1108 = vmatmul.mubr.bf16.gmra.mxu0 %v1070
    %v1109 = vpop.f32.mrf.mxu0
    %v1110 = vadd.f32 0.0, %v1109
    %v1111 = vpop.f32.mrf.mxu0
    %v1112 = vpop.f32.mrf.mxu0
    %v1113 = vpop.f32.mrf.mxu0
    %1114 = vdwg.mxu0
    %v1115 = vmul.f32 %v1110, 0.35355338
    %v1116 = vadd.f32 %v1115, %v177
    %v1117 = vsel %vm315, %v1116, -inf
    %1118 = vmax.xlane.f32.xlu0 %v1117
    %v1119 = vpop.xlane.xlu0 %1118
    %v1120 = vsub.f32 %v1116, %v1119
    %v1121 = vmul.f32 %v1120, 1.442695
    %v1122 = vpow.pop %v1121
    %v1123 = vsel %vm315, %v1122, 0.0
    %1124 = vadd.xlane.f32.xlu0 %v1123
    %v1125 = vpop.xlane.xlu0 %1124
    %v1126 = vrcp.pop %v1125
    %v1127 = vmul.f32 %v1122, %v1126
    %v1128 = vpack.c.bf16 %v1127, %v1127
    %1129 = vrot.lane.b32.xlu0 %v955, 88
    %v1130 = vpop.permute.xlu0 %1129
    %v1132 = vsel %vm315, %v1128, 0
    %v1135 = vsel %vm382, %v1130, 0
    %1137 = vmatprep.subr.bf16.mxu0 0
    %1138 = vmatpush1.bf16.msra.mxu0 0
    %1139 = vmatprep.subr.bf16.mxu0 0
    %1140 = vmatpush1.bf16.msra.mxu0 0
    %1141 = vmatprep.subr.bf16.mxu0 0
    %1142 = vmatpush1.bf16.msra.mxu0 0
    %1143 = vmatprep.subr.bf16.mxu0 0
    %1144 = vmatpush1.bf16.msra.mxu0 0
    %1145 = vmatprep.subr.bf16.mxu0 0
    %1146 = vmatpush1.bf16.msra.mxu0 0
    %1147 = vmatprep.subr.bf16.mxu0 0
    %1148 = vmatpush1.bf16.msra.mxu0 0
    %1149 = vmatprep.subr.bf16.mxu0 0
    %1150 = vmatpush1.bf16.msra.mxu0 0
    %1151 = vmatprep.subr.bf16.mxu0 0
    %1152 = vmatpush1.bf16.msra.mxu0 %v1135
    %1153 = vmatprep.subr.bf16.mxu0 0
    %1154 = vmatpush2.bf16.msra.mxu0 0
    %1155 = vmatprep.subr.bf16.mxu0 0
    %1156 = vmatpush2.bf16.msra.mxu0 0
    %1157 = vmatprep.subr.bf16.mxu0 0
    %1158 = vmatpush2.bf16.msra.mxu0 0
    %1159 = vmatprep.subr.bf16.mxu0 0
    %1160 = vmatpush2.bf16.msra.mxu0 0
    %1161 = vmatprep.subr.bf16.mxu0 0
    %1162 = vmatpush2.bf16.msra.mxu0 0
    %1163 = vmatprep.subr.bf16.mxu0 0
    %1164 = vmatpush2.bf16.msra.mxu0 0
    %1165 = vmatprep.subr.bf16.mxu0 0
    %1166 = vmatpush2.bf16.msra.mxu0 0
    %1167 = vmatprep.subr.bf16.mxu0 0
    %1168 = vmatpush2.bf16.msra.mxu0 0
    %1169 = vmatprep.mubr.bf16.mxu0 0
    %1170 = vmatmul.mubr.bf16.gmra.mxu0 %v1132
    %v1171 = vpop.f32.mrf.mxu0
    %v1172 = vadd.f32 0.0, %v1171
    %v1173 = vpop.f32.mrf.mxu0
    %v1174 = vpop.f32.mrf.mxu0
    %v1175 = vpop.f32.mrf.mxu0
    %1176 = vdwg.mxu0
    %v1177 = vpack.c.bf16 %v1172, %v1172
    %v1179 = vsel %vm315, %v1177, 0
    %1181 = vmatprep.subr.bf16.mxu0 0
    %1182 = vmatpush1.bf16.msra.mxu0 0
    %1183 = vmatprep.subr.bf16.mxu0 0
    %1184 = vmatpush1.bf16.msra.mxu0 0
    %1185 = vmatprep.subr.bf16.mxu0 0
    %1186 = vmatpush1.bf16.msra.mxu0 0
    %1187 = vmatprep.subr.bf16.mxu0 0
    %1188 = vmatpush1.bf16.msra.mxu0 0
    %1189 = vmatprep.subr.bf16.mxu0 0
    %1190 = vmatpush1.bf16.msra.mxu0 0
    %1191 = vmatprep.subr.bf16.mxu0 0
    %1192 = vmatpush1.bf16.msra.mxu0 0
    %1193 = vmatprep.subr.bf16.mxu0 0
    %1194 = vmatpush1.bf16.msra.mxu0 0
    %1195 = vmatprep.subr.bf16.mxu0 0
    %1196 = vmatpush1.bf16.msra.mxu0 %v545
    %1197 = vmatprep.subr.bf16.mxu0 0
    %1198 = vmatpush2.bf16.msra.mxu0 0
    %1199 = vmatprep.subr.bf16.mxu0 0
    %1200 = vmatpush2.bf16.msra.mxu0 0
    %1201 = vmatprep.subr.bf16.mxu0 0
    %1202 = vmatpush2.bf16.msra.mxu0 0
    %1203 = vmatprep.subr.bf16.mxu0 0
    %1204 = vmatpush2.bf16.msra.mxu0 0
    %1205 = vmatprep.subr.bf16.mxu0 0
    %1206 = vmatpush2.bf16.msra.mxu0 0
    %1207 = vmatprep.subr.bf16.mxu0 0
    %1208 = vmatpush2.bf16.msra.mxu0 0
    %1209 = vmatprep.subr.bf16.mxu0 0
    %1210 = vmatpush2.bf16.msra.mxu0 0
    %1211 = vmatprep.subr.bf16.mxu0 0
    %1212 = vmatpush2.bf16.msra.mxu0 0
    %1213 = vmatprep.mubr.bf16.mxu0 0
    %1214 = vmatmul.mubr.bf16.gmra.mxu0 %v1179
    %v1215 = vpop.f32.mrf.mxu0
    %v1216 = vadd.f32 0.0, %v1215
    %v1217 = vpop.f32.mrf.mxu0
    %v1218 = vpop.f32.mrf.mxu0
    %v1219 = vpop.f32.mrf.mxu0
    %1220 = vdwg.mxu0
    %v1222 = vsel %vm315, %v1064, 0
    %1224 = vmatprep.subr.bf16.mxu0 0
    %1225 = vmatpush1.bf16.msra.mxu0 0
    %1226 = vmatprep.subr.bf16.mxu0 0
    %1227 = vmatpush1.bf16.msra.mxu0 0
    %1228 = vmatprep.subr.bf16.mxu0 0
    %1229 = vmatpush1.bf16.msra.mxu0 0
    %1230 = vmatprep.subr.bf16.mxu0 0
    %1231 = vmatpush1.bf16.msra.mxu0 0
    %1232 = vmatprep.subr.bf16.mxu0 0
    %1233 = vmatpush1.bf16.msra.mxu0 0
    %1234 = vmatprep.subr.bf16.mxu0 0
    %1235 = vmatpush1.bf16.msra.mxu0 0
    %1236 = vmatprep.subr.bf16.mxu0 0
    %1237 = vmatpush1.bf16.msra.mxu0 0
    %1238 = vmatprep.subr.bf16.mxu0 0
    %1239 = vmatpush1.bf16.msra.mxu0 %v591
    %1240 = vmatprep.subr.bf16.mxu0 0
    %1241 = vmatpush2.bf16.msra.mxu0 0
    %1242 = vmatprep.subr.bf16.mxu0 0
    %1243 = vmatpush2.bf16.msra.mxu0 0
    %1244 = vmatprep.subr.bf16.mxu0 0
    %1245 = vmatpush2.bf16.msra.mxu0 0
    %1246 = vmatprep.subr.bf16.mxu0 0
    %1247 = vmatpush2.bf16.msra.mxu0 0
    %1248 = vmatprep.subr.bf16.mxu0 0
    %1249 = vmatpush2.bf16.msra.mxu0 0
    %1250 = vmatprep.subr.bf16.mxu0 0
    %1251 = vmatpush2.bf16.msra.mxu0 0
    %1252 = vmatprep.subr.bf16.mxu0 0
    %1253 = vmatpush2.bf16.msra.mxu0 0
    %1254 = vmatprep.subr.bf16.mxu0 0
    %1255 = vmatpush2.bf16.msra.mxu0 0
    %1256 = vmatprep.mubr.bf16.mxu0 0
    %1257 = vmatmul.mubr.bf16.gmra.mxu0 %v1222
    %v1258 = vpop.f32.mrf.mxu0
    %v1259 = vadd.f32 %v1216, %v1258
    %v1260 = vpop.f32.mrf.mxu0
    %v1261 = vpop.f32.mrf.mxu0
    %v1262 = vpop.f32.mrf.mxu0
    %1263 = vdwg.mxu0
    %1264 = vrot.lane.b32.xlu0 %v954, 112
    %v1265 = vpop.permute.xlu0 %1264
    %1266 = vrot.lane.b32.xlu0 %v955, 112
    %v1267 = vpop.permute.xlu0 %1266
    %v1269 = vsel %vm315, %v1265, 0
    %v1272 = vsel %vm315, %v1267, 0
    %1274 = vmatprep.subr.bf16.mxu0 0
    %1275 = vmatpush1.bf16.xpose.msra.mxu0 0
    %1276 = vmatprep.subr.bf16.mxu0 0
    %1277 = vmatpush1.bf16.xpose.msra.mxu0 0
    %1278 = vmatprep.subr.bf16.mxu0 0
    %1279 = vmatpush1.bf16.xpose.msra.mxu0 0
    %1280 = vmatprep.subr.bf16.mxu0 0
    %1281 = vmatpush1.bf16.xpose.msra.mxu0 0
    %1282 = vmatprep.subr.bf16.mxu0 0
    %1283 = vmatpush1.bf16.xpose.msra.mxu0 0
    %1284 = vmatprep.subr.bf16.mxu0 0
    %1285 = vmatpush1.bf16.xpose.msra.mxu0 0
    %1286 = vmatprep.subr.bf16.mxu0 0
    %1287 = vmatpush1.bf16.xpose.msra.mxu0 0
    %1288 = vmatprep.subr.bf16.mxu0 0
    %1289 = vmatpush1.bf16.xpose.msra.mxu0 %v1272
    %1290 = vmatprep.subr.bf16.mxu0 0
    %1291 = vmatpush2.bf16.xpose.msra.mxu0 0
    %1292 = vmatprep.subr.bf16.mxu0 0
    %1293 = vmatpush2.bf16.xpose.msra.mxu0 0
    %1294 = vmatprep.subr.bf16.mxu0 0
    %1295 = vmatpush2.bf16.xpose.msra.mxu0 0
    %1296 = vmatprep.subr.bf16.mxu0 0
    %1297 = vmatpush2.bf16.xpose.msra.mxu0 0
    %1298 = vmatprep.subr.bf16.mxu0 0
    %1299 = vmatpush2.bf16.xpose.msra.mxu0 0
    %1300 = vmatprep.subr.bf16.mxu0 0
    %1301 = vmatpush2.bf16.xpose.msra.mxu0 0
    %1302 = vmatprep.subr.bf16.mxu0 0
    %1303 = vmatpush2.bf16.xpose.msra.mxu0 0
    %1304 = vmatprep.subr.bf16.mxu0 0
    %1305 = vmatpush2.bf16.xpose.msra.mxu0 0
    %1306 = vmatprep.mubr.bf16.mxu0 0
    %1307 = vmatmul.mubr.bf16.gmra.mxu0 %v1269
    %v1308 = vpop.f32.mrf.mxu0
    %v1309 = vadd.f32 0.0, %v1308
    %v1310 = vpop.f32.mrf.mxu0
    %v1311 = vpop.f32.mrf.mxu0
    %v1312 = vpop.f32.mrf.mxu0
    %1313 = vdwg.mxu0
    %v1314 = vmul.f32 %v1309, 0.35355338
    %v1315 = vadd.f32 %v1314, %v177
    %v1316 = vsel %vm315, %v1315, -inf
    %1317 = vmax.xlane.f32.xlu0 %v1316
    %v1318 = vpop.xlane.xlu0 %1317
    %v1319 = vsub.f32 %v1315, %v1318
    %v1320 = vmul.f32 %v1319, 1.442695
    %v1321 = vpow.pop %v1320
    %v1322 = vsel %vm315, %v1321, 0.0
    %1323 = vadd.xlane.f32.xlu0 %v1322
    %v1324 = vpop.xlane.xlu0 %1323
    %v1325 = vrcp.pop %v1324
    %v1326 = vmul.f32 %v1321, %v1325
    %v1327 = vpack.c.bf16 %v1326, %v1326
    %1328 = vrot.lane.b32.xlu0 %v955, 80
    %v1329 = vpop.permute.xlu0 %1328
    %v1331 = vsel %vm315, %v1327, 0
    %v1334 = vsel %vm382, %v1329, 0
    %1336 = vmatprep.subr.bf16.mxu0 0
    %1337 = vmatpush1.bf16.msra.mxu0 0
    %1338 = vmatprep.subr.bf16.mxu0 0
    %1339 = vmatpush1.bf16.msra.mxu0 0
    %1340 = vmatprep.subr.bf16.mxu0 0
    %1341 = vmatpush1.bf16.msra.mxu0 0
    %1342 = vmatprep.subr.bf16.mxu0 0
    %1343 = vmatpush1.bf16.msra.mxu0 0
    %1344 = vmatprep.subr.bf16.mxu0 0
    %1345 = vmatpush1.bf16.msra.mxu0 0
    %1346 = vmatprep.subr.bf16.mxu0 0
    %1347 = vmatpush1.bf16.msra.mxu0 0
    %1348 = vmatprep.subr.bf16.mxu0 0
    %1349 = vmatpush1.bf16.msra.mxu0 0
    %1350 = vmatprep.subr.bf16.mxu0 0
    %1351 = vmatpush1.bf16.msra.mxu0 %v1334
    %1352 = vmatprep.subr.bf16.mxu0 0
    %1353 = vmatpush2.bf16.msra.mxu0 0
    %1354 = vmatprep.subr.bf16.mxu0 0
    %1355 = vmatpush2.bf16.msra.mxu0 0
    %1356 = vmatprep.subr.bf16.mxu0 0
    %1357 = vmatpush2.bf16.msra.mxu0 0
    %1358 = vmatprep.subr.bf16.mxu0 0
    %1359 = vmatpush2.bf16.msra.mxu0 0
    %1360 = vmatprep.subr.bf16.mxu0 0
    %1361 = vmatpush2.bf16.msra.mxu0 0
    %1362 = vmatprep.subr.bf16.mxu0 0
    %1363 = vmatpush2.bf16.msra.mxu0 0
    %1364 = vmatprep.subr.bf16.mxu0 0
    %1365 = vmatpush2.bf16.msra.mxu0 0
    %1366 = vmatprep.subr.bf16.mxu0 0
    %1367 = vmatpush2.bf16.msra.mxu0 0
    %1368 = vmatprep.mubr.bf16.mxu0 0
    %1369 = vmatmul.mubr.bf16.gmra.mxu0 %v1331
    %v1370 = vpop.f32.mrf.mxu0
    %v1371 = vadd.f32 0.0, %v1370
    %v1372 = vpop.f32.mrf.mxu0
    %v1373 = vpop.f32.mrf.mxu0
    %v1374 = vpop.f32.mrf.mxu0
    %1375 = vdwg.mxu0
    %v1376 = vpack.c.bf16 %v1371, %v1371
    %v1378 = vsel %vm315, %v1376, 0
    %1380 = vmatprep.subr.bf16.mxu0 0
    %1381 = vmatpush1.bf16.msra.mxu0 0
    %1382 = vmatprep.subr.bf16.mxu0 0
    %1383 = vmatpush1.bf16.msra.mxu0 0
    %1384 = vmatprep.subr.bf16.mxu0 0
    %1385 = vmatpush1.bf16.msra.mxu0 0
    %1386 = vmatprep.subr.bf16.mxu0 0
    %1387 = vmatpush1.bf16.msra.mxu0 0
    %1388 = vmatprep.subr.bf16.mxu0 0
    %1389 = vmatpush1.bf16.msra.mxu0 0
    %1390 = vmatprep.subr.bf16.mxu0 0
    %1391 = vmatpush1.bf16.msra.mxu0 0
    %1392 = vmatprep.subr.bf16.mxu0 0
    %1393 = vmatpush1.bf16.msra.mxu0 0
    %1394 = vmatprep.subr.bf16.mxu0 0
    %1395 = vmatpush1.bf16.msra.mxu0 %v750
    %1396 = vmatprep.subr.bf16.mxu0 0
    %1397 = vmatpush2.bf16.msra.mxu0 0
    %1398 = vmatprep.subr.bf16.mxu0 0
    %1399 = vmatpush2.bf16.msra.mxu0 0
    %1400 = vmatprep.subr.bf16.mxu0 0
    %1401 = vmatpush2.bf16.msra.mxu0 0
    %1402 = vmatprep.subr.bf16.mxu0 0
    %1403 = vmatpush2.bf16.msra.mxu0 0
    %1404 = vmatprep.subr.bf16.mxu0 0
    %1405 = vmatpush2.bf16.msra.mxu0 0
    %1406 = vmatprep.subr.bf16.mxu0 0
    %1407 = vmatpush2.bf16.msra.mxu0 0
    %1408 = vmatprep.subr.bf16.mxu0 0
    %1409 = vmatpush2.bf16.msra.mxu0 0
    %1410 = vmatprep.subr.bf16.mxu0 0
    %1411 = vmatpush2.bf16.msra.mxu0 0
    %1412 = vmatprep.mubr.bf16.mxu0 0
    %1413 = vmatmul.mubr.bf16.gmra.mxu0 %v1378
    %v1414 = vpop.f32.mrf.mxu0
    %v1415 = vadd.f32 0.0, %v1414
    %v1416 = vpop.f32.mrf.mxu0
    %v1417 = vpop.f32.mrf.mxu0
    %v1418 = vpop.f32.mrf.mxu0
    %1419 = vdwg.mxu0
    %v1420 = vadd.f32 %v1259, %v1415
    %1421 = vrot.lane.b32.xlu0 %v954, 104
    %v1422 = vpop.permute.xlu0 %1421
    %1423 = vrot.lane.b32.xlu0 %v955, 104
    %v1424 = vpop.permute.xlu0 %1423
    %v1426 = vsel %vm315, %v1422, 0
    %v1429 = vsel %vm315, %v1424, 0
    %1431 = vmatprep.subr.bf16.mxu0 0
    %1432 = vmatpush1.bf16.xpose.msra.mxu0 0
    %1433 = vmatprep.subr.bf16.mxu0 0
    %1434 = vmatpush1.bf16.xpose.msra.mxu0 0
    %1435 = vmatprep.subr.bf16.mxu0 0
    %1436 = vmatpush1.bf16.xpose.msra.mxu0 0
    %1437 = vmatprep.subr.bf16.mxu0 0
    %1438 = vmatpush1.bf16.xpose.msra.mxu0 0
    %1439 = vmatprep.subr.bf16.mxu0 0
    %1440 = vmatpush1.bf16.xpose.msra.mxu0 0
    %1441 = vmatprep.subr.bf16.mxu0 0
    %1442 = vmatpush1.bf16.xpose.msra.mxu0 0
    %1443 = vmatprep.subr.bf16.mxu0 0
    %1444 = vmatpush1.bf16.xpose.msra.mxu0 0
    %1445 = vmatprep.subr.bf16.mxu0 0
    %1446 = vmatpush1.bf16.xpose.msra.mxu0 %v1429
    %1447 = vmatprep.subr.bf16.mxu0 0
    %1448 = vmatpush2.bf16.xpose.msra.mxu0 0
    %1449 = vmatprep.subr.bf16.mxu0 0
    %1450 = vmatpush2.bf16.xpose.msra.mxu0 0
    %1451 = vmatprep.subr.bf16.mxu0 0
    %1452 = vmatpush2.bf16.xpose.msra.mxu0 0
    %1453 = vmatprep.subr.bf16.mxu0 0
    %1454 = vmatpush2.bf16.xpose.msra.mxu0 0
    %1455 = vmatprep.subr.bf16.mxu0 0
    %1456 = vmatpush2.bf16.xpose.msra.mxu0 0
    %1457 = vmatprep.subr.bf16.mxu0 0
    %1458 = vmatpush2.bf16.xpose.msra.mxu0 0
    %1459 = vmatprep.subr.bf16.mxu0 0
    %1460 = vmatpush2.bf16.xpose.msra.mxu0 0
    %1461 = vmatprep.subr.bf16.mxu0 0
    %1462 = vmatpush2.bf16.xpose.msra.mxu0 0
    %1463 = vmatprep.mubr.bf16.mxu0 0
    %1464 = vmatmul.mubr.bf16.gmra.mxu0 %v1426
    %v1465 = vpop.f32.mrf.mxu0
    %v1466 = vadd.f32 0.0, %v1465
    %v1467 = vpop.f32.mrf.mxu0
    %v1468 = vpop.f32.mrf.mxu0
    %v1469 = vpop.f32.mrf.mxu0
    %1470 = vdwg.mxu0
    %v1471 = vmul.f32 %v1466, 0.35355338
    %v1472 = vadd.f32 %v1471, %v177
    %v1473 = vsel %vm315, %v1472, -inf
    %1474 = vmax.xlane.f32.xlu0 %v1473
    %v1475 = vpop.xlane.xlu0 %1474
    %v1476 = vsub.f32 %v1472, %v1475
    %v1477 = vmul.f32 %v1476, 1.442695
    %v1478 = vpow.pop %v1477
    %v1479 = vsel %vm315, %v1478, 0.0
    %1480 = vadd.xlane.f32.xlu0 %v1479
    %v1481 = vpop.xlane.xlu0 %1480
    %v1482 = vrcp.pop %v1481
    %v1483 = vmul.f32 %v1478, %v1482
    %v1484 = vpack.c.bf16 %v1483, %v1483
    %1485 = vrot.lane.b32.xlu0 %v955, 72
    %v1486 = vpop.permute.xlu0 %1485
    %v1488 = vsel %vm315, %v1484, 0
    %v1491 = vsel %vm382, %v1486, 0
    %1493 = vmatprep.subr.bf16.mxu0 0
    %1494 = vmatpush1.bf16.msra.mxu0 0
    %1495 = vmatprep.subr.bf16.mxu0 0
    %1496 = vmatpush1.bf16.msra.mxu0 0
    %1497 = vmatprep.subr.bf16.mxu0 0
    %1498 = vmatpush1.bf16.msra.mxu0 0
    %1499 = vmatprep.subr.bf16.mxu0 0
    %1500 = vmatpush1.bf16.msra.mxu0 0
    %1501 = vmatprep.subr.bf16.mxu0 0
    %1502 = vmatpush1.bf16.msra.mxu0 0
    %1503 = vmatprep.subr.bf16.mxu0 0
    %1504 = vmatpush1.bf16.msra.mxu0 0
    %1505 = vmatprep.subr.bf16.mxu0 0
    %1506 = vmatpush1.bf16.msra.mxu0 0
    %1507 = vmatprep.subr.bf16.mxu0 0
    %1508 = vmatpush1.bf16.msra.mxu0 %v1491
    %1509 = vmatprep.subr.bf16.mxu0 0
    %1510 = vmatpush2.bf16.msra.mxu0 0
    %1511 = vmatprep.subr.bf16.mxu0 0
    %1512 = vmatpush2.bf16.msra.mxu0 0
    %1513 = vmatprep.subr.bf16.mxu0 0
    %1514 = vmatpush2.bf16.msra.mxu0 0
    %1515 = vmatprep.subr.bf16.mxu0 0
    %1516 = vmatpush2.bf16.msra.mxu0 0
    %1517 = vmatprep.subr.bf16.mxu0 0
    %1518 = vmatpush2.bf16.msra.mxu0 0
    %1519 = vmatprep.subr.bf16.mxu0 0
    %1520 = vmatpush2.bf16.msra.mxu0 0
    %1521 = vmatprep.subr.bf16.mxu0 0
    %1522 = vmatpush2.bf16.msra.mxu0 0
    %1523 = vmatprep.subr.bf16.mxu0 0
    %1524 = vmatpush2.bf16.msra.mxu0 0
    %1525 = vmatprep.mubr.bf16.mxu0 0
    %1526 = vmatmul.mubr.bf16.gmra.mxu0 %v1488
    %v1527 = vpop.f32.mrf.mxu0
    %v1528 = vadd.f32 0.0, %v1527
    %v1529 = vpop.f32.mrf.mxu0
    %v1530 = vpop.f32.mrf.mxu0
    %v1531 = vpop.f32.mrf.mxu0
    %1532 = vdwg.mxu0
    %v1533 = vpack.c.bf16 %v1528, %v1528
    %v1535 = vsel %vm315, %v1533, 0
    %1537 = vmatprep.subr.bf16.mxu0 0
    %1538 = vmatpush1.bf16.msra.mxu0 0
    %1539 = vmatprep.subr.bf16.mxu0 0
    %1540 = vmatpush1.bf16.msra.mxu0 0
    %1541 = vmatprep.subr.bf16.mxu0 0
    %1542 = vmatpush1.bf16.msra.mxu0 0
    %1543 = vmatprep.subr.bf16.mxu0 0
    %1544 = vmatpush1.bf16.msra.mxu0 0
    %1545 = vmatprep.subr.bf16.mxu0 0
    %1546 = vmatpush1.bf16.msra.mxu0 0
    %1547 = vmatprep.subr.bf16.mxu0 0
    %1548 = vmatpush1.bf16.msra.mxu0 0
    %1549 = vmatprep.subr.bf16.mxu0 0
    %1550 = vmatpush1.bf16.msra.mxu0 0
    %1551 = vmatprep.subr.bf16.mxu0 0
    %1552 = vmatpush1.bf16.msra.mxu0 %v910
    %1553 = vmatprep.subr.bf16.mxu0 0
    %1554 = vmatpush2.bf16.msra.mxu0 0
    %1555 = vmatprep.subr.bf16.mxu0 0
    %1556 = vmatpush2.bf16.msra.mxu0 0
    %1557 = vmatprep.subr.bf16.mxu0 0
    %1558 = vmatpush2.bf16.msra.mxu0 0
    %1559 = vmatprep.subr.bf16.mxu0 0
    %1560 = vmatpush2.bf16.msra.mxu0 0
    %1561 = vmatprep.subr.bf16.mxu0 0
    %1562 = vmatpush2.bf16.msra.mxu0 0
    %1563 = vmatprep.subr.bf16.mxu0 0
    %1564 = vmatpush2.bf16.msra.mxu0 0
    %1565 = vmatprep.subr.bf16.mxu0 0
    %1566 = vmatpush2.bf16.msra.mxu0 0
    %1567 = vmatprep.subr.bf16.mxu0 0
    %1568 = vmatpush2.bf16.msra.mxu0 0
    %1569 = vmatprep.mubr.bf16.mxu0 0
    %1570 = vmatmul.mubr.bf16.gmra.mxu0 %v1535
    %v1571 = vpop.f32.mrf.mxu0
    %v1572 = vadd.f32 0.0, %v1571
    %v1573 = vpop.f32.mrf.mxu0
    %v1574 = vpop.f32.mrf.mxu0
    %v1575 = vpop.f32.mrf.mxu0
    %1576 = vdwg.mxu0
    %v1577 = vadd.f32 %v1420, %v1572
    %1578 = vst.msk [vmem:[#allocation2 + $0x8] sm:$0xff] %vm203, %v1577
    %v1579 = vld [vmem:[#allocation2] sm:$0xff]
    %v1580 = vld [vmem:[#allocation2 + $0x8] sm:$0xff]
    %v1581 = vadd.f32 %v164, %v1579
    %v1582 = vadd.f32 %v165, %v1580
    %v1583 = vsel %vm203, %v1581, 0.0
    %1584 = vadd.xlane.f32.xlu0 %v1583
    %v1585 = vpop.xlane.xlu0 %1584
    %v1586 = vsel %vm203, %v1582, 0.0
    %1587 = vadd.xlane.f32.xlu0 %v1586
    %v1588 = vpop.xlane.xlu0 %1587
    %v1589 = vrcp.pop 32.0
    %v1590 = vmul.f32 %v1585, %v1589
    %v1591 = vmul.f32 %v1588, %v1589
    %v1592 = vsub.f32 %v1581, %v1590
    %v1593 = vsub.f32 %v1582, %v1591
    %v1594 = vmul.f32 %v1592, %v1592
    %v1595 = vmul.f32 %v1593, %v1593
    %v1596 = vsel %vm203, %v1594, 0.0
    %1597 = vadd.xlane.f32.xlu0 %v1596
    %v1598 = vpop.xlane.xlu0 %1597
    %v1599 = vsel %vm203, %v1595, 0.0
    %1600 = vadd.xlane.f32.xlu0 %v1599
    %v1601 = vpop.xlane.xlu0 %1600
    %v1602 = vmul.f32 %v1598, %v1589
    %v1603 = vmul.f32 %v1601, %v1589
    %v1604 = vadd.f32 %v1602, 1e-05
    %v1605 = vadd.f32 %v1603, 1e-05
    %v1606 = vrsqrt.pop %v1604
    %v1607 = vrsqrt.pop %v1605
    %v1608 = vmul.f32 %v1592, %v1606
    %v1609 = vmul.f32 %v1593, %v1607
    %v1610 = vlaneseq
    %v1611 = vshrl.u32 %v1610, 7
    %v1612 = vsub.s32 0, %v1611
    %v1613 = vrot.slane %v170, %v1612
    %v1614 = vmul.f32 %v1608, %v1613
    %v1615 = vmul.f32 %v1609, %v1613
    %v1616 = vlaneseq
    %v1617 = vshrl.u32 %v1616, 7
    %v1618 = vsub.s32 0, %v1617
    %v1619 = vrot.slane %v171, %v1618
    %v1620 = vadd.f32 %v1614, %v1619
    %v1621 = vadd.f32 %v1615, %v1619
    %v1622 = vpack.c.bf16 %v1621, %v1620
    %v1623 = vld [vmem:[#allocation11] sm:$0xf]
    %v1624 = vld [vmem:[#allocation11 + $0x4] sm:$0xf]
    %v1625 = vld [vmem:[#allocation11 + $0x8] sm:$0xf]
    %v1626 = vld [vmem:[#allocation11 + $0xc] sm:$0xf]
    %v1631 = vunpack.c.l.b16 %v1623
    %v1632 = vunpack.c.l.b16 %v1624
    %v1633 = vunpack.c.l.b16 %v1625
    %v1634 = vunpack.c.l.b16 %v1626
    %v1635 = vpack.c.b16 %v1632, %v1631
    %v1636 = vpack.c.b16 %v1634, %v1633
    %v1640 = vsel %vm203, %v1622, 0
    %1642 = vmatprep.subr.bf16.mxu0 0
    %1643 = vmatpush1.bf16.msra.mxu0 0
    %1644 = vmatprep.subr.bf16.mxu0 0
    %1645 = vmatpush1.bf16.msra.mxu0 0
    %1646 = vmatprep.subr.bf16.mxu0 0
    %1647 = vmatpush1.bf16.msra.mxu0 0
    %1648 = vmatprep.subr.bf16.mxu0 0
    %1649 = vmatpush1.bf16.msra.mxu0 0
    %1650 = vmatprep.subr.bf16.mxu0 0
    %1651 = vmatpush1.bf16.msra.mxu0 0
    %1652 = vmatprep.subr.bf16.mxu0 0
    %1653 = vmatpush1.bf16.msra.mxu0 0
    %1654 = vmatprep.subr.bf16.mxu0 0
    %1655 = vmatpush1.bf16.msra.mxu0 %v1636
    %1656 = vmatprep.subr.bf16.mxu0 0
    %1657 = vmatpush1.bf16.msra.mxu0 %v1635
    %1658 = vmatprep.subr.bf16.mxu0 0
    %1659 = vmatpush2.bf16.msra.mxu0 0
    %1660 = vmatprep.subr.bf16.mxu0 0
    %1661 = vmatpush2.bf16.msra.mxu0 0
    %1662 = vmatprep.subr.bf16.mxu0 0
    %1663 = vmatpush2.bf16.msra.mxu0 0
    %1664 = vmatprep.subr.bf16.mxu0 0
    %1665 = vmatpush2.bf16.msra.mxu0 0
    %1666 = vmatprep.subr.bf16.mxu0 0
    %1667 = vmatpush2.bf16.msra.mxu0 0
    %1668 = vmatprep.subr.bf16.mxu0 0
    %1669 = vmatpush2.bf16.msra.mxu0 0
    %1670 = vmatprep.subr.bf16.mxu0 0
    %1671 = vmatpush2.bf16.msra.mxu0 0
    %1672 = vmatprep.subr.bf16.mxu0 0
    %1673 = vmatpush2.bf16.msra.mxu0 0
    %1674 = vmatprep.mubr.bf16.mxu0 0
    %1675 = vmatmul.mubr.bf16.gmra.mxu0 %v1640
    %v1676 = vpop.f32.mrf.mxu0
    %v1677 = vadd.f32 0.0, %v1676
    %v1678 = vpop.f32.mrf.mxu0
    %v1679 = vpop.f32.mrf.mxu0
    %v1680 = vadd.f32 0.0, %v1679
    %v1681 = vpop.f32.mrf.mxu0
    %1682 = vdwg.mxu0
    %v1683 = vpack.c.bf16 %v169, %v168
    %v1684 = vld [vmem:[#allocation13] sm:$0xf]
    %v1685 = vld [vmem:[#allocation13 + $0x4] sm:$0xf]
    %v1686 = vld [vmem:[#allocation13 + $0x8] sm:$0xf]
    %v1687 = vld [vmem:[#allocation13 + $0xc] sm:$0xf]
    %v1692 = vunpack.c.l.b16 %v1684
    %v1693 = vunpack.c.l.b16 %v1685
    %v1694 = vunpack.c.l.b16 %v1686
    %v1695 = vunpack.c.l.b16 %v1687
    %v1696 = vpack.c.b16 %v1693, %v1692
    %v1697 = vpack.c.b16 %v1695, %v1694
    %v1701 = vsel %vm203, %v1683, 0
    %1703 = vmatprep.subr.bf16.mxu0 0
    %1704 = vmatpush1.bf16.msra.mxu0 0
    %1705 = vmatprep.subr.bf16.mxu0 0
    %1706 = vmatpush1.bf16.msra.mxu0 0
    %1707 = vmatprep.subr.bf16.mxu0 0
    %1708 = vmatpush1.bf16.msra.mxu0 0
    %1709 = vmatprep.subr.bf16.mxu0 0
    %1710 = vmatpush1.bf16.msra.mxu0 0
    %1711 = vmatprep.subr.bf16.mxu0 0
    %1712 = vmatpush1.bf16.msra.mxu0 0
    %1713 = vmatprep.subr.bf16.mxu0 0
    %1714 = vmatpush1.bf16.msra.mxu0 0
    %1715 = vmatprep.subr.bf16.mxu0 0
    %1716 = vmatpush1.bf16.msra.mxu0 %v1697
    %1717 = vmatprep.subr.bf16.mxu0 0
    %1718 = vmatpush1.bf16.msra.mxu0 %v1696
    %1719 = vmatprep.subr.bf16.mxu0 0
    %1720 = vmatpush2.bf16.msra.mxu0 0
    %1721 = vmatprep.subr.bf16.mxu0 0
    %1722 = vmatpush2.bf16.msra.mxu0 0
    %1723 = vmatprep.subr.bf16.mxu0 0
    %1724 = vmatpush2.bf16.msra.mxu0 0
    %1725 = vmatprep.subr.bf16.mxu0 0
    %1726 = vmatpush2.bf16.msra.mxu0 0
    %1727 = vmatprep.subr.bf16.mxu0 0
    %1728 = vmatpush2.bf16.msra.mxu0 0
    %1729 = vmatprep.subr.bf16.mxu0 0
    %1730 = vmatpush2.bf16.msra.mxu0 0
    %1731 = vmatprep.subr.bf16.mxu0 0
    %1732 = vmatpush2.bf16.msra.mxu0 0
    %1733 = vmatprep.subr.bf16.mxu0 0
    %1734 = vmatpush2.bf16.msra.mxu0 0
    %1735 = vmatprep.mubr.bf16.mxu0 0
    %1736 = vmatmul.mubr.bf16.gmra.mxu0 %v1701
    %v1737 = vpop.f32.mrf.mxu0
    %v1738 = vadd.f32 0.0, %v1737
    %v1739 = vpop.f32.mrf.mxu0
    %v1740 = vpop.f32.mrf.mxu0
    %v1741 = vadd.f32 0.0, %v1740
    %v1742 = vpop.f32.mrf.mxu0
    %1743 = vdwg.mxu0
    %v1744 = vpack.c.bf16 %v1680, %v1677
    %v1745 = vpack.c.bf16 %v1741, %v1738
    %v1746 = vld [vmem:[#allocation14] sm:$0xf]
    %v1747 = vld [vmem:[#allocation14 + $0x4] sm:$0xf]
    %v1748 = vld [vmem:[#allocation14 + $0x8] sm:$0xf]
    %v1749 = vld [vmem:[#allocation14 + $0xc] sm:$0xf]
    %v1751 = vsel %vm315, %v1744, 0
    %v1754 = vsel %vm315, %v1745, 0
    %1756 = vmatprep.subr.bf16.mxu0 0
    %1757 = vmatpush1.bf16.xpose.msra.mxu0 0
    %1758 = vmatprep.subr.bf16.mxu0 0
    %1759 = vmatpush1.bf16.xpose.msra.mxu0 0
    %1760 = vmatprep.subr.bf16.mxu0 0
    %1761 = vmatpush1.bf16.xpose.msra.mxu0 0
    %1762 = vmatprep.subr.bf16.mxu0 0
    %1763 = vmatpush1.bf16.xpose.msra.mxu0 0
    %1764 = vmatprep.subr.bf16.mxu0 0
    %1765 = vmatpush1.bf16.xpose.msra.mxu0 0
    %1766 = vmatprep.subr.bf16.mxu0 0
    %1767 = vmatpush1.bf16.xpose.msra.mxu0 0
    %1768 = vmatprep.subr.bf16.mxu0 0
    %1769 = vmatpush1.bf16.xpose.msra.mxu0 0
    %1770 = vmatprep.subr.bf16.mxu0 0
    %1771 = vmatpush1.bf16.xpose.msra.mxu0 %v1754
    %1772 = vmatprep.subr.bf16.mxu0 0
    %1773 = vmatpush2.bf16.xpose.msra.mxu0 0
    %1774 = vmatprep.subr.bf16.mxu0 0
    %1775 = vmatpush2.bf16.xpose.msra.mxu0 0
    %1776 = vmatprep.subr.bf16.mxu0 0
    %1777 = vmatpush2.bf16.xpose.msra.mxu0 0
    %1778 = vmatprep.subr.bf16.mxu0 0
    %1779 = vmatpush2.bf16.xpose.msra.mxu0 0
    %1780 = vmatprep.subr.bf16.mxu0 0
    %1781 = vmatpush2.bf16.xpose.msra.mxu0 0
    %1782 = vmatprep.subr.bf16.mxu0 0
    %1783 = vmatpush2.bf16.xpose.msra.mxu0 0
    %1784 = vmatprep.subr.bf16.mxu0 0
    %1785 = vmatpush2.bf16.xpose.msra.mxu0 0
    %1786 = vmatprep.subr.bf16.mxu0 0
    %1787 = vmatpush2.bf16.xpose.msra.mxu0 0
    %1788 = vmatprep.mubr.bf16.mxu0 0
    %1789 = vmatmul.mubr.bf16.gmra.mxu0 %v1751
    %v1790 = vpop.f32.mrf.mxu0
    %v1791 = vadd.f32 0.0, %v1790
    %v1792 = vpop.f32.mrf.mxu0
    %v1793 = vpop.f32.mrf.mxu0
    %v1794 = vpop.f32.mrf.mxu0
    %1795 = vdwg.mxu0
    %v1796 = vmul.f32 %v1791, 0.35355338
    %v1797 = vadd.f32 %v1796, %v181
    %v1798 = vsel %vm315, %v1797, -inf
    %1799 = vmax.xlane.f32.xlu0 %v1798
    %v1800 = vpop.xlane.xlu0 %1799
    %v1801 = vsub.f32 %v1797, %v1800
    %v1802 = vmul.f32 %v1801, 1.442695
    %v1803 = vpow.pop %v1802
    %v1804 = vsel %vm315, %v1803, 0.0
    %1805 = vadd.xlane.f32.xlu0 %v1804
    %v1806 = vpop.xlane.xlu0 %1805
    %v1807 = vrcp.pop %v1806
    %v1808 = vmul.f32 %v1803, %v1807
    %v1809 = vpack.c.bf16 %v1808, %v1808
    %1811 = vrot.lane.b32.xlu0 %v1745, 96
    %v1812 = vpop.permute.xlu0 %1811
    %v1814 = vsel %vm315, %v1809, 0
    %v1817 = vsel %vm382, %v1812, 0
    %1819 = vmatprep.subr.bf16.mxu0 0
    %1820 = vmatpush1.bf16.msra.mxu0 0
    %1821 = vmatprep.subr.bf16.mxu0 0
    %1822 = vmatpush1.bf16.msra.mxu0 0
    %1823 = vmatprep.subr.bf16.mxu0 0
    %1824 = vmatpush1.bf16.msra.mxu0 0
    %1825 = vmatprep.subr.bf16.mxu0 0
    %1826 = vmatpush1.bf16.msra.mxu0 0
    %1827 = vmatprep.subr.bf16.mxu0 0
    %1828 = vmatpush1.bf16.msra.mxu0 0
    %1829 = vmatprep.subr.bf16.mxu0 0
    %1830 = vmatpush1.bf16.msra.mxu0 0
    %1831 = vmatprep.subr.bf16.mxu0 0
    %1832 = vmatpush1.bf16.msra.mxu0 0
    %1833 = vmatprep.subr.bf16.mxu0 0
    %1834 = vmatpush1.bf16.msra.mxu0 %v1817
    %1835 = vmatprep.subr.bf16.mxu0 0
    %1836 = vmatpush2.bf16.msra.mxu0 0
    %1837 = vmatprep.subr.bf16.mxu0 0
    %1838 = vmatpush2.bf16.msra.mxu0 0
    %1839 = vmatprep.subr.bf16.mxu0 0
    %1840 = vmatpush2.bf16.msra.mxu0 0
    %1841 = vmatprep.subr.bf16.mxu0 0
    %1842 = vmatpush2.bf16.msra.mxu0 0
    %1843 = vmatprep.subr.bf16.mxu0 0
    %1844 = vmatpush2.bf16.msra.mxu0 0
    %1845 = vmatprep.subr.bf16.mxu0 0
    %1846 = vmatpush2.bf16.msra.mxu0 0
    %1847 = vmatprep.subr.bf16.mxu0 0
    %1848 = vmatpush2.bf16.msra.mxu0 0
    %1849 = vmatprep.subr.bf16.mxu0 0
    %1850 = vmatpush2.bf16.msra.mxu0 0
    %1851 = vmatprep.mubr.bf16.mxu0 0
    %1852 = vmatmul.mubr.bf16.gmra.mxu0 %v1814
    %v1853 = vpop.f32.mrf.mxu0
    %v1854 = vadd.f32 0.0, %v1853
    %v1855 = vpop.f32.mrf.mxu0
    %v1856 = vpop.f32.mrf.mxu0
    %v1857 = vpop.f32.mrf.mxu0
    %1858 = vdwg.mxu0
    %v1859 = vpack.c.bf16 %v1854, %v1854
    %1861 = vrot.lane.b32.xlu0 %v1744, 120
    %v1862 = vpop.permute.xlu0 %1861
    %1863 = vrot.lane.b32.xlu0 %v1745, 120
    %v1864 = vpop.permute.xlu0 %1863
    %v1866 = vsel %vm315, %v1862, 0
    %v1869 = vsel %vm315, %v1864, 0
    %1871 = vmatprep.subr.bf16.mxu0 0
    %1872 = vmatpush1.bf16.xpose.msra.mxu0 0
    %1873 = vmatprep.subr.bf16.mxu0 0
    %1874 = vmatpush1.bf16.xpose.msra.mxu0 0
    %1875 = vmatprep.subr.bf16.mxu0 0
    %1876 = vmatpush1.bf16.xpose.msra.mxu0 0
    %1877 = vmatprep.subr.bf16.mxu0 0
    %1878 = vmatpush1.bf16.xpose.msra.mxu0 0
    %1879 = vmatprep.subr.bf16.mxu0 0
    %1880 = vmatpush1.bf16.xpose.msra.mxu0 0
    %1881 = vmatprep.subr.bf16.mxu0 0
    %1882 = vmatpush1.bf16.xpose.msra.mxu0 0
    %1883 = vmatprep.subr.bf16.mxu0 0
    %1884 = vmatpush1.bf16.xpose.msra.mxu0 0
    %1885 = vmatprep.subr.bf16.mxu0 0
    %1886 = vmatpush1.bf16.xpose.msra.mxu0 %v1869
    %1887 = vmatprep.subr.bf16.mxu0 0
    %1888 = vmatpush2.bf16.xpose.msra.mxu0 0
    %1889 = vmatprep.subr.bf16.mxu0 0
    %1890 = vmatpush2.bf16.xpose.msra.mxu0 0
    %1891 = vmatprep.subr.bf16.mxu0 0
    %1892 = vmatpush2.bf16.xpose.msra.mxu0 0
    %1893 = vmatprep.subr.bf16.mxu0 0
    %1894 = vmatpush2.bf16.xpose.msra.mxu0 0
    %1895 = vmatprep.subr.bf16.mxu0 0
    %1896 = vmatpush2.bf16.xpose.msra.mxu0 0
    %1897 = vmatprep.subr.bf16.mxu0 0
    %1898 = vmatpush2.bf16.xpose.msra.mxu0 0
    %1899 = vmatprep.subr.bf16.mxu0 0
    %1900 = vmatpush2.bf16.xpose.msra.mxu0 0
    %1901 = vmatprep.subr.bf16.mxu0 0
    %1902 = vmatpush2.bf16.xpose.msra.mxu0 0
    %1903 = vmatprep.mubr.bf16.mxu0 0
    %1904 = vmatmul.mubr.bf16.gmra.mxu0 %v1866
    %v1905 = vpop.f32.mrf.mxu0
    %v1906 = vadd.f32 0.0, %v1905
    %v1907 = vpop.f32.mrf.mxu0
    %v1908 = vpop.f32.mrf.mxu0
    %v1909 = vpop.f32.mrf.mxu0
    %1910 = vdwg.mxu0
    %v1911 = vmul.f32 %v1906, 0.35355338
    %v1912 = vadd.f32 %v1911, %v181
    %v1913 = vsel %vm315, %v1912, -inf
    %1914 = vmax.xlane.f32.xlu0 %v1913
    %v1915 = vpop.xlane.xlu0 %1914
    %v1916 = vsub.f32 %v1912, %v1915
    %v1917 = vmul.f32 %v1916, 1.442695
    %v1918 = vpow.pop %v1917
    %v1919 = vsel %vm315, %v1918, 0.0
    %1920 = vadd.xlane.f32.xlu0 %v1919
    %v1921 = vpop.xlane.xlu0 %1920
    %v1922 = vrcp.pop %v1921
    %v1923 = vmul.f32 %v1918, %v1922
    %v1924 = vpack.c.bf16 %v1923, %v1923
    %1925 = vrot.lane.b32.xlu0 %v1745, 88
    %v1926 = vpop.permute.xlu0 %1925
    %v1928 = vsel %vm315, %v1924, 0
    %v1931 = vsel %vm382, %v1926, 0
    %1933 = vmatprep.subr.bf16.mxu0 0
    %1934 = vmatpush1.bf16.msra.mxu0 0
    %1935 = vmatprep.subr.bf16.mxu0 0
    %1936 = vmatpush1.bf16.msra.mxu0 0
    %1937 = vmatprep.subr.bf16.mxu0 0
    %1938 = vmatpush1.bf16.msra.mxu0 0
    %1939 = vmatprep.subr.bf16.mxu0 0
    %1940 = vmatpush1.bf16.msra.mxu0 0
    %1941 = vmatprep.subr.bf16.mxu0 0
    %1942 = vmatpush1.bf16.msra.mxu0 0
    %1943 = vmatprep.subr.bf16.mxu0 0
    %1944 = vmatpush1.bf16.msra.mxu0 0
    %1945 = vmatprep.subr.bf16.mxu0 0
    %1946 = vmatpush1.bf16.msra.mxu0 0
    %1947 = vmatprep.subr.bf16.mxu0 0
    %1948 = vmatpush1.bf16.msra.mxu0 %v1931
    %1949 = vmatprep.subr.bf16.mxu0 0
    %1950 = vmatpush2.bf16.msra.mxu0 0
    %1951 = vmatprep.subr.bf16.mxu0 0
    %1952 = vmatpush2.bf16.msra.mxu0 0
    %1953 = vmatprep.subr.bf16.mxu0 0
    %1954 = vmatpush2.bf16.msra.mxu0 0
    %1955 = vmatprep.subr.bf16.mxu0 0
    %1956 = vmatpush2.bf16.msra.mxu0 0
    %1957 = vmatprep.subr.bf16.mxu0 0
    %1958 = vmatpush2.bf16.msra.mxu0 0
    %1959 = vmatprep.subr.bf16.mxu0 0
    %1960 = vmatpush2.bf16.msra.mxu0 0
    %1961 = vmatprep.subr.bf16.mxu0 0
    %1962 = vmatpush2.bf16.msra.mxu0 0
    %1963 = vmatprep.subr.bf16.mxu0 0
    %1964 = vmatpush2.bf16.msra.mxu0 0
    %1965 = vmatprep.mubr.bf16.mxu0 0
    %1966 = vmatmul.mubr.bf16.gmra.mxu0 %v1928
    %v1967 = vpop.f32.mrf.mxu0
    %v1968 = vadd.f32 0.0, %v1967
    %v1969 = vpop.f32.mrf.mxu0
    %v1970 = vpop.f32.mrf.mxu0
    %v1971 = vpop.f32.mrf.mxu0
    %1972 = vdwg.mxu0
    %v1973 = vpack.c.bf16 %v1968, %v1968
    %v1975 = vsel %vm315, %v1973, 0
    %v1978 = vsel %vm382, %v1747, 0
    %1980 = vmatprep.subr.bf16.mxu0 0
    %1981 = vmatpush1.bf16.msra.mxu0 0
    %1982 = vmatprep.subr.bf16.mxu0 0
    %1983 = vmatpush1.bf16.msra.mxu0 0
    %1984 = vmatprep.subr.bf16.mxu0 0
    %1985 = vmatpush1.bf16.msra.mxu0 0
    %1986 = vmatprep.subr.bf16.mxu0 0
    %1987 = vmatpush1.bf16.msra.mxu0 0
    %1988 = vmatprep.subr.bf16.mxu0 0
    %1989 = vmatpush1.bf16.msra.mxu0 0
    %1990 = vmatprep.subr.bf16.mxu0 0
    %1991 = vmatpush1.bf16.msra.mxu0 0
    %1992 = vmatprep.subr.bf16.mxu0 0
    %1993 = vmatpush1.bf16.msra.mxu0 0
    %1994 = vmatprep.subr.bf16.mxu0 0
    %1995 = vmatpush1.bf16.msra.mxu0 %v1978
    %1996 = vmatprep.subr.bf16.mxu0 0
    %1997 = vmatpush2.bf16.msra.mxu0 0
    %1998 = vmatprep.subr.bf16.mxu0 0
    %1999 = vmatpush2.bf16.msra.mxu0 0
    %2000 = vmatprep.subr.bf16.mxu0 0
    %2001 = vmatpush2.bf16.msra.mxu0 0
    %2002 = vmatprep.subr.bf16.mxu0 0
    %2003 = vmatpush2.bf16.msra.mxu0 0
    %2004 = vmatprep.subr.bf16.mxu0 0
    %2005 = vmatpush2.bf16.msra.mxu0 0
    %2006 = vmatprep.subr.bf16.mxu0 0
    %2007 = vmatpush2.bf16.msra.mxu0 0
    %2008 = vmatprep.subr.bf16.mxu0 0
    %2009 = vmatpush2.bf16.msra.mxu0 0
    %2010 = vmatprep.subr.bf16.mxu0 0
    %2011 = vmatpush2.bf16.msra.mxu0 0
    %2012 = vmatprep.mubr.bf16.mxu0 0
    %2013 = vmatmul.mubr.bf16.gmra.mxu0 %v1975
    %v2014 = vpop.f32.mrf.mxu0
    %v2015 = vadd.f32 0.0, %v2014
    %v2016 = vpop.f32.mrf.mxu0
    %v2017 = vpop.f32.mrf.mxu0
    %v2018 = vpop.f32.mrf.mxu0
    %2019 = vdwg.mxu0
    %v2021 = vsel %vm315, %v1859, 0
    %v2024 = vsel %vm382, %v1746, 0
    %2026 = vmatprep.subr.bf16.mxu0 0
    %2027 = vmatpush1.bf16.msra.mxu0 0
    %2028 = vmatprep.subr.bf16.mxu0 0
    %2029 = vmatpush1.bf16.msra.mxu0 0
    %2030 = vmatprep.subr.bf16.mxu0 0
    %2031 = vmatpush1.bf16.msra.mxu0 0
    %2032 = vmatprep.subr.bf16.mxu0 0
    %2033 = vmatpush1.bf16.msra.mxu0 0
    %2034 = vmatprep.subr.bf16.mxu0 0
    %2035 = vmatpush1.bf16.msra.mxu0 0
    %2036 = vmatprep.subr.bf16.mxu0 0
    %2037 = vmatpush1.bf16.msra.mxu0 0
    %2038 = vmatprep.subr.bf16.mxu0 0
    %2039 = vmatpush1.bf16.msra.mxu0 0
    %2040 = vmatprep.subr.bf16.mxu0 0
    %2041 = vmatpush1.bf16.msra.mxu0 %v2024
    %2042 = vmatprep.subr.bf16.mxu0 0
    %2043 = vmatpush2.bf16.msra.mxu0 0
    %2044 = vmatprep.subr.bf16.mxu0 0
    %2045 = vmatpush2.bf16.msra.mxu0 0
    %2046 = vmatprep.subr.bf16.mxu0 0
    %2047 = vmatpush2.bf16.msra.mxu0 0
    %2048 = vmatprep.subr.bf16.mxu0 0
    %2049 = vmatpush2.bf16.msra.mxu0 0
    %2050 = vmatprep.subr.bf16.mxu0 0
    %2051 = vmatpush2.bf16.msra.mxu0 0
    %2052 = vmatprep.subr.bf16.mxu0 0
    %2053 = vmatpush2.bf16.msra.mxu0 0
    %2054 = vmatprep.subr.bf16.mxu0 0
    %2055 = vmatpush2.bf16.msra.mxu0 0
    %2056 = vmatprep.subr.bf16.mxu0 0
    %2057 = vmatpush2.bf16.msra.mxu0 0
    %2058 = vmatprep.mubr.bf16.mxu0 0
    %2059 = vmatmul.mubr.bf16.gmra.mxu0 %v2021
    %v2060 = vpop.f32.mrf.mxu0
    %v2061 = vadd.f32 %v2015, %v2060
    %v2062 = vpop.f32.mrf.mxu0
    %v2063 = vpop.f32.mrf.mxu0
    %v2064 = vpop.f32.mrf.mxu0
    %2065 = vdwg.mxu0
    %2066 = vrot.lane.b32.xlu0 %v1744, 112
    %v2067 = vpop.permute.xlu0 %2066
    %2068 = vrot.lane.b32.xlu0 %v1745, 112
    %v2069 = vpop.permute.xlu0 %2068
    %v2071 = vsel %vm315, %v2067, 0
    %v2074 = vsel %vm315, %v2069, 0
    %2076 = vmatprep.subr.bf16.mxu0 0
    %2077 = vmatpush1.bf16.xpose.msra.mxu0 0
    %2078 = vmatprep.subr.bf16.mxu0 0
    %2079 = vmatpush1.bf16.xpose.msra.mxu0 0
    %2080 = vmatprep.subr.bf16.mxu0 0
    %2081 = vmatpush1.bf16.xpose.msra.mxu0 0
    %2082 = vmatprep.subr.bf16.mxu0 0
    %2083 = vmatpush1.bf16.xpose.msra.mxu0 0
    %2084 = vmatprep.subr.bf16.mxu0 0
    %2085 = vmatpush1.bf16.xpose.msra.mxu0 0
    %2086 = vmatprep.subr.bf16.mxu0 0
    %2087 = vmatpush1.bf16.xpose.msra.mxu0 0
    %2088 = vmatprep.subr.bf16.mxu0 0
    %2089 = vmatpush1.bf16.xpose.msra.mxu0 0
    %2090 = vmatprep.subr.bf16.mxu0 0
    %2091 = vmatpush1.bf16.xpose.msra.mxu0 %v2074
    %2092 = vmatprep.subr.bf16.mxu0 0
    %2093 = vmatpush2.bf16.xpose.msra.mxu0 0
    %2094 = vmatprep.subr.bf16.mxu0 0
    %2095 = vmatpush2.bf16.xpose.msra.mxu0 0
    %2096 = vmatprep.subr.bf16.mxu0 0
    %2097 = vmatpush2.bf16.xpose.msra.mxu0 0
    %2098 = vmatprep.subr.bf16.mxu0 0
    %2099 = vmatpush2.bf16.xpose.msra.mxu0 0
    %2100 = vmatprep.subr.bf16.mxu0 0
    %2101 = vmatpush2.bf16.xpose.msra.mxu0 0
    %2102 = vmatprep.subr.bf16.mxu0 0
    %2103 = vmatpush2.bf16.xpose.msra.mxu0 0
    %2104 = vmatprep.subr.bf16.mxu0 0
    %2105 = vmatpush2.bf16.xpose.msra.mxu0 0
    %2106 = vmatprep.subr.bf16.mxu0 0
    %2107 = vmatpush2.bf16.xpose.msra.mxu0 0
    %2108 = vmatprep.mubr.bf16.mxu0 0
    %2109 = vmatmul.mubr.bf16.gmra.mxu0 %v2071
    %v2110 = vpop.f32.mrf.mxu0
    %v2111 = vadd.f32 0.0, %v2110
    %v2112 = vpop.f32.mrf.mxu0
    %v2113 = vpop.f32.mrf.mxu0
    %v2114 = vpop.f32.mrf.mxu0
    %2115 = vdwg.mxu0
    %v2116 = vmul.f32 %v2111, 0.35355338
    %v2117 = vadd.f32 %v2116, %v181
    %v2118 = vsel %vm315, %v2117, -inf
    %2119 = vmax.xlane.f32.xlu0 %v2118
    %v2120 = vpop.xlane.xlu0 %2119
    %v2121 = vsub.f32 %v2117, %v2120
    %v2122 = vmul.f32 %v2121, 1.442695
    %v2123 = vpow.pop %v2122
    %v2124 = vsel %vm315, %v2123, 0.0
    %2125 = vadd.xlane.f32.xlu0 %v2124
    %v2126 = vpop.xlane.xlu0 %2125
    %v2127 = vrcp.pop %v2126
    %v2128 = vmul.f32 %v2123, %v2127
    %v2129 = vpack.c.bf16 %v2128, %v2128
    %2130 = vrot.lane.b32.xlu0 %v1745, 80
    %v2131 = vpop.permute.xlu0 %2130
    %v2133 = vsel %vm315, %v2129, 0
    %v2136 = vsel %vm382, %v2131, 0
    %2138 = vmatprep.subr.bf16.mxu0 0
    %2139 = vmatpush1.bf16.msra.mxu0 0
    %2140 = vmatprep.subr.bf16.mxu0 0
    %2141 = vmatpush1.bf16.msra.mxu0 0
    %2142 = vmatprep.subr.bf16.mxu0 0
    %2143 = vmatpush1.bf16.msra.mxu0 0
    %2144 = vmatprep.subr.bf16.mxu0 0
    %2145 = vmatpush1.bf16.msra.mxu0 0
    %2146 = vmatprep.subr.bf16.mxu0 0
    %2147 = vmatpush1.bf16.msra.mxu0 0
    %2148 = vmatprep.subr.bf16.mxu0 0
    %2149 = vmatpush1.bf16.msra.mxu0 0
    %2150 = vmatprep.subr.bf16.mxu0 0
    %2151 = vmatpush1.bf16.msra.mxu0 0
    %2152 = vmatprep.subr.bf16.mxu0 0
    %2153 = vmatpush1.bf16.msra.mxu0 %v2136
    %2154 = vmatprep.subr.bf16.mxu0 0
    %2155 = vmatpush2.bf16.msra.mxu0 0
    %2156 = vmatprep.subr.bf16.mxu0 0
    %2157 = vmatpush2.bf16.msra.mxu0 0
    %2158 = vmatprep.subr.bf16.mxu0 0
    %2159 = vmatpush2.bf16.msra.mxu0 0
    %2160 = vmatprep.subr.bf16.mxu0 0
    %2161 = vmatpush2.bf16.msra.mxu0 0
    %2162 = vmatprep.subr.bf16.mxu0 0
    %2163 = vmatpush2.bf16.msra.mxu0 0
    %2164 = vmatprep.subr.bf16.mxu0 0
    %2165 = vmatpush2.bf16.msra.mxu0 0
    %2166 = vmatprep.subr.bf16.mxu0 0
    %2167 = vmatpush2.bf16.msra.mxu0 0
    %2168 = vmatprep.subr.bf16.mxu0 0
    %2169 = vmatpush2.bf16.msra.mxu0 0
    %2170 = vmatprep.mubr.bf16.mxu0 0
    %2171 = vmatmul.mubr.bf16.gmra.mxu0 %v2133
    %v2172 = vpop.f32.mrf.mxu0
    %v2173 = vadd.f32 0.0, %v2172
    %v2174 = vpop.f32.mrf.mxu0
    %v2175 = vpop.f32.mrf.mxu0
    %v2176 = vpop.f32.mrf.mxu0
    %2177 = vdwg.mxu0
    %v2178 = vpack.c.bf16 %v2173, %v2173
    %v2180 = vsel %vm315, %v2178, 0
    %v2183 = vsel %vm382, %v1748, 0
    %2185 = vmatprep.subr.bf16.mxu0 0
    %2186 = vmatpush1.bf16.msra.mxu0 0
    %2187 = vmatprep.subr.bf16.mxu0 0
    %2188 = vmatpush1.bf16.msra.mxu0 0
    %2189 = vmatprep.subr.bf16.mxu0 0
    %2190 = vmatpush1.bf16.msra.mxu0 0
    %2191 = vmatprep.subr.bf16.mxu0 0
    %2192 = vmatpush1.bf16.msra.mxu0 0
    %2193 = vmatprep.subr.bf16.mxu0 0
    %2194 = vmatpush1.bf16.msra.mxu0 0
    %2195 = vmatprep.subr.bf16.mxu0 0
    %2196 = vmatpush1.bf16.msra.mxu0 0
    %2197 = vmatprep.subr.bf16.mxu0 0
    %2198 = vmatpush1.bf16.msra.mxu0 0
    %2199 = vmatprep.subr.bf16.mxu0 0
    %2200 = vmatpush1.bf16.msra.mxu0 %v2183
    %2201 = vmatprep.subr.bf16.mxu0 0
    %2202 = vmatpush2.bf16.msra.mxu0 0
    %2203 = vmatprep.subr.bf16.mxu0 0
    %2204 = vmatpush2.bf16.msra.mxu0 0
    %2205 = vmatprep.subr.bf16.mxu0 0
    %2206 = vmatpush2.bf16.msra.mxu0 0
    %2207 = vmatprep.subr.bf16.mxu0 0
    %2208 = vmatpush2.bf16.msra.mxu0 0
    %2209 = vmatprep.subr.bf16.mxu0 0
    %2210 = vmatpush2.bf16.msra.mxu0 0
    %2211 = vmatprep.subr.bf16.mxu0 0
    %2212 = vmatpush2.bf16.msra.mxu0 0
    %2213 = vmatprep.subr.bf16.mxu0 0
    %2214 = vmatpush2.bf16.msra.mxu0 0
    %2215 = vmatprep.subr.bf16.mxu0 0
    %2216 = vmatpush2.bf16.msra.mxu0 0
    %2217 = vmatprep.mubr.bf16.mxu0 0
    %2218 = vmatmul.mubr.bf16.gmra.mxu0 %v2180
    %v2219 = vpop.f32.mrf.mxu0
    %v2220 = vadd.f32 0.0, %v2219
    %v2221 = vpop.f32.mrf.mxu0
    %v2222 = vpop.f32.mrf.mxu0
    %v2223 = vpop.f32.mrf.mxu0
    %2224 = vdwg.mxu0
    %v2225 = vadd.f32 %v2061, %v2220
    %2226 = vrot.lane.b32.xlu0 %v1744, 104
    %v2227 = vpop.permute.xlu0 %2226
    %2228 = vrot.lane.b32.xlu0 %v1745, 104
    %v2229 = vpop.permute.xlu0 %2228
    %v2231 = vsel %vm315, %v2227, 0
    %v2234 = vsel %vm315, %v2229, 0
    %2236 = vmatprep.subr.bf16.mxu0 0
    %2237 = vmatpush1.bf16.xpose.msra.mxu0 0
    %2238 = vmatprep.subr.bf16.mxu0 0
    %2239 = vmatpush1.bf16.xpose.msra.mxu0 0
    %2240 = vmatprep.subr.bf16.mxu0 0
    %2241 = vmatpush1.bf16.xpose.msra.mxu0 0
    %2242 = vmatprep.subr.bf16.mxu0 0
    %2243 = vmatpush1.bf16.xpose.msra.mxu0 0
    %2244 = vmatprep.subr.bf16.mxu0 0
    %2245 = vmatpush1.bf16.xpose.msra.mxu0 0
    %2246 = vmatprep.subr.bf16.mxu0 0
    %2247 = vmatpush1.bf16.xpose.msra.mxu0 0
    %2248 = vmatprep.subr.bf16.mxu0 0
    %2249 = vmatpush1.bf16.xpose.msra.mxu0 0
    %2250 = vmatprep.subr.bf16.mxu0 0
    %2251 = vmatpush1.bf16.xpose.msra.mxu0 %v2234
    %2252 = vmatprep.subr.bf16.mxu0 0
    %2253 = vmatpush2.bf16.xpose.msra.mxu0 0
    %2254 = vmatprep.subr.bf16.mxu0 0
    %2255 = vmatpush2.bf16.xpose.msra.mxu0 0
    %2256 = vmatprep.subr.bf16.mxu0 0
    %2257 = vmatpush2.bf16.xpose.msra.mxu0 0
    %2258 = vmatprep.subr.bf16.mxu0 0
    %2259 = vmatpush2.bf16.xpose.msra.mxu0 0
    %2260 = vmatprep.subr.bf16.mxu0 0
    %2261 = vmatpush2.bf16.xpose.msra.mxu0 0
    %2262 = vmatprep.subr.bf16.mxu0 0
    %2263 = vmatpush2.bf16.xpose.msra.mxu0 0
    %2264 = vmatprep.subr.bf16.mxu0 0
    %2265 = vmatpush2.bf16.xpose.msra.mxu0 0
    %2266 = vmatprep.subr.bf16.mxu0 0
    %2267 = vmatpush2.bf16.xpose.msra.mxu0 0
    %2268 = vmatprep.mubr.bf16.mxu0 0
    %2269 = vmatmul.mubr.bf16.gmra.mxu0 %v2231
    %v2270 = vpop.f32.mrf.mxu0
    %v2271 = vadd.f32 0.0, %v2270
    %v2272 = vpop.f32.mrf.mxu0
    %v2273 = vpop.f32.mrf.mxu0
    %v2274 = vpop.f32.mrf.mxu0
    %2275 = vdwg.mxu0
    %v2276 = vmul.f32 %v2271, 0.35355338
    %v2277 = vadd.f32 %v2276, %v181
    %v2278 = vsel %vm315, %v2277, -inf
    %2279 = vmax.xlane.f32.xlu0 %v2278
    %v2280 = vpop.xlane.xlu0 %2279
    %v2281 = vsub.f32 %v2277, %v2280
    %v2282 = vmul.f32 %v2281, 1.442695
    %v2283 = vpow.pop %v2282
    %v2284 = vsel %vm315, %v2283, 0.0
    %2285 = vadd.xlane.f32.xlu0 %v2284
    %v2286 = vpop.xlane.xlu0 %2285
    %v2287 = vrcp.pop %v2286
    %v2288 = vmul.f32 %v2283, %v2287
    %v2289 = vpack.c.bf16 %v2288, %v2288
    %2290 = vrot.lane.b32.xlu0 %v1745, 72
    %v2291 = vpop.permute.xlu0 %2290
    %v2293 = vsel %vm315, %v2289, 0
    %v2296 = vsel %vm382, %v2291, 0
    %2298 = vmatprep.subr.bf16.mxu0 0
    %2299 = vmatpush1.bf16.msra.mxu0 0
    %2300 = vmatprep.subr.bf16.mxu0 0
    %2301 = vmatpush1.bf16.msra.mxu0 0
    %2302 = vmatprep.subr.bf16.mxu0 0
    %2303 = vmatpush1.bf16.msra.mxu0 0
    %2304 = vmatprep.subr.bf16.mxu0 0
    %2305 = vmatpush1.bf16.msra.mxu0 0
    %2306 = vmatprep.subr.bf16.mxu0 0
    %2307 = vmatpush1.bf16.msra.mxu0 0
    %2308 = vmatprep.subr.bf16.mxu0 0
    %2309 = vmatpush1.bf16.msra.mxu0 0
    %2310 = vmatprep.subr.bf16.mxu0 0
    %2311 = vmatpush1.bf16.msra.mxu0 0
    %2312 = vmatprep.subr.bf16.mxu0 0
    %2313 = vmatpush1.bf16.msra.mxu0 %v2296
    %2314 = vmatprep.subr.bf16.mxu0 0
    %2315 = vmatpush2.bf16.msra.mxu0 0
    %2316 = vmatprep.subr.bf16.mxu0 0
    %2317 = vmatpush2.bf16.msra.mxu0 0
    %2318 = vmatprep.subr.bf16.mxu0 0
    %2319 = vmatpush2.bf16.msra.mxu0 0
    %2320 = vmatprep.subr.bf16.mxu0 0
    %2321 = vmatpush2.bf16.msra.mxu0 0
    %2322 = vmatprep.subr.bf16.mxu0 0
    %2323 = vmatpush2.bf16.msra.mxu0 0
    %2324 = vmatprep.subr.bf16.mxu0 0
    %2325 = vmatpush2.bf16.msra.mxu0 0
    %2326 = vmatprep.subr.bf16.mxu0 0
    %2327 = vmatpush2.bf16.msra.mxu0 0
    %2328 = vmatprep.subr.bf16.mxu0 0
    %2329 = vmatpush2.bf16.msra.mxu0 0
    %2330 = vmatprep.mubr.bf16.mxu0 0
    %2331 = vmatmul.mubr.bf16.gmra.mxu0 %v2293
    %v2332 = vpop.f32.mrf.mxu0
    %v2333 = vadd.f32 0.0, %v2332
    %v2334 = vpop.f32.mrf.mxu0
    %v2335 = vpop.f32.mrf.mxu0
    %v2336 = vpop.f32.mrf.mxu0
    %2337 = vdwg.mxu0
    %v2338 = vpack.c.bf16 %v2333, %v2333
    %v2340 = vsel %vm315, %v2338, 0
    %v2343 = vsel %vm382, %v1749, 0
    %2345 = vmatprep.subr.bf16.mxu0 0
    %2346 = vmatpush1.bf16.msra.mxu0 0
    %2347 = vmatprep.subr.bf16.mxu0 0
    %2348 = vmatpush1.bf16.msra.mxu0 0
    %2349 = vmatprep.subr.bf16.mxu0 0
    %2350 = vmatpush1.bf16.msra.mxu0 0
    %2351 = vmatprep.subr.bf16.mxu0 0
    %2352 = vmatpush1.bf16.msra.mxu0 0
    %2353 = vmatprep.subr.bf16.mxu0 0
    %2354 = vmatpush1.bf16.msra.mxu0 0
    %2355 = vmatprep.subr.bf16.mxu0 0
    %2356 = vmatpush1.bf16.msra.mxu0 0
    %2357 = vmatprep.subr.bf16.mxu0 0
    %2358 = vmatpush1.bf16.msra.mxu0 0
    %2359 = vmatprep.subr.bf16.mxu0 0
    %2360 = vmatpush1.bf16.msra.mxu0 %v2343
    %2361 = vmatprep.subr.bf16.mxu0 0
    %2362 = vmatpush2.bf16.msra.mxu0 0
    %2363 = vmatprep.subr.bf16.mxu0 0
    %2364 = vmatpush2.bf16.msra.mxu0 0
    %2365 = vmatprep.subr.bf16.mxu0 0
    %2366 = vmatpush2.bf16.msra.mxu0 0
    %2367 = vmatprep.subr.bf16.mxu0 0
    %2368 = vmatpush2.bf16.msra.mxu0 0
    %2369 = vmatprep.subr.bf16.mxu0 0
    %2370 = vmatpush2.bf16.msra.mxu0 0
    %2371 = vmatprep.subr.bf16.mxu0 0
    %2372 = vmatpush2.bf16.msra.mxu0 0
    %2373 = vmatprep.subr.bf16.mxu0 0
    %2374 = vmatpush2.bf16.msra.mxu0 0
    %2375 = vmatprep.subr.bf16.mxu0 0
    %2376 = vmatpush2.bf16.msra.mxu0 0
    %2377 = vmatprep.mubr.bf16.mxu0 0
    %2378 = vmatmul.mubr.bf16.gmra.mxu0 %v2340
    %v2379 = vpop.f32.mrf.mxu0
    %v2380 = vadd.f32 0.0, %v2379
    %v2381 = vpop.f32.mrf.mxu0
    %v2382 = vpop.f32.mrf.mxu0
    %v2383 = vpop.f32.mrf.mxu0
    %2384 = vdwg.mxu0
    %v2385 = vadd.f32 %v2225, %v2380
    %2386 = vst.msk [vmem:[#allocation2] sm:$0xff] %vm203, %v2385
    %v2387 = vrot.slane %v1744, 4
    %v2388 = vrot.slane %v1745, 4
    %v2390 = vsel %vm315, %v2387, 0
    %v2393 = vsel %vm315, %v2388, 0
    %2395 = vmatprep.subr.bf16.mxu0 0
    %2396 = vmatpush1.bf16.xpose.msra.mxu0 0
    %2397 = vmatprep.subr.bf16.mxu0 0
    %2398 = vmatpush1.bf16.xpose.msra.mxu0 0
    %2399 = vmatprep.subr.bf16.mxu0 0
    %2400 = vmatpush1.bf16.xpose.msra.mxu0 0
    %2401 = vmatprep.subr.bf16.mxu0 0
    %2402 = vmatpush1.bf16.xpose.msra.mxu0 0
    %2403 = vmatprep.subr.bf16.mxu0 0
    %2404 = vmatpush1.bf16.xpose.msra.mxu0 0
    %2405 = vmatprep.subr.bf16.mxu0 0
    %2406 = vmatpush1.bf16.xpose.msra.mxu0 0
    %2407 = vmatprep.subr.bf16.mxu0 0
    %2408 = vmatpush1.bf16.xpose.msra.mxu0 0
    %2409 = vmatprep.subr.bf16.mxu0 0
    %2410 = vmatpush1.bf16.xpose.msra.mxu0 %v2393
    %2411 = vmatprep.subr.bf16.mxu0 0
    %2412 = vmatpush2.bf16.xpose.msra.mxu0 0
    %2413 = vmatprep.subr.bf16.mxu0 0
    %2414 = vmatpush2.bf16.xpose.msra.mxu0 0
    %2415 = vmatprep.subr.bf16.mxu0 0
    %2416 = vmatpush2.bf16.xpose.msra.mxu0 0
    %2417 = vmatprep.subr.bf16.mxu0 0
    %2418 = vmatpush2.bf16.xpose.msra.mxu0 0
    %2419 = vmatprep.subr.bf16.mxu0 0
    %2420 = vmatpush2.bf16.xpose.msra.mxu0 0
    %2421 = vmatprep.subr.bf16.mxu0 0
    %2422 = vmatpush2.bf16.xpose.msra.mxu0 0
    %2423 = vmatprep.subr.bf16.mxu0 0
    %2424 = vmatpush2.bf16.xpose.msra.mxu0 0
    %2425 = vmatprep.subr.bf16.mxu0 0
    %2426 = vmatpush2.bf16.xpose.msra.mxu0 0
    %2427 = vmatprep.mubr.bf16.mxu0 0
    %2428 = vmatmul.mubr.bf16.gmra.mxu0 %v2390
    %v2429 = vpop.f32.mrf.mxu0
    %v2430 = vadd.f32 0.0, %v2429
    %v2431 = vpop.f32.mrf.mxu0
    %v2432 = vpop.f32.mrf.mxu0
    %v2433 = vpop.f32.mrf.mxu0
    %2434 = vdwg.mxu0
    %v2435 = vmul.f32 %v2430, 0.35355338
    %v2436 = vadd.f32 %v2435, %v185
    %v2437 = vsel %vm315, %v2436, -inf
    %2438 = vmax.xlane.f32.xlu0 %v2437
    %v2439 = vpop.xlane.xlu0 %2438
    %v2440 = vsub.f32 %v2436, %v2439
    %v2441 = vmul.f32 %v2440, 1.442695
    %v2442 = vpow.pop %v2441
    %v2443 = vsel %vm315, %v2442, 0.0
    %2444 = vadd.xlane.f32.xlu0 %v2443
    %v2445 = vpop.xlane.xlu0 %2444
    %v2446 = vrcp.pop %v2445
    %v2447 = vmul.f32 %v2442, %v2446
    %v2448 = vpack.c.bf16 %v2447, %v2447
    %2449 = vrot.lane.b32.xlu0 %v2388, 96
    %v2450 = vpop.permute.xlu0 %2449
    %v2452 = vsel %vm315, %v2448, 0
    %v2455 = vsel %vm382, %v2450, 0
    %2457 = vmatprep.subr.bf16.mxu0 0
    %2458 = vmatpush1.bf16.msra.mxu0 0
    %2459 = vmatprep.subr.bf16.mxu0 0
    %2460 = vmatpush1.bf16.msra.mxu0 0
    %2461 = vmatprep.subr.bf16.mxu0 0
    %2462 = vmatpush1.bf16.msra.mxu0 0
    %2463 = vmatprep.subr.bf16.mxu0 0
    %2464 = vmatpush1.bf16.msra.mxu0 0
    %2465 = vmatprep.subr.bf16.mxu0 0
    %2466 = vmatpush1.bf16.msra.mxu0 0
    %2467 = vmatprep.subr.bf16.mxu0 0
    %2468 = vmatpush1.bf16.msra.mxu0 0
    %2469 = vmatprep.subr.bf16.mxu0 0
    %2470 = vmatpush1.bf16.msra.mxu0 0
    %2471 = vmatprep.subr.bf16.mxu0 0
    %2472 = vmatpush1.bf16.msra.mxu0 %v2455
    %2473 = vmatprep.subr.bf16.mxu0 0
    %2474 = vmatpush2.bf16.msra.mxu0 0
    %2475 = vmatprep.subr.bf16.mxu0 0
    %2476 = vmatpush2.bf16.msra.mxu0 0
    %2477 = vmatprep.subr.bf16.mxu0 0
    %2478 = vmatpush2.bf16.msra.mxu0 0
    %2479 = vmatprep.subr.bf16.mxu0 0
    %2480 = vmatpush2.bf16.msra.mxu0 0
    %2481 = vmatprep.subr.bf16.mxu0 0
    %2482 = vmatpush2.bf16.msra.mxu0 0
    %2483 = vmatprep.subr.bf16.mxu0 0
    %2484 = vmatpush2.bf16.msra.mxu0 0
    %2485 = vmatprep.subr.bf16.mxu0 0
    %2486 = vmatpush2.bf16.msra.mxu0 0
    %2487 = vmatprep.subr.bf16.mxu0 0
    %2488 = vmatpush2.bf16.msra.mxu0 0
    %2489 = vmatprep.mubr.bf16.mxu0 0
    %2490 = vmatmul.mubr.bf16.gmra.mxu0 %v2452
    %v2491 = vpop.f32.mrf.mxu0
    %v2492 = vadd.f32 0.0, %v2491
    %v2493 = vpop.f32.mrf.mxu0
    %v2494 = vpop.f32.mrf.mxu0
    %v2495 = vpop.f32.mrf.mxu0
    %2496 = vdwg.mxu0
    %v2497 = vpack.c.bf16 %v2492, %v2492
    %2498 = vrot.lane.b32.xlu0 %v2387, 120
    %v2499 = vpop.permute.xlu0 %2498
    %2500 = vrot.lane.b32.xlu0 %v2388, 120
    %v2501 = vpop.permute.xlu0 %2500
    %v2503 = vsel %vm315, %v2499, 0
    %v2506 = vsel %vm315, %v2501, 0
    %2508 = vmatprep.subr.bf16.mxu0 0
    %2509 = vmatpush1.bf16.xpose.msra.mxu0 0
    %2510 = vmatprep.subr.bf16.mxu0 0
    %2511 = vmatpush1.bf16.xpose.msra.mxu0 0
    %2512 = vmatprep.subr.bf16.mxu0 0
    %2513 = vmatpush1.bf16.xpose.msra.mxu0 0
    %2514 = vmatprep.subr.bf16.mxu0 0
    %2515 = vmatpush1.bf16.xpose.msra.mxu0 0
    %2516 = vmatprep.subr.bf16.mxu0 0
    %2517 = vmatpush1.bf16.xpose.msra.mxu0 0
    %2518 = vmatprep.subr.bf16.mxu0 0
    %2519 = vmatpush1.bf16.xpose.msra.mxu0 0
    %2520 = vmatprep.subr.bf16.mxu0 0
    %2521 = vmatpush1.bf16.xpose.msra.mxu0 0
    %2522 = vmatprep.subr.bf16.mxu0 0
    %2523 = vmatpush1.bf16.xpose.msra.mxu0 %v2506
    %2524 = vmatprep.subr.bf16.mxu0 0
    %2525 = vmatpush2.bf16.xpose.msra.mxu0 0
    %2526 = vmatprep.subr.bf16.mxu0 0
    %2527 = vmatpush2.bf16.xpose.msra.mxu0 0
    %2528 = vmatprep.subr.bf16.mxu0 0
    %2529 = vmatpush2.bf16.xpose.msra.mxu0 0
    %2530 = vmatprep.subr.bf16.mxu0 0
    %2531 = vmatpush2.bf16.xpose.msra.mxu0 0
    %2532 = vmatprep.subr.bf16.mxu0 0
    %2533 = vmatpush2.bf16.xpose.msra.mxu0 0
    %2534 = vmatprep.subr.bf16.mxu0 0
    %2535 = vmatpush2.bf16.xpose.msra.mxu0 0
    %2536 = vmatprep.subr.bf16.mxu0 0
    %2537 = vmatpush2.bf16.xpose.msra.mxu0 0
    %2538 = vmatprep.subr.bf16.mxu0 0
    %2539 = vmatpush2.bf16.xpose.msra.mxu0 0
    %2540 = vmatprep.mubr.bf16.mxu0 0
    %2541 = vmatmul.mubr.bf16.gmra.mxu0 %v2503
    %v2542 = vpop.f32.mrf.mxu0
    %v2543 = vadd.f32 0.0, %v2542
    %v2544 = vpop.f32.mrf.mxu0
    %v2545 = vpop.f32.mrf.mxu0
    %v2546 = vpop.f32.mrf.mxu0
    %2547 = vdwg.mxu0
    %v2548 = vmul.f32 %v2543, 0.35355338
    %v2549 = vadd.f32 %v2548, %v185
    %v2550 = vsel %vm315, %v2549, -inf
    %2551 = vmax.xlane.f32.xlu0 %v2550
    %v2552 = vpop.xlane.xlu0 %2551
    %v2553 = vsub.f32 %v2549, %v2552
    %v2554 = vmul.f32 %v2553, 1.442695
    %v2555 = vpow.pop %v2554
    %v2556 = vsel %vm315, %v2555, 0.0
    %2557 = vadd.xlane.f32.xlu0 %v2556
    %v2558 = vpop.xlane.xlu0 %2557
    %v2559 = vrcp.pop %v2558
    %v2560 = vmul.f32 %v2555, %v2559
    %v2561 = vpack.c.bf16 %v2560, %v2560
    %2562 = vrot.lane.b32.xlu0 %v2388, 88
    %v2563 = vpop.permute.xlu0 %2562
    %v2565 = vsel %vm315, %v2561, 0
    %v2568 = vsel %vm382, %v2563, 0
    %2570 = vmatprep.subr.bf16.mxu0 0
    %2571 = vmatpush1.bf16.msra.mxu0 0
    %2572 = vmatprep.subr.bf16.mxu0 0
    %2573 = vmatpush1.bf16.msra.mxu0 0
    %2574 = vmatprep.subr.bf16.mxu0 0
    %2575 = vmatpush1.bf16.msra.mxu0 0
    %2576 = vmatprep.subr.bf16.mxu0 0
    %2577 = vmatpush1.bf16.msra.mxu0 0
    %2578 = vmatprep.subr.bf16.mxu0 0
    %2579 = vmatpush1.bf16.msra.mxu0 0
    %2580 = vmatprep.subr.bf16.mxu0 0
    %2581 = vmatpush1.bf16.msra.mxu0 0
    %2582 = vmatprep.subr.bf16.mxu0 0
    %2583 = vmatpush1.bf16.msra.mxu0 0
    %2584 = vmatprep.subr.bf16.mxu0 0
    %2585 = vmatpush1.bf16.msra.mxu0 %v2568
    %2586 = vmatprep.subr.bf16.mxu0 0
    %2587 = vmatpush2.bf16.msra.mxu0 0
    %2588 = vmatprep.subr.bf16.mxu0 0
    %2589 = vmatpush2.bf16.msra.mxu0 0
    %2590 = vmatprep.subr.bf16.mxu0 0
    %2591 = vmatpush2.bf16.msra.mxu0 0
    %2592 = vmatprep.subr.bf16.mxu0 0
    %2593 = vmatpush2.bf16.msra.mxu0 0
    %2594 = vmatprep.subr.bf16.mxu0 0
    %2595 = vmatpush2.bf16.msra.mxu0 0
    %2596 = vmatprep.subr.bf16.mxu0 0
    %2597 = vmatpush2.bf16.msra.mxu0 0
    %2598 = vmatprep.subr.bf16.mxu0 0
    %2599 = vmatpush2.bf16.msra.mxu0 0
    %2600 = vmatprep.subr.bf16.mxu0 0
    %2601 = vmatpush2.bf16.msra.mxu0 0
    %2602 = vmatprep.mubr.bf16.mxu0 0
    %2603 = vmatmul.mubr.bf16.gmra.mxu0 %v2565
    %v2604 = vpop.f32.mrf.mxu0
    %v2605 = vadd.f32 0.0, %v2604
    %v2606 = vpop.f32.mrf.mxu0
    %v2607 = vpop.f32.mrf.mxu0
    %v2608 = vpop.f32.mrf.mxu0
    %2609 = vdwg.mxu0
    %v2610 = vpack.c.bf16 %v2605, %v2605
    %v2612 = vsel %vm315, %v2610, 0
    %2614 = vmatprep.subr.bf16.mxu0 0
    %2615 = vmatpush1.bf16.msra.mxu0 0
    %2616 = vmatprep.subr.bf16.mxu0 0
    %2617 = vmatpush1.bf16.msra.mxu0 0
    %2618 = vmatprep.subr.bf16.mxu0 0
    %2619 = vmatpush1.bf16.msra.mxu0 0
    %2620 = vmatprep.subr.bf16.mxu0 0
    %2621 = vmatpush1.bf16.msra.mxu0 0
    %2622 = vmatprep.subr.bf16.mxu0 0
    %2623 = vmatpush1.bf16.msra.mxu0 0
    %2624 = vmatprep.subr.bf16.mxu0 0
    %2625 = vmatpush1.bf16.msra.mxu0 0
    %2626 = vmatprep.subr.bf16.mxu0 0
    %2627 = vmatpush1.bf16.msra.mxu0 0
    %2628 = vmatprep.subr.bf16.mxu0 0
    %2629 = vmatpush1.bf16.msra.mxu0 %v1978
    %2630 = vmatprep.subr.bf16.mxu0 0
    %2631 = vmatpush2.bf16.msra.mxu0 0
    %2632 = vmatprep.subr.bf16.mxu0 0
    %2633 = vmatpush2.bf16.msra.mxu0 0
    %2634 = vmatprep.subr.bf16.mxu0 0
    %2635 = vmatpush2.bf16.msra.mxu0 0
    %2636 = vmatprep.subr.bf16.mxu0 0
    %2637 = vmatpush2.bf16.msra.mxu0 0
    %2638 = vmatprep.subr.bf16.mxu0 0
    %2639 = vmatpush2.bf16.msra.mxu0 0
    %2640 = vmatprep.subr.bf16.mxu0 0
    %2641 = vmatpush2.bf16.msra.mxu0 0
    %2642 = vmatprep.subr.bf16.mxu0 0
    %2643 = vmatpush2.bf16.msra.mxu0 0
    %2644 = vmatprep.subr.bf16.mxu0 0
    %2645 = vmatpush2.bf16.msra.mxu0 0
    %2646 = vmatprep.mubr.bf16.mxu0 0
    %2647 = vmatmul.mubr.bf16.gmra.mxu0 %v2612
    %v2648 = vpop.f32.mrf.mxu0
    %v2649 = vadd.f32 0.0, %v2648
    %v2650 = vpop.f32.mrf.mxu0
    %v2651 = vpop.f32.mrf.mxu0
    %v2652 = vpop.f32.mrf.mxu0
    %2653 = vdwg.mxu0
    %v2655 = vsel %vm315, %v2497, 0
    %2657 = vmatprep.subr.bf16.mxu0 0
    %2658 = vmatpush1.bf16.msra.mxu0 0
    %2659 = vmatprep.subr.bf16.mxu0 0
    %2660 = vmatpush1.bf16.msra.mxu0 0
    %2661 = vmatprep.subr.bf16.mxu0 0
    %2662 = vmatpush1.bf16.msra.mxu0 0
    %2663 = vmatprep.subr.bf16.mxu0 0
    %2664 = vmatpush1.bf16.msra.mxu0 0
    %2665 = vmatprep.subr.bf16.mxu0 0
    %2666 = vmatpush1.bf16.msra.mxu0 0
    %2667 = vmatprep.subr.bf16.mxu0 0
    %2668 = vmatpush1.bf16.msra.mxu0 0
    %2669 = vmatprep.subr.bf16.mxu0 0
    %2670 = vmatpush1.bf16.msra.mxu0 0
    %2671 = vmatprep.subr.bf16.mxu0 0
    %2672 = vmatpush1.bf16.msra.mxu0 %v2024
    %2673 = vmatprep.subr.bf16.mxu0 0
    %2674 = vmatpush2.bf16.msra.mxu0 0
    %2675 = vmatprep.subr.bf16.mxu0 0
    %2676 = vmatpush2.bf16.msra.mxu0 0
    %2677 = vmatprep.subr.bf16.mxu0 0
    %2678 = vmatpush2.bf16.msra.mxu0 0
    %2679 = vmatprep.subr.bf16.mxu0 0
    %2680 = vmatpush2.bf16.msra.mxu0 0
    %2681 = vmatprep.subr.bf16.mxu0 0
    %2682 = vmatpush2.bf16.msra.mxu0 0
    %2683 = vmatprep.subr.bf16.mxu0 0
    %2684 = vmatpush2.bf16.msra.mxu0 0
    %2685 = vmatprep.subr.bf16.mxu0 0
    %2686 = vmatpush2.bf16.msra.mxu0 0
    %2687 = vmatprep.subr.bf16.mxu0 0
    %2688 = vmatpush2.bf16.msra.mxu0 0
    %2689 = vmatprep.mubr.bf16.mxu0 0
    %2690 = vmatmul.mubr.bf16.gmra.mxu0 %v2655
    %v2691 = vpop.f32.mrf.mxu0
    %v2692 = vadd.f32 %v2649, %v2691
    %v2693 = vpop.f32.mrf.mxu0
    %v2694 = vpop.f32.mrf.mxu0
    %v2695 = vpop.f32.mrf.mxu0
    %2696 = vdwg.mxu0
    %2697 = vrot.lane.b32.xlu0 %v2387, 112
    %v2698 = vpop.permute.xlu0 %2697
    %2699 = vrot.lane.b32.xlu0 %v2388, 112
    %v2700 = vpop.permute.xlu0 %2699
    %v2702 = vsel %vm315, %v2698, 0
    %v2705 = vsel %vm315, %v2700, 0
    %2707 = vmatprep.subr.bf16.mxu0 0
    %2708 = vmatpush1.bf16.xpose.msra.mxu0 0
    %2709 = vmatprep.subr.bf16.mxu0 0
    %2710 = vmatpush1.bf16.xpose.msra.mxu0 0
    %2711 = vmatprep.subr.bf16.mxu0 0
    %2712 = vmatpush1.bf16.xpose.msra.mxu0 0
    %2713 = vmatprep.subr.bf16.mxu0 0
    %2714 = vmatpush1.bf16.xpose.msra.mxu0 0
    %2715 = vmatprep.subr.bf16.mxu0 0
    %2716 = vmatpush1.bf16.xpose.msra.mxu0 0
    %2717 = vmatprep.subr.bf16.mxu0 0
    %2718 = vmatpush1.bf16.xpose.msra.mxu0 0
    %2719 = vmatprep.subr.bf16.mxu0 0
    %2720 = vmatpush1.bf16.xpose.msra.mxu0 0
    %2721 = vmatprep.subr.bf16.mxu0 0
    %2722 = vmatpush1.bf16.xpose.msra.mxu0 %v2705
    %2723 = vmatprep.subr.bf16.mxu0 0
    %2724 = vmatpush2.bf16.xpose.msra.mxu0 0
    %2725 = vmatprep.subr.bf16.mxu0 0
    %2726 = vmatpush2.bf16.xpose.msra.mxu0 0
    %2727 = vmatprep.subr.bf16.mxu0 0
    %2728 = vmatpush2.bf16.xpose.msra.mxu0 0
    %2729 = vmatprep.subr.bf16.mxu0 0
    %2730 = vmatpush2.bf16.xpose.msra.mxu0 0
    %2731 = vmatprep.subr.bf16.mxu0 0
    %2732 = vmatpush2.bf16.xpose.msra.mxu0 0
    %2733 = vmatprep.subr.bf16.mxu0 0
    %2734 = vmatpush2.bf16.xpose.msra.mxu0 0
    %2735 = vmatprep.subr.bf16.mxu0 0
    %2736 = vmatpush2.bf16.xpose.msra.mxu0 0
    %2737 = vmatprep.subr.bf16.mxu0 0
    %2738 = vmatpush2.bf16.xpose.msra.mxu0 0
    %2739 = vmatprep.mubr.bf16.mxu0 0
    %2740 = vmatmul.mubr.bf16.gmra.mxu0 %v2702
    %v2741 = vpop.f32.mrf.mxu0
    %v2742 = vadd.f32 0.0, %v2741
    %v2743 = vpop.f32.mrf.mxu0
    %v2744 = vpop.f32.mrf.mxu0
    %v2745 = vpop.f32.mrf.mxu0
    %2746 = vdwg.mxu0
    %v2747 = vmul.f32 %v2742, 0.35355338
    %v2748 = vadd.f32 %v2747, %v185
    %v2749 = vsel %vm315, %v2748, -inf
    %2750 = vmax.xlane.f32.xlu0 %v2749
    %v2751 = vpop.xlane.xlu0 %2750
    %v2752 = vsub.f32 %v2748, %v2751
    %v2753 = vmul.f32 %v2752, 1.442695
    %v2754 = vpow.pop %v2753
    %v2755 = vsel %vm315, %v2754, 0.0
    %2756 = vadd.xlane.f32.xlu0 %v2755
    %v2757 = vpop.xlane.xlu0 %2756
    %v2758 = vrcp.pop %v2757
    %v2759 = vmul.f32 %v2754, %v2758
    %v2760 = vpack.c.bf16 %v2759, %v2759
    %2761 = vrot.lane.b32.xlu0 %v2388, 80
    %v2762 = vpop.permute.xlu0 %2761
    %v2764 = vsel %vm315, %v2760, 0
    %v2767 = vsel %vm382, %v2762, 0
    %2769 = vmatprep.subr.bf16.mxu0 0
    %2770 = vmatpush1.bf16.msra.mxu0 0
    %2771 = vmatprep.subr.bf16.mxu0 0
    %2772 = vmatpush1.bf16.msra.mxu0 0
    %2773 = vmatprep.subr.bf16.mxu0 0
    %2774 = vmatpush1.bf16.msra.mxu0 0
    %2775 = vmatprep.subr.bf16.mxu0 0
    %2776 = vmatpush1.bf16.msra.mxu0 0
    %2777 = vmatprep.subr.bf16.mxu0 0
    %2778 = vmatpush1.bf16.msra.mxu0 0
    %2779 = vmatprep.subr.bf16.mxu0 0
    %2780 = vmatpush1.bf16.msra.mxu0 0
    %2781 = vmatprep.subr.bf16.mxu0 0
    %2782 = vmatpush1.bf16.msra.mxu0 0
    %2783 = vmatprep.subr.bf16.mxu0 0
    %2784 = vmatpush1.bf16.msra.mxu0 %v2767
    %2785 = vmatprep.subr.bf16.mxu0 0
    %2786 = vmatpush2.bf16.msra.mxu0 0
    %2787 = vmatprep.subr.bf16.mxu0 0
    %2788 = vmatpush2.bf16.msra.mxu0 0
    %2789 = vmatprep.subr.bf16.mxu0 0
    %2790 = vmatpush2.bf16.msra.mxu0 0
    %2791 = vmatprep.subr.bf16.mxu0 0
    %2792 = vmatpush2.bf16.msra.mxu0 0
    %2793 = vmatprep.subr.bf16.mxu0 0
    %2794 = vmatpush2.bf16.msra.mxu0 0
    %2795 = vmatprep.subr.bf16.mxu0 0
    %2796 = vmatpush2.bf16.msra.mxu0 0
    %2797 = vmatprep.subr.bf16.mxu0 0
    %2798 = vmatpush2.bf16.msra.mxu0 0
    %2799 = vmatprep.subr.bf16.mxu0 0
    %2800 = vmatpush2.bf16.msra.mxu0 0
    %2801 = vmatprep.mubr.bf16.mxu0 0
    %2802 = vmatmul.mubr.bf16.gmra.mxu0 %v2764
    %v2803 = vpop.f32.mrf.mxu0
    %v2804 = vadd.f32 0.0, %v2803
    %v2805 = vpop.f32.mrf.mxu0
    %v2806 = vpop.f32.mrf.mxu0
    %v2807 = vpop.f32.mrf.mxu0
    %2808 = vdwg.mxu0
    %v2809 = vpack.c.bf16 %v2804, %v2804
    %v2811 = vsel %vm315, %v2809, 0
    %2813 = vmatprep.subr.bf16.mxu0 0
    %2814 = vmatpush1.bf16.msra.mxu0 0
    %2815 = vmatprep.subr.bf16.mxu0 0
    %2816 = vmatpush1.bf16.msra.mxu0 0
    %2817 = vmatprep.subr.bf16.mxu0 0
    %2818 = vmatpush1.bf16.msra.mxu0 0
    %2819 = vmatprep.subr.bf16.mxu0 0
    %2820 = vmatpush1.bf16.msra.mxu0 0
    %2821 = vmatprep.subr.bf16.mxu0 0
    %2822 = vmatpush1.bf16.msra.mxu0 0
    %2823 = vmatprep.subr.bf16.mxu0 0
    %2824 = vmatpush1.bf16.msra.mxu0 0
    %2825 = vmatprep.subr.bf16.mxu0 0
    %2826 = vmatpush1.bf16.msra.mxu0 0
    %2827 = vmatprep.subr.bf16.mxu0 0
    %2828 = vmatpush1.bf16.msra.mxu0 %v2183
    %2829 = vmatprep.subr.bf16.mxu0 0
    %2830 = vmatpush2.bf16.msra.mxu0 0
    %2831 = vmatprep.subr.bf16.mxu0 0
    %2832 = vmatpush2.bf16.msra.mxu0 0
    %2833 = vmatprep.subr.bf16.mxu0 0
    %2834 = vmatpush2.bf16.msra.mxu0 0
    %2835 = vmatprep.subr.bf16.mxu0 0
    %2836 = vmatpush2.bf16.msra.mxu0 0
    %2837 = vmatprep.subr.bf16.mxu0 0
    %2838 = vmatpush2.bf16.msra.mxu0 0
    %2839 = vmatprep.subr.bf16.mxu0 0
    %2840 = vmatpush2.bf16.msra.mxu0 0
    %2841 = vmatprep.subr.bf16.mxu0 0
    %2842 = vmatpush2.bf16.msra.mxu0 0
    %2843 = vmatprep.subr.bf16.mxu0 0
    %2844 = vmatpush2.bf16.msra.mxu0 0
    %2845 = vmatprep.mubr.bf16.mxu0 0
    %2846 = vmatmul.mubr.bf16.gmra.mxu0 %v2811
    %v2847 = vpop.f32.mrf.mxu0
    %v2848 = vadd.f32 0.0, %v2847
    %v2849 = vpop.f32.mrf.mxu0
    %v2850 = vpop.f32.mrf.mxu0
    %v2851 = vpop.f32.mrf.mxu0
    %2852 = vdwg.mxu0
    %v2853 = vadd.f32 %v2692, %v2848
    %2854 = vrot.lane.b32.xlu0 %v2387, 104
    %v2855 = vpop.permute.xlu0 %2854
    %2856 = vrot.lane.b32.xlu0 %v2388, 104
    %v2857 = vpop.permute.xlu0 %2856
    %v2859 = vsel %vm315, %v2855, 0
    %v2862 = vsel %vm315, %v2857, 0
    %2864 = vmatprep.subr.bf16.mxu0 0
    %2865 = vmatpush1.bf16.xpose.msra.mxu0 0
    %2866 = vmatprep.subr.bf16.mxu0 0
    %2867 = vmatpush1.bf16.xpose.msra.mxu0 0
    %2868 = vmatprep.subr.bf16.mxu0 0
    %2869 = vmatpush1.bf16.xpose.msra.mxu0 0
    %2870 = vmatprep.subr.bf16.mxu0 0
    %2871 = vmatpush1.bf16.xpose.msra.mxu0 0
    %2872 = vmatprep.subr.bf16.mxu0 0
    %2873 = vmatpush1.bf16.xpose.msra.mxu0 0
    %2874 = vmatprep.subr.bf16.mxu0 0
    %2875 = vmatpush1.bf16.xpose.msra.mxu0 0
    %2876 = vmatprep.subr.bf16.mxu0 0
    %2877 = vmatpush1.bf16.xpose.msra.mxu0 0
    %2878 = vmatprep.subr.bf16.mxu0 0
    %2879 = vmatpush1.bf16.xpose.msra.mxu0 %v2862
    %2880 = vmatprep.subr.bf16.mxu0 0
    %2881 = vmatpush2.bf16.xpose.msra.mxu0 0
    %2882 = vmatprep.subr.bf16.mxu0 0
    %2883 = vmatpush2.bf16.xpose.msra.mxu0 0
    %2884 = vmatprep.subr.bf16.mxu0 0
    %2885 = vmatpush2.bf16.xpose.msra.mxu0 0
    %2886 = vmatprep.subr.bf16.mxu0 0
    %2887 = vmatpush2.bf16.xpose.msra.mxu0 0
    %2888 = vmatprep.subr.bf16.mxu0 0
    %2889 = vmatpush2.bf16.xpose.msra.mxu0 0
    %2890 = vmatprep.subr.bf16.mxu0 0
    %2891 = vmatpush2.bf16.xpose.msra.mxu0 0
    %2892 = vmatprep.subr.bf16.mxu0 0
    %2893 = vmatpush2.bf16.xpose.msra.mxu0 0
    %2894 = vmatprep.subr.bf16.mxu0 0
    %2895 = vmatpush2.bf16.xpose.msra.mxu0 0
    %2896 = vmatprep.mubr.bf16.mxu0 0
    %2897 = vmatmul.mubr.bf16.gmra.mxu0 %v2859
    %v2898 = vpop.f32.mrf.mxu0
    %v2899 = vadd.f32 0.0, %v2898
    %v2900 = vpop.f32.mrf.mxu0
    %v2901 = vpop.f32.mrf.mxu0
    %v2902 = vpop.f32.mrf.mxu0
    %2903 = vdwg.mxu0
    %v2904 = vmul.f32 %v2899, 0.35355338
    %v2905 = vadd.f32 %v2904, %v185
    %v2906 = vsel %vm315, %v2905, -inf
    %2907 = vmax.xlane.f32.xlu0 %v2906
    %v2908 = vpop.xlane.xlu0 %2907
    %v2909 = vsub.f32 %v2905, %v2908
    %v2910 = vmul.f32 %v2909, 1.442695
    %v2911 = vpow.pop %v2910
    %v2912 = vsel %vm315, %v2911, 0.0
    %2913 = vadd.xlane.f32.xlu0 %v2912
    %v2914 = vpop.xlane.xlu0 %2913
    %v2915 = vrcp.pop %v2914
    %v2916 = vmul.f32 %v2911, %v2915
    %v2917 = vpack.c.bf16 %v2916, %v2916
    %2918 = vrot.lane.b32.xlu0 %v2388, 72
    %v2919 = vpop.permute.xlu0 %2918
    %v2921 = vsel %vm315, %v2917, 0
    %v2924 = vsel %vm382, %v2919, 0
    %2926 = vmatprep.subr.bf16.mxu0 0
    %2927 = vmatpush1.bf16.msra.mxu0 0
    %2928 = vmatprep.subr.bf16.mxu0 0
    %2929 = vmatpush1.bf16.msra.mxu0 0
    %2930 = vmatprep.subr.bf16.mxu0 0
    %2931 = vmatpush1.bf16.msra.mxu0 0
    %2932 = vmatprep.subr.bf16.mxu0 0
    %2933 = vmatpush1.bf16.msra.mxu0 0
    %2934 = vmatprep.subr.bf16.mxu0 0
    %2935 = vmatpush1.bf16.msra.mxu0 0
    %2936 = vmatprep.subr.bf16.mxu0 0
    %2937 = vmatpush1.bf16.msra.mxu0 0
    %2938 = vmatprep.subr.bf16.mxu0 0
    %2939 = vmatpush1.bf16.msra.mxu0 0
    %2940 = vmatprep.subr.bf16.mxu0 0
    %2941 = vmatpush1.bf16.msra.mxu0 %v2924
    %2942 = vmatprep.subr.bf16.mxu0 0
    %2943 = vmatpush2.bf16.msra.mxu0 0
    %2944 = vmatprep.subr.bf16.mxu0 0
    %2945 = vmatpush2.bf16.msra.mxu0 0
    %2946 = vmatprep.subr.bf16.mxu0 0
    %2947 = vmatpush2.bf16.msra.mxu0 0
    %2948 = vmatprep.subr.bf16.mxu0 0
    %2949 = vmatpush2.bf16.msra.mxu0 0
    %2950 = vmatprep.subr.bf16.mxu0 0
    %2951 = vmatpush2.bf16.msra.mxu0 0
    %2952 = vmatprep.subr.bf16.mxu0 0
    %2953 = vmatpush2.bf16.msra.mxu0 0
    %2954 = vmatprep.subr.bf16.mxu0 0
    %2955 = vmatpush2.bf16.msra.mxu0 0
    %2956 = vmatprep.subr.bf16.mxu0 0
    %2957 = vmatpush2.bf16.msra.mxu0 0
    %2958 = vmatprep.mubr.bf16.mxu0 0
    %2959 = vmatmul.mubr.bf16.gmra.mxu0 %v2921
    %v2960 = vpop.f32.mrf.mxu0
    %v2961 = vadd.f32 0.0, %v2960
    %v2962 = vpop.f32.mrf.mxu0
    %v2963 = vpop.f32.mrf.mxu0
    %v2964 = vpop.f32.mrf.mxu0
    %2965 = vdwg.mxu0
    %v2966 = vpack.c.bf16 %v2961, %v2961
    %v2968 = vsel %vm315, %v2966, 0
    %2970 = vmatprep.subr.bf16.mxu0 0
    %2971 = vmatpush1.bf16.msra.mxu0 0
    %2972 = vmatprep.subr.bf16.mxu0 0
    %2973 = vmatpush1.bf16.msra.mxu0 0
    %2974 = vmatprep.subr.bf16.mxu0 0
    %2975 = vmatpush1.bf16.msra.mxu0 0
    %2976 = vmatprep.subr.bf16.mxu0 0
    %2977 = vmatpush1.bf16.msra.mxu0 0
    %2978 = vmatprep.subr.bf16.mxu0 0
    %2979 = vmatpush1.bf16.msra.mxu0 0
    %2980 = vmatprep.subr.bf16.mxu0 0
    %2981 = vmatpush1.bf16.msra.mxu0 0
    %2982 = vmatprep.subr.bf16.mxu0 0
    %2983 = vmatpush1.bf16.msra.mxu0 0
    %2984 = vmatprep.subr.bf16.mxu0 0
    %2985 = vmatpush1.bf16.msra.mxu0 %v2343
    %2986 = vmatprep.subr.bf16.mxu0 0
    %2987 = vmatpush2.bf16.msra.mxu0 0
    %2988 = vmatprep.subr.bf16.mxu0 0
    %2989 = vmatpush2.bf16.msra.mxu0 0
    %2990 = vmatprep.subr.bf16.mxu0 0
    %2991 = vmatpush2.bf16.msra.mxu0 0
    %2992 = vmatprep.subr.bf16.mxu0 0
    %2993 = vmatpush2.bf16.msra.mxu0 0
    %2994 = vmatprep.subr.bf16.mxu0 0
    %2995 = vmatpush2.bf16.msra.mxu0 0
    %2996 = vmatprep.subr.bf16.mxu0 0
    %2997 = vmatpush2.bf16.msra.mxu0 0
    %2998 = vmatprep.subr.bf16.mxu0 0
    %2999 = vmatpush2.bf16.msra.mxu0 0
    %3000 = vmatprep.subr.bf16.mxu0 0
    %3001 = vmatpush2.bf16.msra.mxu0 0
    %3002 = vmatprep.mubr.bf16.mxu0 0
    %3003 = vmatmul.mubr.bf16.gmra.mxu0 %v2968
    %v3004 = vpop.f32.mrf.mxu0
    %v3005 = vadd.f32 0.0, %v3004
    %v3006 = vpop.f32.mrf.mxu0
    %v3007 = vpop.f32.mrf.mxu0
    %v3008 = vpop.f32.mrf.mxu0
    %3009 = vdwg.mxu0
    %v3010 = vadd.f32 %v2853, %v3005
    %3011 = vst.msk [vmem:[#allocation2 + $0x8] sm:$0xff] %vm203, %v3010
    %v3012 = vld [vmem:[#allocation2] sm:$0xff]
    %v3013 = vld [vmem:[#allocation2 + $0x8] sm:$0xff]
    %v3014 = vadd.f32 %v1620, %v3012
    %v3015 = vadd.f32 %v1621, %v3013
    %v3016 = vsel %vm203, %v3014, 0.0
    %3017 = vadd.xlane.f32.xlu0 %v3016
    %v3018 = vpop.xlane.xlu0 %3017
    %v3019 = vsel %vm203, %v3015, 0.0
    %3020 = vadd.xlane.f32.xlu0 %v3019
    %v3021 = vpop.xlane.xlu0 %3020
    %v3022 = vmul.f32 %v3018, %v1589
    %v3023 = vmul.f32 %v3021, %v1589
    %v3024 = vsub.f32 %v3014, %v3022
    %v3025 = vsub.f32 %v3015, %v3023
    %v3026 = vmul.f32 %v3024, %v3024
    %v3027 = vmul.f32 %v3025, %v3025
    %v3028 = vsel %vm203, %v3026, 0.0
    %3029 = vadd.xlane.f32.xlu0 %v3028
    %v3030 = vpop.xlane.xlu0 %3029
    %v3031 = vsel %vm203, %v3027, 0.0
    %3032 = vadd.xlane.f32.xlu0 %v3031
    %v3033 = vpop.xlane.xlu0 %3032
    %v3034 = vmul.f32 %v3030, %v1589
    %v3035 = vmul.f32 %v3033, %v1589
    %v3036 = vadd.f32 %v3034, 1e-05
    %v3037 = vadd.f32 %v3035, 1e-05
    %v3038 = vrsqrt.pop %v3036
    %v3039 = vrsqrt.pop %v3037
    %v3040 = vmul.f32 %v3024, %v3038
    %v3041 = vmul.f32 %v3025, %v3039
    %v3042 = vlaneseq
    %v3043 = vshrl.u32 %v3042, 7
    %v3044 = vsub.s32 1, %v3043
    %v3045 = vrot.slane %v170, %v3044
    %v3046 = vmul.f32 %v3040, %v3045
    %v3047 = vmul.f32 %v3041, %v3045
    %v3048 = vlaneseq
    %v3049 = vshrl.u32 %v3048, 7
    %v3050 = vsub.s32 1, %v3049
    %v3051 = vrot.slane %v171, %v3050
    %v3052 = vadd.f32 %v3046, %v3051
    %v3053 = vadd.f32 %v3047, %v3051
    %v3054 = vpack.c.bf16 %v3053, %v3052
    %v3055 = vld [vmem:[#allocation16] sm:$0xf]
    %v3056 = vld [vmem:[#allocation16 + $0x4] sm:$0xf]
    %v3057 = vld [vmem:[#allocation16 + $0x8] sm:$0xf]
    %v3058 = vld [vmem:[#allocation16 + $0xc] sm:$0xf]
    %v3059 = vld [vmem:[%s11] sm:$0x1]
    %v3061 = vlaneseq
    %v3062 = vshrl.u32 %v3061, 7
    %v3063 = vsub.s32 0, %v3062
    %v3064 = vrot.slane %v3059, %v3063
    %v3070 = vunpack.c.l.b16 %v3055
    %v3071 = vunpack.c.l.b16 %v3056
    %v3072 = vunpack.c.l.b16 %v3057
    %v3073 = vunpack.c.l.b16 %v3058
    %v3074 = vpack.c.b16 %v3071, %v3070
    %v3075 = vpack.c.b16 %v3073, %v3072
    %v3079 = vsel %vm203, %v3054, 0
    %3081 = vmatprep.subr.bf16.mxu0 0
    %3082 = vmatpush1.bf16.msra.mxu0 0
    %3083 = vmatprep.subr.bf16.mxu0 0
    %3084 = vmatpush1.bf16.msra.mxu0 0
    %3085 = vmatprep.subr.bf16.mxu0 0
    %3086 = vmatpush1.bf16.msra.mxu0 0
    %3087 = vmatprep.subr.bf16.mxu0 0
    %3088 = vmatpush1.bf16.msra.mxu0 0
    %3089 = vmatprep.subr.bf16.mxu0 0
    %3090 = vmatpush1.bf16.msra.mxu0 0
    %3091 = vmatprep.subr.bf16.mxu0 0
    %3092 = vmatpush1.bf16.msra.mxu0 0
    %3093 = vmatprep.subr.bf16.mxu0 0
    %3094 = vmatpush1.bf16.msra.mxu0 %v3075
    %3095 = vmatprep.subr.bf16.mxu0 0
    %3096 = vmatpush1.bf16.msra.mxu0 %v3074
    %3097 = vmatprep.subr.bf16.mxu0 0
    %3098 = vmatpush2.bf16.msra.mxu0 0
    %3099 = vmatprep.subr.bf16.mxu0 0
    %3100 = vmatpush2.bf16.msra.mxu0 0
    %3101 = vmatprep.subr.bf16.mxu0 0
    %3102 = vmatpush2.bf16.msra.mxu0 0
    %3103 = vmatprep.subr.bf16.mxu0 0
    %3104 = vmatpush2.bf16.msra.mxu0 0
    %3105 = vmatprep.subr.bf16.mxu0 0
    %3106 = vmatpush2.bf16.msra.mxu0 0
    %3107 = vmatprep.subr.bf16.mxu0 0
    %3108 = vmatpush2.bf16.msra.mxu0 0
    %3109 = vmatprep.subr.bf16.mxu0 0
    %3110 = vmatpush2.bf16.msra.mxu0 0
    %3111 = vmatprep.subr.bf16.mxu0 0
    %3112 = vmatpush2.bf16.msra.mxu0 0
    %3113 = vmatprep.mubr.bf16.mxu0 0
    %3114 = vmatmul.mubr.bf16.gmra.mxu0 %v3079
    %v3115 = vpop.f32.mrf.mxu0
    %v3116 = vadd.f32 %v3064, %v3115
    %v3117 = vpop.f32.mrf.mxu0
    %v3118 = vpop.f32.mrf.mxu0
    %v3119 = vadd.f32 %v3064, %v3118
    %v3120 = vpop.f32.mrf.mxu0
    %3121 = vdwg.mxu0
    %v3122 = vmax.f32 %v3116, 0.0
    %v3123 = vmax.f32 %v3119, 0.0
    %v3124 = vpack.c.bf16 %v3123, %v3122
    %v3125 = vld [vmem:[%s12] sm:$0xf]
    %v3126 = vld [vmem:[%s12 + $0x4] sm:$0xf]
    %v3127 = vld [vmem:[%s12 + $0x8] sm:$0xf]
    %v3128 = vld [vmem:[%s12 + $0xc] sm:$0xf]
    %v3129 = vld [vmem:[%s12 + $0x10] sm:$0xf]
    %v3130 = vld [vmem:[%s12 + $0x14] sm:$0xf]
    %v3131 = vld [vmem:[%s12 + $0x18] sm:$0xf]
    %v3132 = vld [vmem:[%s12 + $0x1c] sm:$0xf]
    %v3133 = vld [vmem:[#allocation17] sm:$0x1]
    %v3135 = vlaneseq
    %v3136 = vshrl.u32 %v3135, 7
    %v3137 = vsub.s32 0, %v3136
    %v3138 = vrot.slane %v3133, %v3137
    %v3148 = vunpack.c.l.b16 %v3125
    %v3149 = vunpack.c.l.b16 %v3126
    %v3150 = vunpack.c.l.b16 %v3127
    %v3151 = vunpack.c.l.b16 %v3128
    %v3152 = vunpack.c.l.b16 %v3129
    %v3153 = vunpack.c.l.b16 %v3130
    %v3154 = vunpack.c.l.b16 %v3131
    %v3155 = vunpack.c.l.b16 %v3132
    %v3156 = vpack.c.b16 %v3149, %v3148
    %v3157 = vpack.c.b16 %v3151, %v3150
    %v3158 = vpack.c.b16 %v3153, %v3152
    %v3159 = vpack.c.b16 %v3155, %v3154
    %vm3164 = vcmask 523264
    %v3166 = vsel %vm3164, %v3124, 0
    %3168 = vmatprep.subr.bf16.mxu0 0
    %3169 = vmatpush1.bf16.msra.mxu0 0
    %3170 = vmatprep.subr.bf16.mxu0 0
    %3171 = vmatpush1.bf16.msra.mxu0 0
    %3172 = vmatprep.subr.bf16.mxu0 0
    %3173 = vmatpush1.bf16.msra.mxu0 0
    %3174 = vmatprep.subr.bf16.mxu0 0
    %3175 = vmatpush1.bf16.msra.mxu0 0
    %3176 = vmatprep.subr.bf16.mxu0 0
    %3177 = vmatpush1.bf16.msra.mxu0 %v3159
    %3178 = vmatprep.subr.bf16.mxu0 0
    %3179 = vmatpush1.bf16.msra.mxu0 %v3158
    %3180 = vmatprep.subr.bf16.mxu0 0
    %3181 = vmatpush1.bf16.msra.mxu0 %v3157
    %3182 = vmatprep.subr.bf16.mxu0 0
    %3183 = vmatpush1.bf16.msra.mxu0 %v3156
    %3184 = vmatprep.subr.bf16.mxu0 0
    %3185 = vmatpush2.bf16.msra.mxu0 0
    %3186 = vmatprep.subr.bf16.mxu0 0
    %3187 = vmatpush2.bf16.msra.mxu0 0
    %3188 = vmatprep.subr.bf16.mxu0 0
    %3189 = vmatpush2.bf16.msra.mxu0 0
    %3190 = vmatprep.subr.bf16.mxu0 0
    %3191 = vmatpush2.bf16.msra.mxu0 0
    %3192 = vmatprep.subr.bf16.mxu0 0
    %3193 = vmatpush2.bf16.msra.mxu0 0
    %3194 = vmatprep.subr.bf16.mxu0 0
    %3195 = vmatpush2.bf16.msra.mxu0 0
    %3196 = vmatprep.subr.bf16.mxu0 0
    %3197 = vmatpush2.bf16.msra.mxu0 0
    %3198 = vmatprep.subr.bf16.mxu0 0
    %3199 = vmatpush2.bf16.msra.mxu0 0
    %3200 = vmatprep.mubr.bf16.mxu0 0
    %3201 = vmatmul.mubr.bf16.gmra.mxu0 %v3166
    %v3202 = vpop.f32.mrf.mxu0
    %v3203 = vadd.f32 %v3138, %v3202
    %v3204 = vpop.f32.mrf.mxu0
    %v3205 = vpop.f32.mrf.mxu0
    %v3206 = vadd.f32 %v3138, %v3205
    %v3207 = vpop.f32.mrf.mxu0
    %3208 = vdwg.mxu0
    %v3209 = vadd.f32 %v3052, %v3203
    %v3210 = vadd.f32 %v3053, %v3206
    %v3211 = vsel %vm203, %v3209, 0.0
    %3212 = vadd.xlane.f32.xlu0 %v3211
    %v3213 = vpop.xlane.xlu0 %3212
    %v3214 = vsel %vm203, %v3210, 0.0
    %3215 = vadd.xlane.f32.xlu0 %v3214
    %v3216 = vpop.xlane.xlu0 %3215
    %v3217 = vmul.f32 %v3213, %v1589
    %v3218 = vmul.f32 %v3216, %v1589
    %v3219 = vsub.f32 %v3209, %v3217
    %v3220 = vsub.f32 %v3210, %v3218
    %v3221 = vmul.f32 %v3219, %v3219
    %v3222 = vmul.f32 %v3220, %v3220
    %v3223 = vsel %vm203, %v3221, 0.0
    %3224 = vadd.xlane.f32.xlu0 %v3223
    %v3225 = vpop.xlane.xlu0 %3224
    %v3226 = vsel %vm203, %v3222, 0.0
    %3227 = vadd.xlane.f32.xlu0 %v3226
    %v3228 = vpop.xlane.xlu0 %3227
    %v3229 = vmul.f32 %v3225, %v1589
    %v3230 = vmul.f32 %v3228, %v1589
    %v3231 = vadd.f32 %v3229, 1e-05
    %v3232 = vadd.f32 %v3230, 1e-05
    %v3233 = vrsqrt.pop %v3231
    %v3234 = vrsqrt.pop %v3232
    %v3235 = vmul.f32 %v3219, %v3233
    %v3236 = vmul.f32 %v3220, %v3234
    %v3237 = vlaneseq
    %v3238 = vshrl.u32 %v3237, 7
    %v3239 = vsub.s32 2, %v3238
    %v3240 = vrot.slane %v170, %v3239
    %v3241 = vmul.f32 %v3235, %v3240
    %v3242 = vmul.f32 %v3236, %v3240
    %v3243 = vlaneseq
    %v3244 = vshrl.u32 %v3243, 7
    %v3245 = vsub.s32 2, %v3244
    %v3246 = vrot.slane %v171, %v3245
    %v3247 = vadd.f32 %v3241, %v3246
    %v3248 = vadd.f32 %v3242, %v3246
    %3249 = vst.msk [vmem:[#allocation19] sm:$0xff] %vm203, %v3247
    %3250 = vst.msk [vmem:[#allocation19 + $0x8] sm:$0xff] %vm203, %v3248
    // Predicated region
    $region94: #{tpu_custom_call.1} parent=1 // pred_check
      _
    $region95: #{tpu_custom_call.1} parent=1 // pred_check_branch
      %3252 = sbr.rel (0) target = $region97
    $region96: #{tpu_custom_call.1} parent=1 // pred_region
      %s3254 = ssub.s32 256, 256
      %3255 = vsyncadd [#allocation7], %s3254
      %s3256 = sshll.u32 [#allocation19], 4
      %s3257 = int_to_ptr.vmem [resolvable:$true] %s3256
      %3262 = dma.vmem_to_hbm [thread:$0]  %s3257, 256, %s16, [#allocation7], 128, 128, 8
    $region97: #{tpu_custom_call.1} parent=1 // pred_fallthru
      _
    // Predicated region
    $region98: #{tpu_custom_call.1} parent=1 // pred_check
      _
    $region99: #{tpu_custom_call.1} parent=1 // pred_check_branch
      %3264 = sbr.rel (0) target = $region101
    $region100: #{tpu_custom_call.1} parent=1 // pred_region
      %3265 = dma.done [#allocation7], 256
    $region101: #{tpu_custom_call.1} parent=1 // pred_fallthru
      _
    %3266 = vsyncpa [#allocation6], 1
    %3267 = vsyncpa [#allocation9], 1
    %3268 = vsyncpa [#allocation12], 1
    %3269 = vsyncpa [#allocation15], 1
    %3270 = vsyncpa [#allocation18], 1
    %3271 = vsyncpa [#allocation7], 1

</llo_original>
